<compile_context>
chip_gen: v5e
topology: v5e:2x2
jax: 0.10.0
libtpu: 0.0.40
codegen_flags: <defaults>
</compile_context>

<pallas_src>
import functools

import jax
import jax.numpy as jnp
from jax.experimental import pallas as pl
from jax.experimental.pallas import tpu as pltpu


def _round_up(n, m):
    return ((n + m - 1) // m) * m


def _mlp_kernel(x_ref, w1_ref, b1_ref, w2_ref, b2_ref, w3_ref, b3_ref, o_ref):
    # fc1 + ReLU (bf16 matmul, f32 accumulate / bias / ReLU)
    h1 = jnp.dot(x_ref[...], w1_ref[...], preferred_element_type=jnp.float32)
    h1 = jnp.maximum(h1 + b1_ref[...], 0.0).astype(jnp.bfloat16)
    # fc2 + ReLU
    h2 = jnp.dot(h1, w2_ref[...], preferred_element_type=jnp.float32)
    h2 = jnp.maximum(h2 + b2_ref[...], 0.0).astype(jnp.bfloat16)
    # fc3 (no activation); lane-dense padded output columns
    out = jnp.dot(h2, w3_ref[...], preferred_element_type=jnp.float32) + b3_ref[...]
    o_ref[...] = out.astype(o_ref.dtype)


@functools.partial(jax.jit, static_argnames=())
def textual_mlp_forward(x, w1, b1, w2, b2, w3, b3):
    """Fused 3-layer MLP forward pass (x @ W1 + b1 -> ReLU -> ... -> logits).

    x:  [B, 768] float32
    w1: [768, 1024], w2: [1024, 512], w3: [512, C]   (stored as [in, out])
    Returns [B, C] float32.
    """
    B, D_in = x.shape
    H1 = w1.shape[1]
    H2 = w2.shape[1]
    C = w3.shape[1]

    # --- batch tiling: TB rows per grid step, batch padded to a TB multiple ---
    TB = min(512, _round_up(max(B, 1), 8))
    B_pad = _round_up(B, TB)
    grid = (B_pad // TB,)

    # --- lane-dense output: pad final layer columns to a multiple of 128 ---
    C_pad = _round_up(C, 128)

    # --- wrapper-side casts / padding (bf16 stream, f32 accumulate) ---
    x_p = jnp.zeros((B_pad, D_in), jnp.bfloat16).at[:B].set(x.astype(jnp.bfloat16))
    w1_b = w1.astype(jnp.bfloat16)
    w2_b = w2.astype(jnp.bfloat16)
    w3_b = jnp.zeros((H2, C_pad), jnp.bfloat16).at[:, :C].set(w3.astype(jnp.bfloat16))

    # biases kept f32 (added post f32-accumulation), shaped (1, N) for lane layout.
    b1_2d = b1.reshape(1, H1).astype(jnp.float32)
    b2_2d = b2.reshape(1, H2).astype(jnp.float32)
    b3_2d = jnp.zeros((1, C_pad), jnp.float32).at[0, :C].set(b3.astype(jnp.float32))

    # --- specs: x/out tiled over batch, weights/biases resident across steps ---
    in_specs = [
        pl.BlockSpec((TB, D_in), lambda i: (i, 0)),
        pl.BlockSpec((D_in, H1), lambda i: (0, 0)),
        pl.BlockSpec((1, H1), lambda i: (0, 0)),
        pl.BlockSpec((H1, H2), lambda i: (0, 0)),
        pl.BlockSpec((1, H2), lambda i: (0, 0)),
        pl.BlockSpec((H2, C_pad), lambda i: (0, 0)),
        pl.BlockSpec((1, C_pad), lambda i: (0, 0)),
    ]
    out_specs = pl.BlockSpec((TB, C_pad), lambda i: (i, 0))

    flops = 2 * B_pad * (D_in * H1 + H1 * H2 + H2 * C_pad)
    bytes_accessed = (
        x_p.size * 2                      # bf16 activations in
        + (w1_b.size + w2_b.size + w3_b.size) * 2   # bf16 weights
        + (b1_2d.size + b2_2d.size + b3_2d.size) * 4  # f32 biases
        + B_pad * C_pad * 4               # f32 output
    )

    out_padded = pl.pallas_call(
        _mlp_kernel,
        out_shape=jax.ShapeDtypeStruct((B_pad, C_pad), jnp.float32),
        grid=grid,
        in_specs=in_specs,
        out_specs=out_specs,
        compiler_params=pltpu.CompilerParams(
            dimension_semantics=("parallel",),
            vmem_limit_bytes=32 << 20,
        ),
        cost_estimate=pl.CostEstimate(
            flops=flops, bytes_accessed=bytes_accessed, transcendentals=0
        ),
    )(x_p, w1_b, b1_2d, w2_b, b2_2d, w3_b, b3_2d)

    return out_padded[:B, :C]


def init_params(key, cls_num=8, dtype=jnp.float32):
    """Deterministic synthetic parameter init matching nn.Linear shapes."""
    k1, k2, k3, k4, k5, k6 = jax.random.split(key, 6)
    # stored as [in, out] (transpose of torch's [out, in]); same math.
    w1 = jax.random.normal(k1, (768, 1024), dtype) * 0.02
    b1 = jax.random.normal(k2, (1024,), dtype) * 0.02
    w2 = jax.random.normal(k3, (1024, 512), dtype) * 0.02
    b2 = jax.random.normal(k4, (512,), dtype) * 0.02
    w3 = jax.random.normal(k5, (512, cls_num), dtype) * 0.02
    b3 = jax.random.normal(k6, (cls_num,), dtype) * 0.02
    return w1, b1, w2, b2, w3, b3


def _reference(x, w1, b1, w2, b2, w3, b3):
    h = jnp.maximum(x @ w1 + b1, 0.0)
    h = jnp.maximum(h @ w2 + b2, 0.0)
    return h @ w3 + b3


if __name__ == "__main__":
    key = jax.random.PRNGKey(0)
    k_x, k_x2, k_p = jax.random.split(key, 3)

    cls_num = 8
    w1, b1, w2, b2, w3, b3 = init_params(k_p, cls_num=cls_num)

    # small batch (module's typical usage) -- exercises batch padding to 8 rows
    B = 2
    x = jax.random.normal(k_x, (B, 768), jnp.float32)
    out = textual_mlp_forward(x, w1, b1, w2, b2, w3, b3)
    out = jax.block_until_ready(out)
    ref = _reference(x, w1, b1, w2, b2, w3, b3)
    assert out.shape == (B, cls_num)
    # bf16 weight/activation stream with f32 accumulation -> loosened tolerance
    assert jnp.allclose(out, ref, atol=3e-2, rtol=3e-2), float(
        jnp.max(jnp.abs(out - ref))
    )

    # slightly larger batch -- exercises the tiled / padded-batch path
    B2 = 100
    x2 = jax.random.normal(k_x2, (B2, 768), jnp.float32)
    out2 = jax.block_until_ready(textual_mlp_forward(x2, w1, b1, w2, b2, w3, b3))
    ref2 = _reference(x2, w1, b1, w2, b2, w3, b3)
    assert out2.shape == (B2, cls_num)
    assert jnp.allclose(out2, ref2, atol=3e-2, rtol=3e-2), float(
        jnp.max(jnp.abs(out2 - ref2))
    )

    print("KERNEL_OK")
</pallas_src>

<mosaic_0001>
module attributes {stable_mosaic.version = 11 : i64} {
  func.func @_mlp_kernel(%arg0: i32, %arg1: memref<8x768xbf16, #tpu.memory_space<vmem>>, %arg2: memref<768x1024xbf16, #tpu.memory_space<vmem>>, %arg3: memref<1x1024xf32, #tpu.memory_space<vmem>>, %arg4: memref<1024x512xbf16, #tpu.memory_space<vmem>>, %arg5: memref<1x512xf32, #tpu.memory_space<vmem>>, %arg6: memref<512x128xbf16, #tpu.memory_space<vmem>>, %arg7: memref<1x128xf32, #tpu.memory_space<vmem>>, %arg8: memref<8x128xf32, #tpu.memory_space<vmem>>) attributes {dimension_semantics = [#tpu.dimension_semantics<parallel>], iteration_bounds = array<i64: 1>, scalar_prefetch = 0 : i64, scratch_operands = 0 : i64, tpu.core_type = #tpu.core_type<tc>, window_params = [{transform_indices = @transform_0, window_bounds = array<i64: 8, 768>}, {pipeline_mode = #tpu.pipeline_mode<synchronous>, transform_indices = @transform_1, window_bounds = array<i64: 768, 1024>}, {pipeline_mode = #tpu.pipeline_mode<synchronous>, transform_indices = @transform_2, window_bounds = array<i64: 1, 1024>}, {pipeline_mode = #tpu.pipeline_mode<synchronous>, transform_indices = @transform_3, window_bounds = array<i64: 1024, 512>}, {pipeline_mode = #tpu.pipeline_mode<synchronous>, transform_indices = @transform_4, window_bounds = array<i64: 1, 512>}, {pipeline_mode = #tpu.pipeline_mode<synchronous>, transform_indices = @transform_5, window_bounds = array<i64: 512, 128>}, {pipeline_mode = #tpu.pipeline_mode<synchronous>, transform_indices = @transform_6, window_bounds = array<i64: 1, 128>}, {transform_indices = @transform_7, window_bounds = array<i64: 8, 128>}]} {
    %c0 = arith.constant 0 : index
    %c0_0 = arith.constant 0 : index
    %0 = vector.load %arg1[%c0, %c0_0] : memref<8x768xbf16, #tpu.memory_space<vmem>>, vector<8x768xbf16>
    %c0_1 = arith.constant 0 : index
    %c0_2 = arith.constant 0 : index
    %1 = vector.load %arg2[%c0_1, %c0_2] : memref<768x1024xbf16, #tpu.memory_space<vmem>>, vector<768x1024xbf16>
    %cst = arith.constant dense<0.000000e+00> : vector<8x1024xf32>
    %2 = tpu.matmul %0, %1, %cst {dimension_numbers = #tpu.dot_dimension_numbers<[1], [0], [0], [1], [0, 0, 1, 1], [], []>} : vector<8x768xbf16>, vector<768x1024xbf16>, vector<8x1024xf32> -> vector<8x1024xf32>
    %c0_3 = arith.constant 0 : index
    %c0_4 = arith.constant 0 : index
    %3 = vector.load %arg3[%c0_3, %c0_4] : memref<1x1024xf32, #tpu.memory_space<vmem>>, vector<1x1024xf32>
    %4 = vector.broadcast %3 : vector<1x1024xf32> to vector<8x1024xf32>
    %5 = arith.addf %2, %4 : vector<8x1024xf32>
    %cst_5 = arith.constant 0.000000e+00 : f32
    %6 = vector.broadcast %cst_5 : f32 to vector<8x1024xf32>
    %7 = arith.maximumf %5, %6 : vector<8x1024xf32>
    %8 = arith.truncf %7 : vector<8x1024xf32> to vector<8x1024xbf16>
    %c0_6 = arith.constant 0 : index
    %c0_7 = arith.constant 0 : index
    %9 = vector.load %arg4[%c0_6, %c0_7] : memref<1024x512xbf16, #tpu.memory_space<vmem>>, vector<1024x512xbf16>
    %cst_8 = arith.constant dense<0.000000e+00> : vector<8x512xf32>
    %10 = tpu.matmul %8, %9, %cst_8 {dimension_numbers = #tpu.dot_dimension_numbers<[1], [0], [0], [1], [0, 0, 1, 1], [], []>} : vector<8x1024xbf16>, vector<1024x512xbf16>, vector<8x512xf32> -> vector<8x512xf32>
    %c0_9 = arith.constant 0 : index
    %c0_10 = arith.constant 0 : index
    %11 = vector.load %arg5[%c0_9, %c0_10] : memref<1x512xf32, #tpu.memory_space<vmem>>, vector<1x512xf32>
    %12 = vector.broadcast %11 : vector<1x512xf32> to vector<8x512xf32>
    %13 = arith.addf %10, %12 : vector<8x512xf32>
    %cst_11 = arith.constant 0.000000e+00 : f32
    %14 = vector.broadcast %cst_11 : f32 to vector<8x512xf32>
    %15 = arith.maximumf %13, %14 : vector<8x512xf32>
    %16 = arith.truncf %15 : vector<8x512xf32> to vector<8x512xbf16>
    %c0_12 = arith.constant 0 : index
    %c0_13 = arith.constant 0 : index
    %17 = vector.load %arg6[%c0_12, %c0_13] : memref<512x128xbf16, #tpu.memory_space<vmem>>, vector<512x128xbf16>
    %cst_14 = arith.constant dense<0.000000e+00> : vector<8x128xf32>
    %18 = tpu.matmul %16, %17, %cst_14 {dimension_numbers = #tpu.dot_dimension_numbers<[1], [0], [0], [1], [0, 0, 1, 1], [], []>} : vector<8x512xbf16>, vector<512x128xbf16>, vector<8x128xf32> -> vector<8x128xf32>
    %c0_15 = arith.constant 0 : index
    %c0_16 = arith.constant 0 : index
    %19 = vector.load %arg7[%c0_15, %c0_16] : memref<1x128xf32, #tpu.memory_space<vmem>>, vector<1x128xf32>
    %20 = vector.broadcast %19 : vector<1x128xf32> to vector<8x128xf32>
    %21 = arith.addf %18, %20 : vector<8x128xf32>
    %c0_17 = arith.constant 0 : index
    %c0_18 = arith.constant 0 : index
    %22 = vector.load %arg8[%c0_17, %c0_18] : memref<8x128xf32, #tpu.memory_space<vmem>>, vector<8x128xf32>
    tpu.vector_store %arg8[%c0_17, %c0_18], %21 {strides = array<i32>} : memref<8x128xf32, #tpu.memory_space<vmem>>, vector<8x128xf32>,
    return
  }
  func.func @transform_0(%arg0: i32) -> (i32, i32) {
    %c0_i32 = arith.constant 0 : i32
    %c0_i32_0 = arith.constant 0 : i32
    return %arg0, %c0_i32 : i32, i32
  }
  func.func @transform_1(%arg0: i32) -> (i32, i32) {
    %c0_i32 = arith.constant 0 : i32
    %c0_i32_0 = arith.constant 0 : i32
    %c0_i32_1 = arith.constant 0 : i32
    return %c0_i32, %c0_i32_0 : i32, i32
  }
  func.func @transform_2(%arg0: i32) -> (i32, i32) {
    %c0_i32 = arith.constant 0 : i32
    %c0_i32_0 = arith.constant 0 : i32
    %c0_i32_1 = arith.constant 0 : i32
    return %c0_i32, %c0_i32_0 : i32, i32
  }
  func.func @transform_3(%arg0: i32) -> (i32, i32) {
    %c0_i32 = arith.constant 0 : i32
    %c0_i32_0 = arith.constant 0 : i32
    %c0_i32_1 = arith.constant 0 : i32
    return %c0_i32, %c0_i32_0 : i32, i32
  }
  func.func @transform_4(%arg0: i32) -> (i32, i32) {
    %c0_i32 = arith.constant 0 : i32
    %c0_i32_0 = arith.constant 0 : i32
    %c0_i32_1 = arith.constant 0 : i32
    return %c0_i32, %c0_i32_0 : i32, i32
  }
  func.func @transform_5(%arg0: i32) -> (i32, i32) {
    %c0_i32 = arith.constant 0 : i32
    %c0_i32_0 = arith.constant 0 : i32
    %c0_i32_1 = arith.constant 0 : i32
    return %c0_i32, %c0_i32_0 : i32, i32
  }
  func.func @transform_6(%arg0: i32) -> (i32, i32) {
    %c0_i32 = arith.constant 0 : i32
    %c0_i32_0 = arith.constant 0 : i32
    %c0_i32_1 = arith.constant 0 : i32
    return %c0_i32, %c0_i32_0 : i32, i32
  }
  func.func @transform_7(%arg0: i32) -> (i32, i32) {
    %c0_i32 = arith.constant 0 : i32
    %c0_i32_0 = arith.constant 0 : i32
    return %arg0, %c0_i32 : i32, i32
  }
}

</mosaic_0001>

<llo_original>
// kernel: textual_mlp_forward.1
$region0: #{textual_mlp_forward.1}
  #allocation0 [shape = 'u32[]', space=smem, size = 0x4, offset = 0x4, fixed_abs, tag = 'smem constant byte address 0x4 - core index']
  #allocation1 [shape = 'u32[72,128]{1,0:T(1,128)}', space=vmem, size = 0x9000, scoped, tag = 'internal scratch']
  %s0 = inlined_call_operand.vmem [shape: bf16[8,768], index: 0, kind: input, shape index: {}]
  %s1 = inlined_call_operand.vmem [shape: bf16[768,1024], index: 1, kind: input, shape index: {}]
  %s2 = inlined_call_operand.vmem [shape: f32[1,1024], index: 2, kind: input, shape index: {}]
  %s3 = inlined_call_operand.vmem [shape: bf16[1024,512], index: 3, kind: input, shape index: {}]
  %s4 = inlined_call_operand.vmem [shape: f32[1,512], index: 4, kind: input, shape index: {}]
  %s5 = inlined_call_operand.vmem [shape: bf16[512,128], index: 5, kind: input, shape index: {}]
  %s6 = inlined_call_operand.vmem [shape: f32[1,128], index: 6, kind: input, shape index: {}]
  %s7 = inlined_call_operand.vmem [shape: f32[8,128], index: 7, kind: output, shape index: {}]
  %s8 = sld [smem:[#allocation0]]
  $region38: #{textual_mlp_forward.1} parent=0
    _
  %s10 = ssub.s32 1, %s8
  %s11 = scalar_select 0, %s10, %s8
  // Predicated region
  $region2: #{textual_mlp_forward.1} parent=0 // pred_check
    _
  $region3: #{textual_mlp_forward.1} parent=0 // pred_check_branch
    %13 = sbr.rel (0) target = $region5
  $region4: #{textual_mlp_forward.1} parent=0 // pred_region
    _
  $region5: #{textual_mlp_forward.1} parent=0 // pred_fallthru
    _
  // Predicated region
  $region6: #{textual_mlp_forward.1} parent=0 // pred_check
    _
  $region7: #{textual_mlp_forward.1} parent=0 // pred_check_branch
    %15 = sbr.rel (0) target = $region9
  $region8: #{textual_mlp_forward.1} parent=0 // pred_region
    _
  $region9: #{textual_mlp_forward.1} parent=0 // pred_fallthru
    _
  // Predicated region
  $region10: #{textual_mlp_forward.1} parent=0 // pred_check
    _
  $region11: #{textual_mlp_forward.1} parent=0 // pred_check_branch
    %17 = sbr.rel (0) target = $region13
  $region12: #{textual_mlp_forward.1} parent=0 // pred_region
    _
  $region13: #{textual_mlp_forward.1} parent=0 // pred_fallthru
    _
  // Predicated region
  $region14: #{textual_mlp_forward.1} parent=0 // pred_check
    _
  $region15: #{textual_mlp_forward.1} parent=0 // pred_check_branch
    %19 = sbr.rel (0) target = $region17
  $region16: #{textual_mlp_forward.1} parent=0 // pred_region
    _
  $region17: #{textual_mlp_forward.1} parent=0 // pred_fallthru
    _
  // Predicated region
  $region18: #{textual_mlp_forward.1} parent=0 // pred_check
    _
  $region19: #{textual_mlp_forward.1} parent=0 // pred_check_branch
    %21 = sbr.rel (0) target = $region21
  $region20: #{textual_mlp_forward.1} parent=0 // pred_region
    _
  $region21: #{textual_mlp_forward.1} parent=0 // pred_fallthru
    _
  // Predicated region
  $region22: #{textual_mlp_forward.1} parent=0 // pred_check
    _
  $region23: #{textual_mlp_forward.1} parent=0 // pred_check_branch
    %23 = sbr.rel (0) target = $region25
  $region24: #{textual_mlp_forward.1} parent=0 // pred_region
    _
  $region25: #{textual_mlp_forward.1} parent=0 // pred_fallthru
    _
  // Predicated region
  $region26: #{textual_mlp_forward.1} parent=0 // pred_check
    _
  $region27: #{textual_mlp_forward.1} parent=0 // pred_check_branch
    %25 = sbr.rel (0) target = $region29
  $region28: #{textual_mlp_forward.1} parent=0 // pred_region
    _
  $region29: #{textual_mlp_forward.1} parent=0 // pred_fallthru
    _
  %v26 = vld [vmem:[%s0] sm:$0xff]
  %v27 = vld [vmem:[%s0 + $0x8] sm:$0xff]
  %v28 = vld [vmem:[%s0 + $0x10] sm:$0xff]
  %v29 = vld [vmem:[%s1] sm:$0xff]
  %v30 = vld [vmem:[%s1 + $0x8] sm:$0xff]
  %v31 = vld [vmem:[%s1 + $0x10] sm:$0xff]
  %v32 = vld [vmem:[%s1 + $0x18] sm:$0xff]
  %v33 = vld [vmem:[%s1 + $0x20] sm:$0xff]
  %v34 = vld [vmem:[%s1 + $0x28] sm:$0xff]
  %v35 = vld [vmem:[%s1 + $0x30] sm:$0xff]
  %v36 = vld [vmem:[%s1 + $0x38] sm:$0xff]
  %v37 = vld [vmem:[%s1 + $0x40] sm:$0xff]
  %v38 = vld [vmem:[%s1 + $0x48] sm:$0xff]
  %v39 = vld [vmem:[%s1 + $0x50] sm:$0xff]
  %v40 = vld [vmem:[%s1 + $0x58] sm:$0xff]
  %v41 = vld [vmem:[%s1 + $0x60] sm:$0xff]
  %v42 = vld [vmem:[%s1 + $0x68] sm:$0xff]
  %v43 = vld [vmem:[%s1 + $0x70] sm:$0xff]
  %v44 = vld [vmem:[%s1 + $0x78] sm:$0xff]
  %v45 = vld [vmem:[%s1 + $0x80] sm:$0xff]
  %v46 = vld [vmem:[%s1 + $0x88] sm:$0xff]
  %v47 = vld [vmem:[%s1 + $0x90] sm:$0xff]
  %v48 = vld [vmem:[%s1 + $0x98] sm:$0xff]
  %v49 = vld [vmem:[%s1 + $0xa0] sm:$0xff]
  %v50 = vld [vmem:[%s1 + $0xa8] sm:$0xff]
  %v51 = vld [vmem:[%s1 + $0xb0] sm:$0xff]
  %v52 = vld [vmem:[%s1 + $0xb8] sm:$0xff]
  %v53 = vld [vmem:[%s1 + $0xc0] sm:$0xff]
  %v54 = vld [vmem:[%s1 + $0xc8] sm:$0xff]
  %v55 = vld [vmem:[%s1 + $0xd0] sm:$0xff]
  %v56 = vld [vmem:[%s1 + $0xd8] sm:$0xff]
  %v57 = vld [vmem:[%s1 + $0xe0] sm:$0xff]
  %v58 = vld [vmem:[%s1 + $0xe8] sm:$0xff]
  %v59 = vld [vmem:[%s1 + $0xf0] sm:$0xff]
  %v60 = vld [vmem:[%s1 + $0xf8] sm:$0xff]
  %v61 = vld [vmem:[%s1 + $0x100] sm:$0xff]
  %v62 = vld [vmem:[%s1 + $0x108] sm:$0xff]
  %v63 = vld [vmem:[%s1 + $0x110] sm:$0xff]
  %v64 = vld [vmem:[%s1 + $0x118] sm:$0xff]
  %v65 = vld [vmem:[%s1 + $0x120] sm:$0xff]
  %v66 = vld [vmem:[%s1 + $0x128] sm:$0xff]
  %v67 = vld [vmem:[%s1 + $0x130] sm:$0xff]
  %v68 = vld [vmem:[%s1 + $0x138] sm:$0xff]
  %v69 = vld [vmem:[%s1 + $0x140] sm:$0xff]
  %v70 = vld [vmem:[%s1 + $0x148] sm:$0xff]
  %v71 = vld [vmem:[%s1 + $0x150] sm:$0xff]
  %v72 = vld [vmem:[%s1 + $0x158] sm:$0xff]
  %v73 = vld [vmem:[%s1 + $0x160] sm:$0xff]
  %v74 = vld [vmem:[%s1 + $0x168] sm:$0xff]
  %v75 = vld [vmem:[%s1 + $0x170] sm:$0xff]
  %v76 = vld [vmem:[%s1 + $0x178] sm:$0xff]
  %v77 = vld [vmem:[%s1 + $0x180] sm:$0xff]
  %v78 = vld [vmem:[%s1 + $0x188] sm:$0xff]
  %v79 = vld [vmem:[%s1 + $0x190] sm:$0xff]
  %v80 = vld [vmem:[%s1 + $0x198] sm:$0xff]
  %v81 = vld [vmem:[%s1 + $0x1a0] sm:$0xff]
  %v82 = vld [vmem:[%s1 + $0x1a8] sm:$0xff]
  %v83 = vld [vmem:[%s1 + $0x1b0] sm:$0xff]
  %v84 = vld [vmem:[%s1 + $0x1b8] sm:$0xff]
  %v85 = vld [vmem:[%s1 + $0x1c0] sm:$0xff]
  %v86 = vld [vmem:[%s1 + $0x1c8] sm:$0xff]
  %v87 = vld [vmem:[%s1 + $0x1d0] sm:$0xff]
  %v88 = vld [vmem:[%s1 + $0x1d8] sm:$0xff]
  %v89 = vld [vmem:[%s1 + $0x1e0] sm:$0xff]
  %v90 = vld [vmem:[%s1 + $0x1e8] sm:$0xff]
  %v91 = vld [vmem:[%s1 + $0x1f0] sm:$0xff]
  %v92 = vld [vmem:[%s1 + $0x1f8] sm:$0xff]
  %v93 = vld [vmem:[%s1 + $0x200] sm:$0xff]
  %v94 = vld [vmem:[%s1 + $0x208] sm:$0xff]
  %v95 = vld [vmem:[%s1 + $0x210] sm:$0xff]
  %v96 = vld [vmem:[%s1 + $0x218] sm:$0xff]
  %v97 = vld [vmem:[%s1 + $0x220] sm:$0xff]
  %v98 = vld [vmem:[%s1 + $0x228] sm:$0xff]
  %v99 = vld [vmem:[%s1 + $0x230] sm:$0xff]
  %v100 = vld [vmem:[%s1 + $0x238] sm:$0xff]
  %v101 = vld [vmem:[%s1 + $0x240] sm:$0xff]
  %v102 = vld [vmem:[%s1 + $0x248] sm:$0xff]
  %v103 = vld [vmem:[%s1 + $0x250] sm:$0xff]
  %v104 = vld [vmem:[%s1 + $0x258] sm:$0xff]
  %v105 = vld [vmem:[%s1 + $0x260] sm:$0xff]
  %v106 = vld [vmem:[%s1 + $0x268] sm:$0xff]
  %v107 = vld [vmem:[%s1 + $0x270] sm:$0xff]
  %v108 = vld [vmem:[%s1 + $0x278] sm:$0xff]
  %v109 = vld [vmem:[%s1 + $0x280] sm:$0xff]
  %v110 = vld [vmem:[%s1 + $0x288] sm:$0xff]
  %v111 = vld [vmem:[%s1 + $0x290] sm:$0xff]
  %v112 = vld [vmem:[%s1 + $0x298] sm:$0xff]
  %v113 = vld [vmem:[%s1 + $0x2a0] sm:$0xff]
  %v114 = vld [vmem:[%s1 + $0x2a8] sm:$0xff]
  %v115 = vld [vmem:[%s1 + $0x2b0] sm:$0xff]
  %v116 = vld [vmem:[%s1 + $0x2b8] sm:$0xff]
  %v117 = vld [vmem:[%s1 + $0x2c0] sm:$0xff]
  %v118 = vld [vmem:[%s1 + $0x2c8] sm:$0xff]
  %v119 = vld [vmem:[%s1 + $0x2d0] sm:$0xff]
  %v120 = vld [vmem:[%s1 + $0x2d8] sm:$0xff]
  %v121 = vld [vmem:[%s1 + $0x2e0] sm:$0xff]
  %v122 = vld [vmem:[%s1 + $0x2e8] sm:$0xff]
  %v123 = vld [vmem:[%s1 + $0x2f0] sm:$0xff]
  %v124 = vld [vmem:[%s1 + $0x2f8] sm:$0xff]
  %v125 = vld [vmem:[%s1 + $0x300] sm:$0xff]
  %v126 = vld [vmem:[%s1 + $0x308] sm:$0xff]
  %v127 = vld [vmem:[%s1 + $0x310] sm:$0xff]
  %v128 = vld [vmem:[%s1 + $0x318] sm:$0xff]
  %v129 = vld [vmem:[%s1 + $0x320] sm:$0xff]
  %v130 = vld [vmem:[%s1 + $0x328] sm:$0xff]
  %v131 = vld [vmem:[%s1 + $0x330] sm:$0xff]
  %v132 = vld [vmem:[%s1 + $0x338] sm:$0xff]
  %v133 = vld [vmem:[%s1 + $0x340] sm:$0xff]
  %v134 = vld [vmem:[%s1 + $0x348] sm:$0xff]
  %v135 = vld [vmem:[%s1 + $0x350] sm:$0xff]
  %v136 = vld [vmem:[%s1 + $0x358] sm:$0xff]
  %v137 = vld [vmem:[%s1 + $0x360] sm:$0xff]
  %v138 = vld [vmem:[%s1 + $0x368] sm:$0xff]
  %v139 = vld [vmem:[%s1 + $0x370] sm:$0xff]
  %v140 = vld [vmem:[%s1 + $0x378] sm:$0xff]
  %v141 = vld [vmem:[%s1 + $0x380] sm:$0xff]
  %v142 = vld [vmem:[%s1 + $0x388] sm:$0xff]
  %v143 = vld [vmem:[%s1 + $0x390] sm:$0xff]
  %v144 = vld [vmem:[%s1 + $0x398] sm:$0xff]
  %v145 = vld [vmem:[%s1 + $0x3a0] sm:$0xff]
  %v146 = vld [vmem:[%s1 + $0x3a8] sm:$0xff]
  %v147 = vld [vmem:[%s1 + $0x3b0] sm:$0xff]
  %v148 = vld [vmem:[%s1 + $0x3b8] sm:$0xff]
  %v149 = vld [vmem:[%s1 + $0x3c0] sm:$0xff]
  %v150 = vld [vmem:[%s1 + $0x3c8] sm:$0xff]
  %v151 = vld [vmem:[%s1 + $0x3d0] sm:$0xff]
  %v152 = vld [vmem:[%s1 + $0x3d8] sm:$0xff]
  %v153 = vld [vmem:[%s1 + $0x3e0] sm:$0xff]
  %v154 = vld [vmem:[%s1 + $0x3e8] sm:$0xff]
  %v155 = vld [vmem:[%s1 + $0x3f0] sm:$0xff]
  %v156 = vld [vmem:[%s1 + $0x3f8] sm:$0xff]
  %v157 = vld [vmem:[%s1 + $0x400] sm:$0xff]
  %v158 = vld [vmem:[%s1 + $0x408] sm:$0xff]
  %v159 = vld [vmem:[%s1 + $0x410] sm:$0xff]
  %v160 = vld [vmem:[%s1 + $0x418] sm:$0xff]
  %v161 = vld [vmem:[%s1 + $0x420] sm:$0xff]
  %v162 = vld [vmem:[%s1 + $0x428] sm:$0xff]
  %v163 = vld [vmem:[%s1 + $0x430] sm:$0xff]
  %v164 = vld [vmem:[%s1 + $0x438] sm:$0xff]
  %v165 = vld [vmem:[%s1 + $0x440] sm:$0xff]
  %v166 = vld [vmem:[%s1 + $0x448] sm:$0xff]
  %v167 = vld [vmem:[%s1 + $0x450] sm:$0xff]
  %v168 = vld [vmem:[%s1 + $0x458] sm:$0xff]
  %v169 = vld [vmem:[%s1 + $0x460] sm:$0xff]
  %v170 = vld [vmem:[%s1 + $0x468] sm:$0xff]
  %v171 = vld [vmem:[%s1 + $0x470] sm:$0xff]
  %v172 = vld [vmem:[%s1 + $0x478] sm:$0xff]
  %v173 = vld [vmem:[%s1 + $0x480] sm:$0xff]
  %v174 = vld [vmem:[%s1 + $0x488] sm:$0xff]
  %v175 = vld [vmem:[%s1 + $0x490] sm:$0xff]
  %v176 = vld [vmem:[%s1 + $0x498] sm:$0xff]
  %v177 = vld [vmem:[%s1 + $0x4a0] sm:$0xff]
  %v178 = vld [vmem:[%s1 + $0x4a8] sm:$0xff]
  %v179 = vld [vmem:[%s1 + $0x4b0] sm:$0xff]
  %v180 = vld [vmem:[%s1 + $0x4b8] sm:$0xff]
  %v181 = vld [vmem:[%s1 + $0x4c0] sm:$0xff]
  %v182 = vld [vmem:[%s1 + $0x4c8] sm:$0xff]
  %v183 = vld [vmem:[%s1 + $0x4d0] sm:$0xff]
  %v184 = vld [vmem:[%s1 + $0x4d8] sm:$0xff]
  %v185 = vld [vmem:[%s1 + $0x4e0] sm:$0xff]
  %v186 = vld [vmem:[%s1 + $0x4e8] sm:$0xff]
  %v187 = vld [vmem:[%s1 + $0x4f0] sm:$0xff]
  %v188 = vld [vmem:[%s1 + $0x4f8] sm:$0xff]
  %v189 = vld [vmem:[%s1 + $0x500] sm:$0xff]
  %v190 = vld [vmem:[%s1 + $0x508] sm:$0xff]
  %v191 = vld [vmem:[%s1 + $0x510] sm:$0xff]
  %v192 = vld [vmem:[%s1 + $0x518] sm:$0xff]
  %v193 = vld [vmem:[%s1 + $0x520] sm:$0xff]
  %v194 = vld [vmem:[%s1 + $0x528] sm:$0xff]
  %v195 = vld [vmem:[%s1 + $0x530] sm:$0xff]
  %v196 = vld [vmem:[%s1 + $0x538] sm:$0xff]
  %v197 = vld [vmem:[%s1 + $0x540] sm:$0xff]
  %v198 = vld [vmem:[%s1 + $0x548] sm:$0xff]
  %v199 = vld [vmem:[%s1 + $0x550] sm:$0xff]
  %v200 = vld [vmem:[%s1 + $0x558] sm:$0xff]
  %v201 = vld [vmem:[%s1 + $0x560] sm:$0xff]
  %v202 = vld [vmem:[%s1 + $0x568] sm:$0xff]
  %v203 = vld [vmem:[%s1 + $0x570] sm:$0xff]
  %v204 = vld [vmem:[%s1 + $0x578] sm:$0xff]
  %v205 = vld [vmem:[%s1 + $0x580] sm:$0xff]
  %v206 = vld [vmem:[%s1 + $0x588] sm:$0xff]
  %v207 = vld [vmem:[%s1 + $0x590] sm:$0xff]
  %v208 = vld [vmem:[%s1 + $0x598] sm:$0xff]
  %v209 = vld [vmem:[%s1 + $0x5a0] sm:$0xff]
  %v210 = vld [vmem:[%s1 + $0x5a8] sm:$0xff]
  %v211 = vld [vmem:[%s1 + $0x5b0] sm:$0xff]
  %v212 = vld [vmem:[%s1 + $0x5b8] sm:$0xff]
  %v213 = vld [vmem:[%s1 + $0x5c0] sm:$0xff]
  %v214 = vld [vmem:[%s1 + $0x5c8] sm:$0xff]
  %v215 = vld [vmem:[%s1 + $0x5d0] sm:$0xff]
  %v216 = vld [vmem:[%s1 + $0x5d8] sm:$0xff]
  %v217 = vld [vmem:[%s1 + $0x5e0] sm:$0xff]
  %v218 = vld [vmem:[%s1 + $0x5e8] sm:$0xff]
  %v219 = vld [vmem:[%s1 + $0x5f0] sm:$0xff]
  %v220 = vld [vmem:[%s1 + $0x5f8] sm:$0xff]
  %v221 = vld [vmem:[%s1 + $0x600] sm:$0xff]
  %v222 = vld [vmem:[%s1 + $0x608] sm:$0xff]
  %v223 = vld [vmem:[%s1 + $0x610] sm:$0xff]
  %v224 = vld [vmem:[%s1 + $0x618] sm:$0xff]
  %v225 = vld [vmem:[%s1 + $0x620] sm:$0xff]
  %v226 = vld [vmem:[%s1 + $0x628] sm:$0xff]
  %v227 = vld [vmem:[%s1 + $0x630] sm:$0xff]
  %v228 = vld [vmem:[%s1 + $0x638] sm:$0xff]
  %v229 = vld [vmem:[%s1 + $0x640] sm:$0xff]
  %v230 = vld [vmem:[%s1 + $0x648] sm:$0xff]
  %v231 = vld [vmem:[%s1 + $0x650] sm:$0xff]
  %v232 = vld [vmem:[%s1 + $0x658] sm:$0xff]
  %v233 = vld [vmem:[%s1 + $0x660] sm:$0xff]
  %v234 = vld [vmem:[%s1 + $0x668] sm:$0xff]
  %v235 = vld [vmem:[%s1 + $0x670] sm:$0xff]
  %v236 = vld [vmem:[%s1 + $0x678] sm:$0xff]
  %v237 = vld [vmem:[%s1 + $0x680] sm:$0xff]
  %v238 = vld [vmem:[%s1 + $0x688] sm:$0xff]
  %v239 = vld [vmem:[%s1 + $0x690] sm:$0xff]
  %v240 = vld [vmem:[%s1 + $0x698] sm:$0xff]
  %v241 = vld [vmem:[%s1 + $0x6a0] sm:$0xff]
  %v242 = vld [vmem:[%s1 + $0x6a8] sm:$0xff]
  %v243 = vld [vmem:[%s1 + $0x6b0] sm:$0xff]
  %v244 = vld [vmem:[%s1 + $0x6b8] sm:$0xff]
  %v245 = vld [vmem:[%s1 + $0x6c0] sm:$0xff]
  %v246 = vld [vmem:[%s1 + $0x6c8] sm:$0xff]
  %v247 = vld [vmem:[%s1 + $0x6d0] sm:$0xff]
  %v248 = vld [vmem:[%s1 + $0x6d8] sm:$0xff]
  %v249 = vld [vmem:[%s1 + $0x6e0] sm:$0xff]
  %v250 = vld [vmem:[%s1 + $0x6e8] sm:$0xff]
  %v251 = vld [vmem:[%s1 + $0x6f0] sm:$0xff]
  %v252 = vld [vmem:[%s1 + $0x6f8] sm:$0xff]
  %v253 = vld [vmem:[%s1 + $0x700] sm:$0xff]
  %v254 = vld [vmem:[%s1 + $0x708] sm:$0xff]
  %v255 = vld [vmem:[%s1 + $0x710] sm:$0xff]
  %v256 = vld [vmem:[%s1 + $0x718] sm:$0xff]
  %v257 = vld [vmem:[%s1 + $0x720] sm:$0xff]
  %v258 = vld [vmem:[%s1 + $0x728] sm:$0xff]
  %v259 = vld [vmem:[%s1 + $0x730] sm:$0xff]
  %v260 = vld [vmem:[%s1 + $0x738] sm:$0xff]
  %v261 = vld [vmem:[%s1 + $0x740] sm:$0xff]
  %v262 = vld [vmem:[%s1 + $0x748] sm:$0xff]
  %v263 = vld [vmem:[%s1 + $0x750] sm:$0xff]
  %v264 = vld [vmem:[%s1 + $0x758] sm:$0xff]
  %v265 = vld [vmem:[%s1 + $0x760] sm:$0xff]
  %v266 = vld [vmem:[%s1 + $0x768] sm:$0xff]
  %v267 = vld [vmem:[%s1 + $0x770] sm:$0xff]
  %v268 = vld [vmem:[%s1 + $0x778] sm:$0xff]
  %v269 = vld [vmem:[%s1 + $0x780] sm:$0xff]
  %v270 = vld [vmem:[%s1 + $0x788] sm:$0xff]
  %v271 = vld [vmem:[%s1 + $0x790] sm:$0xff]
  %v272 = vld [vmem:[%s1 + $0x798] sm:$0xff]
  %v273 = vld [vmem:[%s1 + $0x7a0] sm:$0xff]
  %v274 = vld [vmem:[%s1 + $0x7a8] sm:$0xff]
  %v275 = vld [vmem:[%s1 + $0x7b0] sm:$0xff]
  %v276 = vld [vmem:[%s1 + $0x7b8] sm:$0xff]
  %v277 = vld [vmem:[%s1 + $0x7c0] sm:$0xff]
  %v278 = vld [vmem:[%s1 + $0x7c8] sm:$0xff]
  %v279 = vld [vmem:[%s1 + $0x7d0] sm:$0xff]
  %v280 = vld [vmem:[%s1 + $0x7d8] sm:$0xff]
  %v281 = vld [vmem:[%s1 + $0x7e0] sm:$0xff]
  %v282 = vld [vmem:[%s1 + $0x7e8] sm:$0xff]
  %v283 = vld [vmem:[%s1 + $0x7f0] sm:$0xff]
  %v284 = vld [vmem:[%s1 + $0x7f8] sm:$0xff]
  %v285 = vld [vmem:[%s1 + $0x800] sm:$0xff]
  %v286 = vld [vmem:[%s1 + $0x808] sm:$0xff]
  %v287 = vld [vmem:[%s1 + $0x810] sm:$0xff]
  %v288 = vld [vmem:[%s1 + $0x818] sm:$0xff]
  %v289 = vld [vmem:[%s1 + $0x820] sm:$0xff]
  %v290 = vld [vmem:[%s1 + $0x828] sm:$0xff]
  %v291 = vld [vmem:[%s1 + $0x830] sm:$0xff]
  %v292 = vld [vmem:[%s1 + $0x838] sm:$0xff]
  %v293 = vld [vmem:[%s1 + $0x840] sm:$0xff]
  %v294 = vld [vmem:[%s1 + $0x848] sm:$0xff]
  %v295 = vld [vmem:[%s1 + $0x850] sm:$0xff]
  %v296 = vld [vmem:[%s1 + $0x858] sm:$0xff]
  %v297 = vld [vmem:[%s1 + $0x860] sm:$0xff]
  %v298 = vld [vmem:[%s1 + $0x868] sm:$0xff]
  %v299 = vld [vmem:[%s1 + $0x870] sm:$0xff]
  %v300 = vld [vmem:[%s1 + $0x878] sm:$0xff]
  %v301 = vld [vmem:[%s1 + $0x880] sm:$0xff]
  %v302 = vld [vmem:[%s1 + $0x888] sm:$0xff]
  %v303 = vld [vmem:[%s1 + $0x890] sm:$0xff]
  %v304 = vld [vmem:[%s1 + $0x898] sm:$0xff]
  %v305 = vld [vmem:[%s1 + $0x8a0] sm:$0xff]
  %v306 = vld [vmem:[%s1 + $0x8a8] sm:$0xff]
  %v307 = vld [vmem:[%s1 + $0x8b0] sm:$0xff]
  %v308 = vld [vmem:[%s1 + $0x8b8] sm:$0xff]
  %v309 = vld [vmem:[%s1 + $0x8c0] sm:$0xff]
  %v310 = vld [vmem:[%s1 + $0x8c8] sm:$0xff]
  %v311 = vld [vmem:[%s1 + $0x8d0] sm:$0xff]
  %v312 = vld [vmem:[%s1 + $0x8d8] sm:$0xff]
  %v313 = vld [vmem:[%s1 + $0x8e0] sm:$0xff]
  %v314 = vld [vmem:[%s1 + $0x8e8] sm:$0xff]
  %v315 = vld [vmem:[%s1 + $0x8f0] sm:$0xff]
  %v316 = vld [vmem:[%s1 + $0x8f8] sm:$0xff]
  %v317 = vld [vmem:[%s1 + $0x900] sm:$0xff]
  %v318 = vld [vmem:[%s1 + $0x908] sm:$0xff]
  %v319 = vld [vmem:[%s1 + $0x910] sm:$0xff]
  %v320 = vld [vmem:[%s1 + $0x918] sm:$0xff]
  %v321 = vld [vmem:[%s1 + $0x920] sm:$0xff]
  %v322 = vld [vmem:[%s1 + $0x928] sm:$0xff]
  %v323 = vld [vmem:[%s1 + $0x930] sm:$0xff]
  %v324 = vld [vmem:[%s1 + $0x938] sm:$0xff]
  %v325 = vld [vmem:[%s1 + $0x940] sm:$0xff]
  %v326 = vld [vmem:[%s1 + $0x948] sm:$0xff]
  %v327 = vld [vmem:[%s1 + $0x950] sm:$0xff]
  %v328 = vld [vmem:[%s1 + $0x958] sm:$0xff]
  %v329 = vld [vmem:[%s1 + $0x960] sm:$0xff]
  %v330 = vld [vmem:[%s1 + $0x968] sm:$0xff]
  %v331 = vld [vmem:[%s1 + $0x970] sm:$0xff]
  %v332 = vld [vmem:[%s1 + $0x978] sm:$0xff]
  %v333 = vld [vmem:[%s1 + $0x980] sm:$0xff]
  %v334 = vld [vmem:[%s1 + $0x988] sm:$0xff]
  %v335 = vld [vmem:[%s1 + $0x990] sm:$0xff]
  %v336 = vld [vmem:[%s1 + $0x998] sm:$0xff]
  %v337 = vld [vmem:[%s1 + $0x9a0] sm:$0xff]
  %v338 = vld [vmem:[%s1 + $0x9a8] sm:$0xff]
  %v339 = vld [vmem:[%s1 + $0x9b0] sm:$0xff]
  %v340 = vld [vmem:[%s1 + $0x9b8] sm:$0xff]
  %v341 = vld [vmem:[%s1 + $0x9c0] sm:$0xff]
  %v342 = vld [vmem:[%s1 + $0x9c8] sm:$0xff]
  %v343 = vld [vmem:[%s1 + $0x9d0] sm:$0xff]
  %v344 = vld [vmem:[%s1 + $0x9d8] sm:$0xff]
  %v345 = vld [vmem:[%s1 + $0x9e0] sm:$0xff]
  %v346 = vld [vmem:[%s1 + $0x9e8] sm:$0xff]
  %v347 = vld [vmem:[%s1 + $0x9f0] sm:$0xff]
  %v348 = vld [vmem:[%s1 + $0x9f8] sm:$0xff]
  %v349 = vld [vmem:[%s1 + $0xa00] sm:$0xff]
  %v350 = vld [vmem:[%s1 + $0xa08] sm:$0xff]
  %v351 = vld [vmem:[%s1 + $0xa10] sm:$0xff]
  %v352 = vld [vmem:[%s1 + $0xa18] sm:$0xff]
  %v353 = vld [vmem:[%s1 + $0xa20] sm:$0xff]
  %v354 = vld [vmem:[%s1 + $0xa28] sm:$0xff]
  %v355 = vld [vmem:[%s1 + $0xa30] sm:$0xff]
  %v356 = vld [vmem:[%s1 + $0xa38] sm:$0xff]
  %v357 = vld [vmem:[%s1 + $0xa40] sm:$0xff]
  %v358 = vld [vmem:[%s1 + $0xa48] sm:$0xff]
  %v359 = vld [vmem:[%s1 + $0xa50] sm:$0xff]
  %v360 = vld [vmem:[%s1 + $0xa58] sm:$0xff]
  %v361 = vld [vmem:[%s1 + $0xa60] sm:$0xff]
  %v362 = vld [vmem:[%s1 + $0xa68] sm:$0xff]
  %v363 = vld [vmem:[%s1 + $0xa70] sm:$0xff]
  %v364 = vld [vmem:[%s1 + $0xa78] sm:$0xff]
  %v365 = vld [vmem:[%s1 + $0xa80] sm:$0xff]
  %v366 = vld [vmem:[%s1 + $0xa88] sm:$0xff]
  %v367 = vld [vmem:[%s1 + $0xa90] sm:$0xff]
  %v368 = vld [vmem:[%s1 + $0xa98] sm:$0xff]
  %v369 = vld [vmem:[%s1 + $0xaa0] sm:$0xff]
  %v370 = vld [vmem:[%s1 + $0xaa8] sm:$0xff]
  %v371 = vld [vmem:[%s1 + $0xab0] sm:$0xff]
  %v372 = vld [vmem:[%s1 + $0xab8] sm:$0xff]
  %v373 = vld [vmem:[%s1 + $0xac0] sm:$0xff]
  %v374 = vld [vmem:[%s1 + $0xac8] sm:$0xff]
  %v375 = vld [vmem:[%s1 + $0xad0] sm:$0xff]
  %v376 = vld [vmem:[%s1 + $0xad8] sm:$0xff]
  %v377 = vld [vmem:[%s1 + $0xae0] sm:$0xff]
  %v378 = vld [vmem:[%s1 + $0xae8] sm:$0xff]
  %v379 = vld [vmem:[%s1 + $0xaf0] sm:$0xff]
  %v380 = vld [vmem:[%s1 + $0xaf8] sm:$0xff]
  %v381 = vld [vmem:[%s1 + $0xb00] sm:$0xff]
  %v382 = vld [vmem:[%s1 + $0xb08] sm:$0xff]
  %v383 = vld [vmem:[%s1 + $0xb10] sm:$0xff]
  %v384 = vld [vmem:[%s1 + $0xb18] sm:$0xff]
  %v385 = vld [vmem:[%s1 + $0xb20] sm:$0xff]
  %v386 = vld [vmem:[%s1 + $0xb28] sm:$0xff]
  %v387 = vld [vmem:[%s1 + $0xb30] sm:$0xff]
  %v388 = vld [vmem:[%s1 + $0xb38] sm:$0xff]
  %v389 = vld [vmem:[%s1 + $0xb40] sm:$0xff]
  %v390 = vld [vmem:[%s1 + $0xb48] sm:$0xff]
  %v391 = vld [vmem:[%s1 + $0xb50] sm:$0xff]
  %v392 = vld [vmem:[%s1 + $0xb58] sm:$0xff]
  %v393 = vld [vmem:[%s1 + $0xb60] sm:$0xff]
  %v394 = vld [vmem:[%s1 + $0xb68] sm:$0xff]
  %v395 = vld [vmem:[%s1 + $0xb70] sm:$0xff]
  %v396 = vld [vmem:[%s1 + $0xb78] sm:$0xff]
  %v397 = vld [vmem:[%s1 + $0xb80] sm:$0xff]
  %v398 = vld [vmem:[%s1 + $0xb88] sm:$0xff]
  %v399 = vld [vmem:[%s1 + $0xb90] sm:$0xff]
  %v400 = vld [vmem:[%s1 + $0xb98] sm:$0xff]
  %v401 = vld [vmem:[%s1 + $0xba0] sm:$0xff]
  %v402 = vld [vmem:[%s1 + $0xba8] sm:$0xff]
  %v403 = vld [vmem:[%s1 + $0xbb0] sm:$0xff]
  %v404 = vld [vmem:[%s1 + $0xbb8] sm:$0xff]
  %v405 = vld [vmem:[%s1 + $0xbc0] sm:$0xff]
  %v406 = vld [vmem:[%s1 + $0xbc8] sm:$0xff]
  %v407 = vld [vmem:[%s1 + $0xbd0] sm:$0xff]
  %v408 = vld [vmem:[%s1 + $0xbd8] sm:$0xff]
  %v409 = vld [vmem:[%s1 + $0xbe0] sm:$0xff]
  %v410 = vld [vmem:[%s1 + $0xbe8] sm:$0xff]
  %v411 = vld [vmem:[%s1 + $0xbf0] sm:$0xff]
  %v412 = vld [vmem:[%s1 + $0xbf8] sm:$0xff]
  %v413 = vld [vmem:[%s2] sm:$0xff]
  %v415 = vperm.slane %v413, 0
  %v416 = vperm.slane %v413, 1
  %v417 = vperm.slane %v413, 2
  %v418 = vperm.slane %v413, 3
  %v419 = vperm.slane %v413, 4
  %v420 = vperm.slane %v413, 5
  %v421 = vperm.slane %v413, 6
  %v422 = vperm.slane %v413, 7
  %v434 = vunpack.c.l.b16 %v26
  %v435 = vunpack.c.h.b16 %v26
  %v436 = vunpack.c.l.b16 %v27
  %v437 = vunpack.c.h.b16 %v27
  %v438 = vunpack.c.l.b16 %v28
  %v439 = vunpack.c.h.b16 %v28
  %v440 = vpack.c.b16 %v434, %v434
  %v441 = vpack.c.b16 %v435, %v435
  %v442 = vpack.c.b16 %v436, %v436
  %v443 = vpack.c.b16 %v437, %v437
  %v444 = vpack.c.b16 %v438, %v438
  %v445 = vpack.c.b16 %v439, %v439
  %v836 = vunpack.c.l.b16 %v29
  %v837 = vunpack.c.h.b16 %v29
  %v838 = vunpack.c.l.b16 %v30
  %v839 = vunpack.c.h.b16 %v30
  %v840 = vunpack.c.l.b16 %v31
  %v841 = vunpack.c.h.b16 %v31
  %v842 = vunpack.c.l.b16 %v32
  %v843 = vunpack.c.h.b16 %v32
  %v844 = vunpack.c.l.b16 %v33
  %v845 = vunpack.c.h.b16 %v33
  %v846 = vunpack.c.l.b16 %v34
  %v847 = vunpack.c.h.b16 %v34
  %v848 = vunpack.c.l.b16 %v35
  %v849 = vunpack.c.h.b16 %v35
  %v850 = vunpack.c.l.b16 %v36
  %v851 = vunpack.c.h.b16 %v36
  %v852 = vunpack.c.l.b16 %v37
  %v853 = vunpack.c.h.b16 %v37
  %v854 = vunpack.c.l.b16 %v38
  %v855 = vunpack.c.h.b16 %v38
  %v856 = vunpack.c.l.b16 %v39
  %v857 = vunpack.c.h.b16 %v39
  %v858 = vunpack.c.l.b16 %v40
  %v859 = vunpack.c.h.b16 %v40
  %v860 = vunpack.c.l.b16 %v41
  %v861 = vunpack.c.h.b16 %v41
  %v862 = vunpack.c.l.b16 %v42
  %v863 = vunpack.c.h.b16 %v42
  %v864 = vunpack.c.l.b16 %v43
  %v865 = vunpack.c.h.b16 %v43
  %v866 = vunpack.c.l.b16 %v44
  %v867 = vunpack.c.h.b16 %v44
  %v868 = vunpack.c.l.b16 %v45
  %v869 = vunpack.c.h.b16 %v45
  %v870 = vunpack.c.l.b16 %v46
  %v871 = vunpack.c.h.b16 %v46
  %v872 = vunpack.c.l.b16 %v47
  %v873 = vunpack.c.h.b16 %v47
  %v874 = vunpack.c.l.b16 %v48
  %v875 = vunpack.c.h.b16 %v48
  %v876 = vunpack.c.l.b16 %v49
  %v877 = vunpack.c.h.b16 %v49
  %v878 = vunpack.c.l.b16 %v50
  %v879 = vunpack.c.h.b16 %v50
  %v880 = vunpack.c.l.b16 %v51
  %v881 = vunpack.c.h.b16 %v51
  %v882 = vunpack.c.l.b16 %v52
  %v883 = vunpack.c.h.b16 %v52
  %v884 = vunpack.c.l.b16 %v53
  %v885 = vunpack.c.h.b16 %v53
  %v886 = vunpack.c.l.b16 %v54
  %v887 = vunpack.c.h.b16 %v54
  %v888 = vunpack.c.l.b16 %v55
  %v889 = vunpack.c.h.b16 %v55
  %v890 = vunpack.c.l.b16 %v56
  %v891 = vunpack.c.h.b16 %v56
  %v892 = vunpack.c.l.b16 %v57
  %v893 = vunpack.c.h.b16 %v57
  %v894 = vunpack.c.l.b16 %v58
  %v895 = vunpack.c.h.b16 %v58
  %v896 = vunpack.c.l.b16 %v59
  %v897 = vunpack.c.h.b16 %v59
  %v898 = vunpack.c.l.b16 %v60
  %v899 = vunpack.c.h.b16 %v60
  %v900 = vunpack.c.l.b16 %v61
  %v901 = vunpack.c.h.b16 %v61
  %v902 = vunpack.c.l.b16 %v62
  %v903 = vunpack.c.h.b16 %v62
  %v904 = vunpack.c.l.b16 %v63
  %v905 = vunpack.c.h.b16 %v63
  %v906 = vunpack.c.l.b16 %v64
  %v907 = vunpack.c.h.b16 %v64
  %v908 = vunpack.c.l.b16 %v65
  %v909 = vunpack.c.h.b16 %v65
  %v910 = vunpack.c.l.b16 %v66
  %v911 = vunpack.c.h.b16 %v66
  %v912 = vunpack.c.l.b16 %v67
  %v913 = vunpack.c.h.b16 %v67
  %v914 = vunpack.c.l.b16 %v68
  %v915 = vunpack.c.h.b16 %v68
  %v916 = vunpack.c.l.b16 %v69
  %v917 = vunpack.c.h.b16 %v69
  %v918 = vunpack.c.l.b16 %v70
  %v919 = vunpack.c.h.b16 %v70
  %v920 = vunpack.c.l.b16 %v71
  %v921 = vunpack.c.h.b16 %v71
  %v922 = vunpack.c.l.b16 %v72
  %v923 = vunpack.c.h.b16 %v72
  %v924 = vunpack.c.l.b16 %v73
  %v925 = vunpack.c.h.b16 %v73
  %v926 = vunpack.c.l.b16 %v74
  %v927 = vunpack.c.h.b16 %v74
  %v928 = vunpack.c.l.b16 %v75
  %v929 = vunpack.c.h.b16 %v75
  %v930 = vunpack.c.l.b16 %v76
  %v931 = vunpack.c.h.b16 %v76
  %v932 = vunpack.c.l.b16 %v77
  %v933 = vunpack.c.h.b16 %v77
  %v934 = vunpack.c.l.b16 %v78
  %v935 = vunpack.c.h.b16 %v78
  %v936 = vunpack.c.l.b16 %v79
  %v937 = vunpack.c.h.b16 %v79
  %v938 = vunpack.c.l.b16 %v80
  %v939 = vunpack.c.h.b16 %v80
  %v940 = vunpack.c.l.b16 %v81
  %v941 = vunpack.c.h.b16 %v81
  %v942 = vunpack.c.l.b16 %v82
  %v943 = vunpack.c.h.b16 %v82
  %v944 = vunpack.c.l.b16 %v83
  %v945 = vunpack.c.h.b16 %v83
  %v946 = vunpack.c.l.b16 %v84
  %v947 = vunpack.c.h.b16 %v84
  %v948 = vunpack.c.l.b16 %v85
  %v949 = vunpack.c.h.b16 %v85
  %v950 = vunpack.c.l.b16 %v86
  %v951 = vunpack.c.h.b16 %v86
  %v952 = vunpack.c.l.b16 %v87
  %v953 = vunpack.c.h.b16 %v87
  %v954 = vunpack.c.l.b16 %v88
  %v955 = vunpack.c.h.b16 %v88
  %v956 = vunpack.c.l.b16 %v89
  %v957 = vunpack.c.h.b16 %v89
  %v958 = vunpack.c.l.b16 %v90
  %v959 = vunpack.c.h.b16 %v90
  %v960 = vunpack.c.l.b16 %v91
  %v961 = vunpack.c.h.b16 %v91
  %v962 = vunpack.c.l.b16 %v92
  %v963 = vunpack.c.h.b16 %v92
  %v964 = vunpack.c.l.b16 %v93
  %v965 = vunpack.c.h.b16 %v93
  %v966 = vunpack.c.l.b16 %v94
  %v967 = vunpack.c.h.b16 %v94
  %v968 = vunpack.c.l.b16 %v95
  %v969 = vunpack.c.h.b16 %v95
  %v970 = vunpack.c.l.b16 %v96
  %v971 = vunpack.c.h.b16 %v96
  %v972 = vunpack.c.l.b16 %v97
  %v973 = vunpack.c.h.b16 %v97
  %v974 = vunpack.c.l.b16 %v98
  %v975 = vunpack.c.h.b16 %v98
  %v976 = vunpack.c.l.b16 %v99
  %v977 = vunpack.c.h.b16 %v99
  %v978 = vunpack.c.l.b16 %v100
  %v979 = vunpack.c.h.b16 %v100
  %v980 = vunpack.c.l.b16 %v101
  %v981 = vunpack.c.h.b16 %v101
  %v982 = vunpack.c.l.b16 %v102
  %v983 = vunpack.c.h.b16 %v102
  %v984 = vunpack.c.l.b16 %v103
  %v985 = vunpack.c.h.b16 %v103
  %v986 = vunpack.c.l.b16 %v104
  %v987 = vunpack.c.h.b16 %v104
  %v988 = vunpack.c.l.b16 %v105
  %v989 = vunpack.c.h.b16 %v105
  %v990 = vunpack.c.l.b16 %v106
  %v991 = vunpack.c.h.b16 %v106
  %v992 = vunpack.c.l.b16 %v107
  %v993 = vunpack.c.h.b16 %v107
  %v994 = vunpack.c.l.b16 %v108
  %v995 = vunpack.c.h.b16 %v108
  %v996 = vunpack.c.l.b16 %v109
  %v997 = vunpack.c.h.b16 %v109
  %v998 = vunpack.c.l.b16 %v110
  %v999 = vunpack.c.h.b16 %v110
  %v1000 = vunpack.c.l.b16 %v111
  %v1001 = vunpack.c.h.b16 %v111
  %v1002 = vunpack.c.l.b16 %v112
  %v1003 = vunpack.c.h.b16 %v112
  %v1004 = vunpack.c.l.b16 %v113
  %v1005 = vunpack.c.h.b16 %v113
  %v1006 = vunpack.c.l.b16 %v114
  %v1007 = vunpack.c.h.b16 %v114
  %v1008 = vunpack.c.l.b16 %v115
  %v1009 = vunpack.c.h.b16 %v115
  %v1010 = vunpack.c.l.b16 %v116
  %v1011 = vunpack.c.h.b16 %v116
  %v1012 = vunpack.c.l.b16 %v117
  %v1013 = vunpack.c.h.b16 %v117
  %v1014 = vunpack.c.l.b16 %v118
  %v1015 = vunpack.c.h.b16 %v118
  %v1016 = vunpack.c.l.b16 %v119
  %v1017 = vunpack.c.h.b16 %v119
  %v1018 = vunpack.c.l.b16 %v120
  %v1019 = vunpack.c.h.b16 %v120
  %v1020 = vunpack.c.l.b16 %v121
  %v1021 = vunpack.c.h.b16 %v121
  %v1022 = vunpack.c.l.b16 %v122
  %v1023 = vunpack.c.h.b16 %v122
  %v1024 = vunpack.c.l.b16 %v123
  %v1025 = vunpack.c.h.b16 %v123
  %v1026 = vunpack.c.l.b16 %v124
  %v1027 = vunpack.c.h.b16 %v124
  %v1028 = vunpack.c.l.b16 %v125
  %v1029 = vunpack.c.h.b16 %v125
  %v1030 = vunpack.c.l.b16 %v126
  %v1031 = vunpack.c.h.b16 %v126
  %v1032 = vunpack.c.l.b16 %v127
  %v1033 = vunpack.c.h.b16 %v127
  %v1034 = vunpack.c.l.b16 %v128
  %v1035 = vunpack.c.h.b16 %v128
  %v1036 = vunpack.c.l.b16 %v129
  %v1037 = vunpack.c.h.b16 %v129
  %v1038 = vunpack.c.l.b16 %v130
  %v1039 = vunpack.c.h.b16 %v130
  %v1040 = vunpack.c.l.b16 %v131
  %v1041 = vunpack.c.h.b16 %v131
  %v1042 = vunpack.c.l.b16 %v132
  %v1043 = vunpack.c.h.b16 %v132
  %v1044 = vunpack.c.l.b16 %v133
  %v1045 = vunpack.c.h.b16 %v133
  %v1046 = vunpack.c.l.b16 %v134
  %v1047 = vunpack.c.h.b16 %v134
  %v1048 = vunpack.c.l.b16 %v135
  %v1049 = vunpack.c.h.b16 %v135
  %v1050 = vunpack.c.l.b16 %v136
  %v1051 = vunpack.c.h.b16 %v136
  %v1052 = vunpack.c.l.b16 %v137
  %v1053 = vunpack.c.h.b16 %v137
  %v1054 = vunpack.c.l.b16 %v138
  %v1055 = vunpack.c.h.b16 %v138
  %v1056 = vunpack.c.l.b16 %v139
  %v1057 = vunpack.c.h.b16 %v139
  %v1058 = vunpack.c.l.b16 %v140
  %v1059 = vunpack.c.h.b16 %v140
  %v1060 = vunpack.c.l.b16 %v141
  %v1061 = vunpack.c.h.b16 %v141
  %v1062 = vunpack.c.l.b16 %v142
  %v1063 = vunpack.c.h.b16 %v142
  %v1064 = vunpack.c.l.b16 %v143
  %v1065 = vunpack.c.h.b16 %v143
  %v1066 = vunpack.c.l.b16 %v144
  %v1067 = vunpack.c.h.b16 %v144
  %v1068 = vunpack.c.l.b16 %v145
  %v1069 = vunpack.c.h.b16 %v145
  %v1070 = vunpack.c.l.b16 %v146
  %v1071 = vunpack.c.h.b16 %v146
  %v1072 = vunpack.c.l.b16 %v147
  %v1073 = vunpack.c.h.b16 %v147
  %v1074 = vunpack.c.l.b16 %v148
  %v1075 = vunpack.c.h.b16 %v148
  %v1076 = vunpack.c.l.b16 %v149
  %v1077 = vunpack.c.h.b16 %v149
  %v1078 = vunpack.c.l.b16 %v150
  %v1079 = vunpack.c.h.b16 %v150
  %v1080 = vunpack.c.l.b16 %v151
  %v1081 = vunpack.c.h.b16 %v151
  %v1082 = vunpack.c.l.b16 %v152
  %v1083 = vunpack.c.h.b16 %v152
  %v1084 = vunpack.c.l.b16 %v153
  %v1085 = vunpack.c.h.b16 %v153
  %v1086 = vunpack.c.l.b16 %v154
  %v1087 = vunpack.c.h.b16 %v154
  %v1088 = vunpack.c.l.b16 %v155
  %v1089 = vunpack.c.h.b16 %v155
  %v1090 = vunpack.c.l.b16 %v156
  %v1091 = vunpack.c.h.b16 %v156
  %v1092 = vunpack.c.l.b16 %v157
  %v1093 = vunpack.c.h.b16 %v157
  %v1094 = vunpack.c.l.b16 %v158
  %v1095 = vunpack.c.h.b16 %v158
  %v1096 = vunpack.c.l.b16 %v159
  %v1097 = vunpack.c.h.b16 %v159
  %v1098 = vunpack.c.l.b16 %v160
  %v1099 = vunpack.c.h.b16 %v160
  %v1100 = vunpack.c.l.b16 %v161
  %v1101 = vunpack.c.h.b16 %v161
  %v1102 = vunpack.c.l.b16 %v162
  %v1103 = vunpack.c.h.b16 %v162
  %v1104 = vunpack.c.l.b16 %v163
  %v1105 = vunpack.c.h.b16 %v163
  %v1106 = vunpack.c.l.b16 %v164
  %v1107 = vunpack.c.h.b16 %v164
  %v1108 = vunpack.c.l.b16 %v165
  %v1109 = vunpack.c.h.b16 %v165
  %v1110 = vunpack.c.l.b16 %v166
  %v1111 = vunpack.c.h.b16 %v166
  %v1112 = vunpack.c.l.b16 %v167
  %v1113 = vunpack.c.h.b16 %v167
  %v1114 = vunpack.c.l.b16 %v168
  %v1115 = vunpack.c.h.b16 %v168
  %v1116 = vunpack.c.l.b16 %v169
  %v1117 = vunpack.c.h.b16 %v169
  %v1118 = vunpack.c.l.b16 %v170
  %v1119 = vunpack.c.h.b16 %v170
  %v1120 = vunpack.c.l.b16 %v171
  %v1121 = vunpack.c.h.b16 %v171
  %v1122 = vunpack.c.l.b16 %v172
  %v1123 = vunpack.c.h.b16 %v172
  %v1124 = vunpack.c.l.b16 %v173
  %v1125 = vunpack.c.h.b16 %v173
  %v1126 = vunpack.c.l.b16 %v174
  %v1127 = vunpack.c.h.b16 %v174
  %v1128 = vunpack.c.l.b16 %v175
  %v1129 = vunpack.c.h.b16 %v175
  %v1130 = vunpack.c.l.b16 %v176
  %v1131 = vunpack.c.h.b16 %v176
  %v1132 = vunpack.c.l.b16 %v177
  %v1133 = vunpack.c.h.b16 %v177
  %v1134 = vunpack.c.l.b16 %v178
  %v1135 = vunpack.c.h.b16 %v178
  %v1136 = vunpack.c.l.b16 %v179
  %v1137 = vunpack.c.h.b16 %v179
  %v1138 = vunpack.c.l.b16 %v180
  %v1139 = vunpack.c.h.b16 %v180
  %v1140 = vunpack.c.l.b16 %v181
  %v1141 = vunpack.c.h.b16 %v181
  %v1142 = vunpack.c.l.b16 %v182
  %v1143 = vunpack.c.h.b16 %v182
  %v1144 = vunpack.c.l.b16 %v183
  %v1145 = vunpack.c.h.b16 %v183
  %v1146 = vunpack.c.l.b16 %v184
  %v1147 = vunpack.c.h.b16 %v184
  %v1148 = vunpack.c.l.b16 %v185
  %v1149 = vunpack.c.h.b16 %v185
  %v1150 = vunpack.c.l.b16 %v186
  %v1151 = vunpack.c.h.b16 %v186
  %v1152 = vunpack.c.l.b16 %v187
  %v1153 = vunpack.c.h.b16 %v187
  %v1154 = vunpack.c.l.b16 %v188
  %v1155 = vunpack.c.h.b16 %v188
  %v1156 = vunpack.c.l.b16 %v189
  %v1157 = vunpack.c.h.b16 %v189
  %v1158 = vunpack.c.l.b16 %v190
  %v1159 = vunpack.c.h.b16 %v190
  %v1160 = vunpack.c.l.b16 %v191
  %v1161 = vunpack.c.h.b16 %v191
  %v1162 = vunpack.c.l.b16 %v192
  %v1163 = vunpack.c.h.b16 %v192
  %v1164 = vunpack.c.l.b16 %v193
  %v1165 = vunpack.c.h.b16 %v193
  %v1166 = vunpack.c.l.b16 %v194
  %v1167 = vunpack.c.h.b16 %v194
  %v1168 = vunpack.c.l.b16 %v195
  %v1169 = vunpack.c.h.b16 %v195
  %v1170 = vunpack.c.l.b16 %v196
  %v1171 = vunpack.c.h.b16 %v196
  %v1172 = vunpack.c.l.b16 %v197
  %v1173 = vunpack.c.h.b16 %v197
  %v1174 = vunpack.c.l.b16 %v198
  %v1175 = vunpack.c.h.b16 %v198
  %v1176 = vunpack.c.l.b16 %v199
  %v1177 = vunpack.c.h.b16 %v199
  %v1178 = vunpack.c.l.b16 %v200
  %v1179 = vunpack.c.h.b16 %v200
  %v1180 = vunpack.c.l.b16 %v201
  %v1181 = vunpack.c.h.b16 %v201
  %v1182 = vunpack.c.l.b16 %v202
  %v1183 = vunpack.c.h.b16 %v202
  %v1184 = vunpack.c.l.b16 %v203
  %v1185 = vunpack.c.h.b16 %v203
  %v1186 = vunpack.c.l.b16 %v204
  %v1187 = vunpack.c.h.b16 %v204
  %v1188 = vunpack.c.l.b16 %v205
  %v1189 = vunpack.c.h.b16 %v205
  %v1190 = vunpack.c.l.b16 %v206
  %v1191 = vunpack.c.h.b16 %v206
  %v1192 = vunpack.c.l.b16 %v207
  %v1193 = vunpack.c.h.b16 %v207
  %v1194 = vunpack.c.l.b16 %v208
  %v1195 = vunpack.c.h.b16 %v208
  %v1196 = vunpack.c.l.b16 %v209
  %v1197 = vunpack.c.h.b16 %v209
  %v1198 = vunpack.c.l.b16 %v210
  %v1199 = vunpack.c.h.b16 %v210
  %v1200 = vunpack.c.l.b16 %v211
  %v1201 = vunpack.c.h.b16 %v211
  %v1202 = vunpack.c.l.b16 %v212
  %v1203 = vunpack.c.h.b16 %v212
  %v1204 = vunpack.c.l.b16 %v213
  %v1205 = vunpack.c.h.b16 %v213
  %v1206 = vunpack.c.l.b16 %v214
  %v1207 = vunpack.c.h.b16 %v214
  %v1208 = vunpack.c.l.b16 %v215
  %v1209 = vunpack.c.h.b16 %v215
  %v1210 = vunpack.c.l.b16 %v216
  %v1211 = vunpack.c.h.b16 %v216
  %v1212 = vunpack.c.l.b16 %v217
  %v1213 = vunpack.c.h.b16 %v217
  %v1214 = vunpack.c.l.b16 %v218
  %v1215 = vunpack.c.h.b16 %v218
  %v1216 = vunpack.c.l.b16 %v219
  %v1217 = vunpack.c.h.b16 %v219
  %v1218 = vunpack.c.l.b16 %v220
  %v1219 = vunpack.c.h.b16 %v220
  %v1220 = vunpack.c.l.b16 %v221
  %v1221 = vunpack.c.h.b16 %v221
  %v1222 = vunpack.c.l.b16 %v222
  %v1223 = vunpack.c.h.b16 %v222
  %v1224 = vunpack.c.l.b16 %v223
  %v1225 = vunpack.c.h.b16 %v223
  %v1226 = vunpack.c.l.b16 %v224
  %v1227 = vunpack.c.h.b16 %v224
  %v1228 = vunpack.c.l.b16 %v225
  %v1229 = vunpack.c.h.b16 %v225
  %v1230 = vunpack.c.l.b16 %v226
  %v1231 = vunpack.c.h.b16 %v226
  %v1232 = vunpack.c.l.b16 %v227
  %v1233 = vunpack.c.h.b16 %v227
  %v1234 = vunpack.c.l.b16 %v228
  %v1235 = vunpack.c.h.b16 %v228
  %v1236 = vunpack.c.l.b16 %v229
  %v1237 = vunpack.c.h.b16 %v229
  %v1238 = vunpack.c.l.b16 %v230
  %v1239 = vunpack.c.h.b16 %v230
  %v1240 = vunpack.c.l.b16 %v231
  %v1241 = vunpack.c.h.b16 %v231
  %v1242 = vunpack.c.l.b16 %v232
  %v1243 = vunpack.c.h.b16 %v232
  %v1244 = vunpack.c.l.b16 %v233
  %v1245 = vunpack.c.h.b16 %v233
  %v1246 = vunpack.c.l.b16 %v234
  %v1247 = vunpack.c.h.b16 %v234
  %v1248 = vunpack.c.l.b16 %v235
  %v1249 = vunpack.c.h.b16 %v235
  %v1250 = vunpack.c.l.b16 %v236
  %v1251 = vunpack.c.h.b16 %v236
  %v1252 = vunpack.c.l.b16 %v237
  %v1253 = vunpack.c.h.b16 %v237
  %v1254 = vunpack.c.l.b16 %v238
  %v1255 = vunpack.c.h.b16 %v238
  %v1256 = vunpack.c.l.b16 %v239
  %v1257 = vunpack.c.h.b16 %v239
  %v1258 = vunpack.c.l.b16 %v240
  %v1259 = vunpack.c.h.b16 %v240
  %v1260 = vunpack.c.l.b16 %v241
  %v1261 = vunpack.c.h.b16 %v241
  %v1262 = vunpack.c.l.b16 %v242
  %v1263 = vunpack.c.h.b16 %v242
  %v1264 = vunpack.c.l.b16 %v243
  %v1265 = vunpack.c.h.b16 %v243
  %v1266 = vunpack.c.l.b16 %v244
  %v1267 = vunpack.c.h.b16 %v244
  %v1268 = vunpack.c.l.b16 %v245
  %v1269 = vunpack.c.h.b16 %v245
  %v1270 = vunpack.c.l.b16 %v246
  %v1271 = vunpack.c.h.b16 %v246
  %v1272 = vunpack.c.l.b16 %v247
  %v1273 = vunpack.c.h.b16 %v247
  %v1274 = vunpack.c.l.b16 %v248
  %v1275 = vunpack.c.h.b16 %v248
  %v1276 = vunpack.c.l.b16 %v249
  %v1277 = vunpack.c.h.b16 %v249
  %v1278 = vunpack.c.l.b16 %v250
  %v1279 = vunpack.c.h.b16 %v250
  %v1280 = vunpack.c.l.b16 %v251
  %v1281 = vunpack.c.h.b16 %v251
  %v1282 = vunpack.c.l.b16 %v252
  %v1283 = vunpack.c.h.b16 %v252
  %v1284 = vunpack.c.l.b16 %v253
  %v1285 = vunpack.c.h.b16 %v253
  %v1286 = vunpack.c.l.b16 %v254
  %v1287 = vunpack.c.h.b16 %v254
  %v1288 = vunpack.c.l.b16 %v255
  %v1289 = vunpack.c.h.b16 %v255
  %v1290 = vunpack.c.l.b16 %v256
  %v1291 = vunpack.c.h.b16 %v256
  %v1292 = vunpack.c.l.b16 %v257
  %v1293 = vunpack.c.h.b16 %v257
  %v1294 = vunpack.c.l.b16 %v258
  %v1295 = vunpack.c.h.b16 %v258
  %v1296 = vunpack.c.l.b16 %v259
  %v1297 = vunpack.c.h.b16 %v259
  %v1298 = vunpack.c.l.b16 %v260
  %v1299 = vunpack.c.h.b16 %v260
  %v1300 = vunpack.c.l.b16 %v261
  %v1301 = vunpack.c.h.b16 %v261
  %v1302 = vunpack.c.l.b16 %v262
  %v1303 = vunpack.c.h.b16 %v262
  %v1304 = vunpack.c.l.b16 %v263
  %v1305 = vunpack.c.h.b16 %v263
  %v1306 = vunpack.c.l.b16 %v264
  %v1307 = vunpack.c.h.b16 %v264
  %v1308 = vunpack.c.l.b16 %v265
  %v1309 = vunpack.c.h.b16 %v265
  %v1310 = vunpack.c.l.b16 %v266
  %v1311 = vunpack.c.h.b16 %v266
  %v1312 = vunpack.c.l.b16 %v267
  %v1313 = vunpack.c.h.b16 %v267
  %v1314 = vunpack.c.l.b16 %v268
  %v1315 = vunpack.c.h.b16 %v268
  %v1316 = vunpack.c.l.b16 %v269
  %v1317 = vunpack.c.h.b16 %v269
  %v1318 = vunpack.c.l.b16 %v270
  %v1319 = vunpack.c.h.b16 %v270
  %v1320 = vunpack.c.l.b16 %v271
  %v1321 = vunpack.c.h.b16 %v271
  %v1322 = vunpack.c.l.b16 %v272
  %v1323 = vunpack.c.h.b16 %v272
  %v1324 = vunpack.c.l.b16 %v273
  %v1325 = vunpack.c.h.b16 %v273
  %v1326 = vunpack.c.l.b16 %v274
  %v1327 = vunpack.c.h.b16 %v274
  %v1328 = vunpack.c.l.b16 %v275
  %v1329 = vunpack.c.h.b16 %v275
  %v1330 = vunpack.c.l.b16 %v276
  %v1331 = vunpack.c.h.b16 %v276
  %v1332 = vunpack.c.l.b16 %v277
  %v1333 = vunpack.c.h.b16 %v277
  %v1334 = vunpack.c.l.b16 %v278
  %v1335 = vunpack.c.h.b16 %v278
  %v1336 = vunpack.c.l.b16 %v279
  %v1337 = vunpack.c.h.b16 %v279
  %v1338 = vunpack.c.l.b16 %v280
  %v1339 = vunpack.c.h.b16 %v280
  %v1340 = vunpack.c.l.b16 %v281
  %v1341 = vunpack.c.h.b16 %v281
  %v1342 = vunpack.c.l.b16 %v282
  %v1343 = vunpack.c.h.b16 %v282
  %v1344 = vunpack.c.l.b16 %v283
  %v1345 = vunpack.c.h.b16 %v283
  %v1346 = vunpack.c.l.b16 %v284
  %v1347 = vunpack.c.h.b16 %v284
  %v1348 = vunpack.c.l.b16 %v285
  %v1349 = vunpack.c.h.b16 %v285
  %v1350 = vunpack.c.l.b16 %v286
  %v1351 = vunpack.c.h.b16 %v286
  %v1352 = vunpack.c.l.b16 %v287
  %v1353 = vunpack.c.h.b16 %v287
  %v1354 = vunpack.c.l.b16 %v288
  %v1355 = vunpack.c.h.b16 %v288
  %v1356 = vunpack.c.l.b16 %v289
  %v1357 = vunpack.c.h.b16 %v289
  %v1358 = vunpack.c.l.b16 %v290
  %v1359 = vunpack.c.h.b16 %v290
  %v1360 = vunpack.c.l.b16 %v291
  %v1361 = vunpack.c.h.b16 %v291
  %v1362 = vunpack.c.l.b16 %v292
  %v1363 = vunpack.c.h.b16 %v292
  %v1364 = vunpack.c.l.b16 %v293
  %v1365 = vunpack.c.h.b16 %v293
  %v1366 = vunpack.c.l.b16 %v294
  %v1367 = vunpack.c.h.b16 %v294
  %v1368 = vunpack.c.l.b16 %v295
  %v1369 = vunpack.c.h.b16 %v295
  %v1370 = vunpack.c.l.b16 %v296
  %v1371 = vunpack.c.h.b16 %v296
  %v1372 = vunpack.c.l.b16 %v297
  %v1373 = vunpack.c.h.b16 %v297
  %v1374 = vunpack.c.l.b16 %v298
  %v1375 = vunpack.c.h.b16 %v298
  %v1376 = vunpack.c.l.b16 %v299
  %v1377 = vunpack.c.h.b16 %v299
  %v1378 = vunpack.c.l.b16 %v300
  %v1379 = vunpack.c.h.b16 %v300
  %v1380 = vunpack.c.l.b16 %v301
  %v1381 = vunpack.c.h.b16 %v301
  %v1382 = vunpack.c.l.b16 %v302
  %v1383 = vunpack.c.h.b16 %v302
  %v1384 = vunpack.c.l.b16 %v303
  %v1385 = vunpack.c.h.b16 %v303
  %v1386 = vunpack.c.l.b16 %v304
  %v1387 = vunpack.c.h.b16 %v304
  %v1388 = vunpack.c.l.b16 %v305
  %v1389 = vunpack.c.h.b16 %v305
  %v1390 = vunpack.c.l.b16 %v306
  %v1391 = vunpack.c.h.b16 %v306
  %v1392 = vunpack.c.l.b16 %v307
  %v1393 = vunpack.c.h.b16 %v307
  %v1394 = vunpack.c.l.b16 %v308
  %v1395 = vunpack.c.h.b16 %v308
  %v1396 = vunpack.c.l.b16 %v309
  %v1397 = vunpack.c.h.b16 %v309
  %v1398 = vunpack.c.l.b16 %v310
  %v1399 = vunpack.c.h.b16 %v310
  %v1400 = vunpack.c.l.b16 %v311
  %v1401 = vunpack.c.h.b16 %v311
  %v1402 = vunpack.c.l.b16 %v312
  %v1403 = vunpack.c.h.b16 %v312
  %v1404 = vunpack.c.l.b16 %v313
  %v1405 = vunpack.c.h.b16 %v313
  %v1406 = vunpack.c.l.b16 %v314
  %v1407 = vunpack.c.h.b16 %v314
  %v1408 = vunpack.c.l.b16 %v315
  %v1409 = vunpack.c.h.b16 %v315
  %v1410 = vunpack.c.l.b16 %v316
  %v1411 = vunpack.c.h.b16 %v316
  %v1412 = vunpack.c.l.b16 %v317
  %v1413 = vunpack.c.h.b16 %v317
  %v1414 = vunpack.c.l.b16 %v318
  %v1415 = vunpack.c.h.b16 %v318
  %v1416 = vunpack.c.l.b16 %v319
  %v1417 = vunpack.c.h.b16 %v319
  %v1418 = vunpack.c.l.b16 %v320
  %v1419 = vunpack.c.h.b16 %v320
  %v1420 = vunpack.c.l.b16 %v321
  %v1421 = vunpack.c.h.b16 %v321
  %v1422 = vunpack.c.l.b16 %v322
  %v1423 = vunpack.c.h.b16 %v322
  %v1424 = vunpack.c.l.b16 %v323
  %v1425 = vunpack.c.h.b16 %v323
  %v1426 = vunpack.c.l.b16 %v324
  %v1427 = vunpack.c.h.b16 %v324
  %v1428 = vunpack.c.l.b16 %v325
  %v1429 = vunpack.c.h.b16 %v325
  %v1430 = vunpack.c.l.b16 %v326
  %v1431 = vunpack.c.h.b16 %v326
  %v1432 = vunpack.c.l.b16 %v327
  %v1433 = vunpack.c.h.b16 %v327
  %v1434 = vunpack.c.l.b16 %v328
  %v1435 = vunpack.c.h.b16 %v328
  %v1436 = vunpack.c.l.b16 %v329
  %v1437 = vunpack.c.h.b16 %v329
  %v1438 = vunpack.c.l.b16 %v330
  %v1439 = vunpack.c.h.b16 %v330
  %v1440 = vunpack.c.l.b16 %v331
  %v1441 = vunpack.c.h.b16 %v331
  %v1442 = vunpack.c.l.b16 %v332
  %v1443 = vunpack.c.h.b16 %v332
  %v1444 = vunpack.c.l.b16 %v333
  %v1445 = vunpack.c.h.b16 %v333
  %v1446 = vunpack.c.l.b16 %v334
  %v1447 = vunpack.c.h.b16 %v334
  %v1448 = vunpack.c.l.b16 %v335
  %v1449 = vunpack.c.h.b16 %v335
  %v1450 = vunpack.c.l.b16 %v336
  %v1451 = vunpack.c.h.b16 %v336
  %v1452 = vunpack.c.l.b16 %v337
  %v1453 = vunpack.c.h.b16 %v337
  %v1454 = vunpack.c.l.b16 %v338
  %v1455 = vunpack.c.h.b16 %v338
  %v1456 = vunpack.c.l.b16 %v339
  %v1457 = vunpack.c.h.b16 %v339
  %v1458 = vunpack.c.l.b16 %v340
  %v1459 = vunpack.c.h.b16 %v340
  %v1460 = vunpack.c.l.b16 %v341
  %v1461 = vunpack.c.h.b16 %v341
  %v1462 = vunpack.c.l.b16 %v342
  %v1463 = vunpack.c.h.b16 %v342
  %v1464 = vunpack.c.l.b16 %v343
  %v1465 = vunpack.c.h.b16 %v343
  %v1466 = vunpack.c.l.b16 %v344
  %v1467 = vunpack.c.h.b16 %v344
  %v1468 = vunpack.c.l.b16 %v345
  %v1469 = vunpack.c.h.b16 %v345
  %v1470 = vunpack.c.l.b16 %v346
  %v1471 = vunpack.c.h.b16 %v346
  %v1472 = vunpack.c.l.b16 %v347
  %v1473 = vunpack.c.h.b16 %v347
  %v1474 = vunpack.c.l.b16 %v348
  %v1475 = vunpack.c.h.b16 %v348
  %v1476 = vunpack.c.l.b16 %v349
  %v1477 = vunpack.c.h.b16 %v349
  %v1478 = vunpack.c.l.b16 %v350
  %v1479 = vunpack.c.h.b16 %v350
  %v1480 = vunpack.c.l.b16 %v351
  %v1481 = vunpack.c.h.b16 %v351
  %v1482 = vunpack.c.l.b16 %v352
  %v1483 = vunpack.c.h.b16 %v352
  %v1484 = vunpack.c.l.b16 %v353
  %v1485 = vunpack.c.h.b16 %v353
  %v1486 = vunpack.c.l.b16 %v354
  %v1487 = vunpack.c.h.b16 %v354
  %v1488 = vunpack.c.l.b16 %v355
  %v1489 = vunpack.c.h.b16 %v355
  %v1490 = vunpack.c.l.b16 %v356
  %v1491 = vunpack.c.h.b16 %v356
  %v1492 = vunpack.c.l.b16 %v357
  %v1493 = vunpack.c.h.b16 %v357
  %v1494 = vunpack.c.l.b16 %v358
  %v1495 = vunpack.c.h.b16 %v358
  %v1496 = vunpack.c.l.b16 %v359
  %v1497 = vunpack.c.h.b16 %v359
  %v1498 = vunpack.c.l.b16 %v360
  %v1499 = vunpack.c.h.b16 %v360
  %v1500 = vunpack.c.l.b16 %v361
  %v1501 = vunpack.c.h.b16 %v361
  %v1502 = vunpack.c.l.b16 %v362
  %v1503 = vunpack.c.h.b16 %v362
  %v1504 = vunpack.c.l.b16 %v363
  %v1505 = vunpack.c.h.b16 %v363
  %v1506 = vunpack.c.l.b16 %v364
  %v1507 = vunpack.c.h.b16 %v364
  %v1508 = vunpack.c.l.b16 %v365
  %v1509 = vunpack.c.h.b16 %v365
  %v1510 = vunpack.c.l.b16 %v366
  %v1511 = vunpack.c.h.b16 %v366
  %v1512 = vunpack.c.l.b16 %v367
  %v1513 = vunpack.c.h.b16 %v367
  %v1514 = vunpack.c.l.b16 %v368
  %v1515 = vunpack.c.h.b16 %v368
  %v1516 = vunpack.c.l.b16 %v369
  %v1517 = vunpack.c.h.b16 %v369
  %v1518 = vunpack.c.l.b16 %v370
  %v1519 = vunpack.c.h.b16 %v370
  %v1520 = vunpack.c.l.b16 %v371
  %v1521 = vunpack.c.h.b16 %v371
  %v1522 = vunpack.c.l.b16 %v372
  %v1523 = vunpack.c.h.b16 %v372
  %v1524 = vunpack.c.l.b16 %v373
  %v1525 = vunpack.c.h.b16 %v373
  %v1526 = vunpack.c.l.b16 %v374
  %v1527 = vunpack.c.h.b16 %v374
  %v1528 = vunpack.c.l.b16 %v375
  %v1529 = vunpack.c.h.b16 %v375
  %v1530 = vunpack.c.l.b16 %v376
  %v1531 = vunpack.c.h.b16 %v376
  %v1532 = vunpack.c.l.b16 %v377
  %v1533 = vunpack.c.h.b16 %v377
  %v1534 = vunpack.c.l.b16 %v378
  %v1535 = vunpack.c.h.b16 %v378
  %v1536 = vunpack.c.l.b16 %v379
  %v1537 = vunpack.c.h.b16 %v379
  %v1538 = vunpack.c.l.b16 %v380
  %v1539 = vunpack.c.h.b16 %v380
  %v1540 = vunpack.c.l.b16 %v381
  %v1541 = vunpack.c.h.b16 %v381
  %v1542 = vunpack.c.l.b16 %v382
  %v1543 = vunpack.c.h.b16 %v382
  %v1544 = vunpack.c.l.b16 %v383
  %v1545 = vunpack.c.h.b16 %v383
  %v1546 = vunpack.c.l.b16 %v384
  %v1547 = vunpack.c.h.b16 %v384
  %v1548 = vunpack.c.l.b16 %v385
  %v1549 = vunpack.c.h.b16 %v385
  %v1550 = vunpack.c.l.b16 %v386
  %v1551 = vunpack.c.h.b16 %v386
  %v1552 = vunpack.c.l.b16 %v387
  %v1553 = vunpack.c.h.b16 %v387
  %v1554 = vunpack.c.l.b16 %v388
  %v1555 = vunpack.c.h.b16 %v388
  %v1556 = vunpack.c.l.b16 %v389
  %v1557 = vunpack.c.h.b16 %v389
  %v1558 = vunpack.c.l.b16 %v390
  %v1559 = vunpack.c.h.b16 %v390
  %v1560 = vunpack.c.l.b16 %v391
  %v1561 = vunpack.c.h.b16 %v391
  %v1562 = vunpack.c.l.b16 %v392
  %v1563 = vunpack.c.h.b16 %v392
  %v1564 = vunpack.c.l.b16 %v393
  %v1565 = vunpack.c.h.b16 %v393
  %v1566 = vunpack.c.l.b16 %v394
  %v1567 = vunpack.c.h.b16 %v394
  %v1568 = vunpack.c.l.b16 %v395
  %v1569 = vunpack.c.h.b16 %v395
  %v1570 = vunpack.c.l.b16 %v396
  %v1571 = vunpack.c.h.b16 %v396
  %v1572 = vunpack.c.l.b16 %v397
  %v1573 = vunpack.c.h.b16 %v397
  %v1574 = vunpack.c.l.b16 %v398
  %v1575 = vunpack.c.h.b16 %v398
  %v1576 = vunpack.c.l.b16 %v399
  %v1577 = vunpack.c.h.b16 %v399
  %v1578 = vunpack.c.l.b16 %v400
  %v1579 = vunpack.c.h.b16 %v400
  %v1580 = vunpack.c.l.b16 %v401
  %v1581 = vunpack.c.h.b16 %v401
  %v1582 = vunpack.c.l.b16 %v402
  %v1583 = vunpack.c.h.b16 %v402
  %v1584 = vunpack.c.l.b16 %v403
  %v1585 = vunpack.c.h.b16 %v403
  %v1586 = vunpack.c.l.b16 %v404
  %v1587 = vunpack.c.h.b16 %v404
  %v1588 = vunpack.c.l.b16 %v405
  %v1589 = vunpack.c.h.b16 %v405
  %v1590 = vunpack.c.l.b16 %v406
  %v1591 = vunpack.c.h.b16 %v406
  %v1592 = vunpack.c.l.b16 %v407
  %v1593 = vunpack.c.h.b16 %v407
  %v1594 = vunpack.c.l.b16 %v408
  %v1595 = vunpack.c.h.b16 %v408
  %v1596 = vunpack.c.l.b16 %v409
  %v1597 = vunpack.c.h.b16 %v409
  %v1598 = vunpack.c.l.b16 %v410
  %v1599 = vunpack.c.h.b16 %v410
  %v1600 = vunpack.c.l.b16 %v411
  %v1601 = vunpack.c.h.b16 %v411
  %v1602 = vunpack.c.l.b16 %v412
  %v1603 = vunpack.c.h.b16 %v412
  %v1604 = vpack.c.b16 %v844, %v836
  %v1605 = vpack.c.b16 %v845, %v837
  %v1606 = vpack.c.b16 %v846, %v838
  %v1607 = vpack.c.b16 %v847, %v839
  %v1608 = vpack.c.b16 %v848, %v840
  %v1609 = vpack.c.b16 %v849, %v841
  %v1610 = vpack.c.b16 %v850, %v842
  %v1611 = vpack.c.b16 %v851, %v843
  %v1612 = vpack.c.b16 %v860, %v852
  %v1613 = vpack.c.b16 %v861, %v853
  %v1614 = vpack.c.b16 %v862, %v854
  %v1615 = vpack.c.b16 %v863, %v855
  %v1616 = vpack.c.b16 %v864, %v856
  %v1617 = vpack.c.b16 %v865, %v857
  %v1618 = vpack.c.b16 %v866, %v858
  %v1619 = vpack.c.b16 %v867, %v859
  %v1620 = vpack.c.b16 %v876, %v868
  %v1621 = vpack.c.b16 %v877, %v869
  %v1622 = vpack.c.b16 %v878, %v870
  %v1623 = vpack.c.b16 %v879, %v871
  %v1624 = vpack.c.b16 %v880, %v872
  %v1625 = vpack.c.b16 %v881, %v873
  %v1626 = vpack.c.b16 %v882, %v874
  %v1627 = vpack.c.b16 %v883, %v875
  %v1628 = vpack.c.b16 %v892, %v884
  %v1629 = vpack.c.b16 %v893, %v885
  %v1630 = vpack.c.b16 %v894, %v886
  %v1631 = vpack.c.b16 %v895, %v887
  %v1632 = vpack.c.b16 %v896, %v888
  %v1633 = vpack.c.b16 %v897, %v889
  %v1634 = vpack.c.b16 %v898, %v890
  %v1635 = vpack.c.b16 %v899, %v891
  %v1636 = vpack.c.b16 %v908, %v900
  %v1637 = vpack.c.b16 %v909, %v901
  %v1638 = vpack.c.b16 %v910, %v902
  %v1639 = vpack.c.b16 %v911, %v903
  %v1640 = vpack.c.b16 %v912, %v904
  %v1641 = vpack.c.b16 %v913, %v905
  %v1642 = vpack.c.b16 %v914, %v906
  %v1643 = vpack.c.b16 %v915, %v907
  %v1644 = vpack.c.b16 %v924, %v916
  %v1645 = vpack.c.b16 %v925, %v917
  %v1646 = vpack.c.b16 %v926, %v918
  %v1647 = vpack.c.b16 %v927, %v919
  %v1648 = vpack.c.b16 %v928, %v920
  %v1649 = vpack.c.b16 %v929, %v921
  %v1650 = vpack.c.b16 %v930, %v922
  %v1651 = vpack.c.b16 %v931, %v923
  %v1652 = vpack.c.b16 %v940, %v932
  %v1653 = vpack.c.b16 %v941, %v933
  %v1654 = vpack.c.b16 %v942, %v934
  %v1655 = vpack.c.b16 %v943, %v935
  %v1656 = vpack.c.b16 %v944, %v936
  %v1657 = vpack.c.b16 %v945, %v937
  %v1658 = vpack.c.b16 %v946, %v938
  %v1659 = vpack.c.b16 %v947, %v939
  %v1660 = vpack.c.b16 %v956, %v948
  %v1661 = vpack.c.b16 %v957, %v949
  %v1662 = vpack.c.b16 %v958, %v950
  %v1663 = vpack.c.b16 %v959, %v951
  %v1664 = vpack.c.b16 %v960, %v952
  %v1665 = vpack.c.b16 %v961, %v953
  %v1666 = vpack.c.b16 %v962, %v954
  %v1667 = vpack.c.b16 %v963, %v955
  %v1668 = vpack.c.b16 %v972, %v964
  %v1669 = vpack.c.b16 %v973, %v965
  %v1670 = vpack.c.b16 %v974, %v966
  %v1671 = vpack.c.b16 %v975, %v967
  %v1672 = vpack.c.b16 %v976, %v968
  %v1673 = vpack.c.b16 %v977, %v969
  %v1674 = vpack.c.b16 %v978, %v970
  %v1675 = vpack.c.b16 %v979, %v971
  %v1676 = vpack.c.b16 %v988, %v980
  %v1677 = vpack.c.b16 %v989, %v981
  %v1678 = vpack.c.b16 %v990, %v982
  %v1679 = vpack.c.b16 %v991, %v983
  %v1680 = vpack.c.b16 %v992, %v984
  %v1681 = vpack.c.b16 %v993, %v985
  %v1682 = vpack.c.b16 %v994, %v986
  %v1683 = vpack.c.b16 %v995, %v987
  %v1684 = vpack.c.b16 %v1004, %v996
  %v1685 = vpack.c.b16 %v1005, %v997
  %v1686 = vpack.c.b16 %v1006, %v998
  %v1687 = vpack.c.b16 %v1007, %v999
  %v1688 = vpack.c.b16 %v1008, %v1000
  %v1689 = vpack.c.b16 %v1009, %v1001
  %v1690 = vpack.c.b16 %v1010, %v1002
  %v1691 = vpack.c.b16 %v1011, %v1003
  %v1692 = vpack.c.b16 %v1020, %v1012
  %v1693 = vpack.c.b16 %v1021, %v1013
  %v1694 = vpack.c.b16 %v1022, %v1014
  %v1695 = vpack.c.b16 %v1023, %v1015
  %v1696 = vpack.c.b16 %v1024, %v1016
  %v1697 = vpack.c.b16 %v1025, %v1017
  %v1698 = vpack.c.b16 %v1026, %v1018
  %v1699 = vpack.c.b16 %v1027, %v1019
  %v1700 = vpack.c.b16 %v1036, %v1028
  %v1701 = vpack.c.b16 %v1037, %v1029
  %v1702 = vpack.c.b16 %v1038, %v1030
  %v1703 = vpack.c.b16 %v1039, %v1031
  %v1704 = vpack.c.b16 %v1040, %v1032
  %v1705 = vpack.c.b16 %v1041, %v1033
  %v1706 = vpack.c.b16 %v1042, %v1034
  %v1707 = vpack.c.b16 %v1043, %v1035
  %v1708 = vpack.c.b16 %v1052, %v1044
  %v1709 = vpack.c.b16 %v1053, %v1045
  %v1710 = vpack.c.b16 %v1054, %v1046
  %v1711 = vpack.c.b16 %v1055, %v1047
  %v1712 = vpack.c.b16 %v1056, %v1048
  %v1713 = vpack.c.b16 %v1057, %v1049
  %v1714 = vpack.c.b16 %v1058, %v1050
  %v1715 = vpack.c.b16 %v1059, %v1051
  %v1716 = vpack.c.b16 %v1068, %v1060
  %v1717 = vpack.c.b16 %v1069, %v1061
  %v1718 = vpack.c.b16 %v1070, %v1062
  %v1719 = vpack.c.b16 %v1071, %v1063
  %v1720 = vpack.c.b16 %v1072, %v1064
  %v1721 = vpack.c.b16 %v1073, %v1065
  %v1722 = vpack.c.b16 %v1074, %v1066
  %v1723 = vpack.c.b16 %v1075, %v1067
  %v1724 = vpack.c.b16 %v1084, %v1076
  %v1725 = vpack.c.b16 %v1085, %v1077
  %v1726 = vpack.c.b16 %v1086, %v1078
  %v1727 = vpack.c.b16 %v1087, %v1079
  %v1728 = vpack.c.b16 %v1088, %v1080
  %v1729 = vpack.c.b16 %v1089, %v1081
  %v1730 = vpack.c.b16 %v1090, %v1082
  %v1731 = vpack.c.b16 %v1091, %v1083
  %v1732 = vpack.c.b16 %v1100, %v1092
  %v1733 = vpack.c.b16 %v1101, %v1093
  %v1734 = vpack.c.b16 %v1102, %v1094
  %v1735 = vpack.c.b16 %v1103, %v1095
  %v1736 = vpack.c.b16 %v1104, %v1096
  %v1737 = vpack.c.b16 %v1105, %v1097
  %v1738 = vpack.c.b16 %v1106, %v1098
  %v1739 = vpack.c.b16 %v1107, %v1099
  %v1740 = vpack.c.b16 %v1116, %v1108
  %v1741 = vpack.c.b16 %v1117, %v1109
  %v1742 = vpack.c.b16 %v1118, %v1110
  %v1743 = vpack.c.b16 %v1119, %v1111
  %v1744 = vpack.c.b16 %v1120, %v1112
  %v1745 = vpack.c.b16 %v1121, %v1113
  %v1746 = vpack.c.b16 %v1122, %v1114
  %v1747 = vpack.c.b16 %v1123, %v1115
  %v1748 = vpack.c.b16 %v1132, %v1124
  %v1749 = vpack.c.b16 %v1133, %v1125
  %v1750 = vpack.c.b16 %v1134, %v1126
  %v1751 = vpack.c.b16 %v1135, %v1127
  %v1752 = vpack.c.b16 %v1136, %v1128
  %v1753 = vpack.c.b16 %v1137, %v1129
  %v1754 = vpack.c.b16 %v1138, %v1130
  %v1755 = vpack.c.b16 %v1139, %v1131
  %v1756 = vpack.c.b16 %v1148, %v1140
  %v1757 = vpack.c.b16 %v1149, %v1141
  %v1758 = vpack.c.b16 %v1150, %v1142
  %v1759 = vpack.c.b16 %v1151, %v1143
  %v1760 = vpack.c.b16 %v1152, %v1144
  %v1761 = vpack.c.b16 %v1153, %v1145
  %v1762 = vpack.c.b16 %v1154, %v1146
  %v1763 = vpack.c.b16 %v1155, %v1147
  %v1764 = vpack.c.b16 %v1164, %v1156
  %v1765 = vpack.c.b16 %v1165, %v1157
  %v1766 = vpack.c.b16 %v1166, %v1158
  %v1767 = vpack.c.b16 %v1167, %v1159
  %v1768 = vpack.c.b16 %v1168, %v1160
  %v1769 = vpack.c.b16 %v1169, %v1161
  %v1770 = vpack.c.b16 %v1170, %v1162
  %v1771 = vpack.c.b16 %v1171, %v1163
  %v1772 = vpack.c.b16 %v1180, %v1172
  %v1773 = vpack.c.b16 %v1181, %v1173
  %v1774 = vpack.c.b16 %v1182, %v1174
  %v1775 = vpack.c.b16 %v1183, %v1175
  %v1776 = vpack.c.b16 %v1184, %v1176
  %v1777 = vpack.c.b16 %v1185, %v1177
  %v1778 = vpack.c.b16 %v1186, %v1178
  %v1779 = vpack.c.b16 %v1187, %v1179
  %v1780 = vpack.c.b16 %v1196, %v1188
  %v1781 = vpack.c.b16 %v1197, %v1189
  %v1782 = vpack.c.b16 %v1198, %v1190
  %v1783 = vpack.c.b16 %v1199, %v1191
  %v1784 = vpack.c.b16 %v1200, %v1192
  %v1785 = vpack.c.b16 %v1201, %v1193
  %v1786 = vpack.c.b16 %v1202, %v1194
  %v1787 = vpack.c.b16 %v1203, %v1195
  %v1788 = vpack.c.b16 %v1212, %v1204
  %v1789 = vpack.c.b16 %v1213, %v1205
  %v1790 = vpack.c.b16 %v1214, %v1206
  %v1791 = vpack.c.b16 %v1215, %v1207
  %v1792 = vpack.c.b16 %v1216, %v1208
  %v1793 = vpack.c.b16 %v1217, %v1209
  %v1794 = vpack.c.b16 %v1218, %v1210
  %v1795 = vpack.c.b16 %v1219, %v1211
  %v1796 = vpack.c.b16 %v1228, %v1220
  %v1797 = vpack.c.b16 %v1229, %v1221
  %v1798 = vpack.c.b16 %v1230, %v1222
  %v1799 = vpack.c.b16 %v1231, %v1223
  %v1800 = vpack.c.b16 %v1232, %v1224
  %v1801 = vpack.c.b16 %v1233, %v1225
  %v1802 = vpack.c.b16 %v1234, %v1226
  %v1803 = vpack.c.b16 %v1235, %v1227
  %v1804 = vpack.c.b16 %v1244, %v1236
  %v1805 = vpack.c.b16 %v1245, %v1237
  %v1806 = vpack.c.b16 %v1246, %v1238
  %v1807 = vpack.c.b16 %v1247, %v1239
  %v1808 = vpack.c.b16 %v1248, %v1240
  %v1809 = vpack.c.b16 %v1249, %v1241
  %v1810 = vpack.c.b16 %v1250, %v1242
  %v1811 = vpack.c.b16 %v1251, %v1243
  %v1812 = vpack.c.b16 %v1260, %v1252
  %v1813 = vpack.c.b16 %v1261, %v1253
  %v1814 = vpack.c.b16 %v1262, %v1254
  %v1815 = vpack.c.b16 %v1263, %v1255
  %v1816 = vpack.c.b16 %v1264, %v1256
  %v1817 = vpack.c.b16 %v1265, %v1257
  %v1818 = vpack.c.b16 %v1266, %v1258
  %v1819 = vpack.c.b16 %v1267, %v1259
  %v1820 = vpack.c.b16 %v1276, %v1268
  %v1821 = vpack.c.b16 %v1277, %v1269
  %v1822 = vpack.c.b16 %v1278, %v1270
  %v1823 = vpack.c.b16 %v1279, %v1271
  %v1824 = vpack.c.b16 %v1280, %v1272
  %v1825 = vpack.c.b16 %v1281, %v1273
  %v1826 = vpack.c.b16 %v1282, %v1274
  %v1827 = vpack.c.b16 %v1283, %v1275
  %v1828 = vpack.c.b16 %v1292, %v1284
  %v1829 = vpack.c.b16 %v1293, %v1285
  %v1830 = vpack.c.b16 %v1294, %v1286
  %v1831 = vpack.c.b16 %v1295, %v1287
  %v1832 = vpack.c.b16 %v1296, %v1288
  %v1833 = vpack.c.b16 %v1297, %v1289
  %v1834 = vpack.c.b16 %v1298, %v1290
  %v1835 = vpack.c.b16 %v1299, %v1291
  %v1836 = vpack.c.b16 %v1308, %v1300
  %v1837 = vpack.c.b16 %v1309, %v1301
  %v1838 = vpack.c.b16 %v1310, %v1302
  %v1839 = vpack.c.b16 %v1311, %v1303
  %v1840 = vpack.c.b16 %v1312, %v1304
  %v1841 = vpack.c.b16 %v1313, %v1305
  %v1842 = vpack.c.b16 %v1314, %v1306
  %v1843 = vpack.c.b16 %v1315, %v1307
  %v1844 = vpack.c.b16 %v1324, %v1316
  %v1845 = vpack.c.b16 %v1325, %v1317
  %v1846 = vpack.c.b16 %v1326, %v1318
  %v1847 = vpack.c.b16 %v1327, %v1319
  %v1848 = vpack.c.b16 %v1328, %v1320
  %v1849 = vpack.c.b16 %v1329, %v1321
  %v1850 = vpack.c.b16 %v1330, %v1322
  %v1851 = vpack.c.b16 %v1331, %v1323
  %v1852 = vpack.c.b16 %v1340, %v1332
  %v1853 = vpack.c.b16 %v1341, %v1333
  %v1854 = vpack.c.b16 %v1342, %v1334
  %v1855 = vpack.c.b16 %v1343, %v1335
  %v1856 = vpack.c.b16 %v1344, %v1336
  %v1857 = vpack.c.b16 %v1345, %v1337
  %v1858 = vpack.c.b16 %v1346, %v1338
  %v1859 = vpack.c.b16 %v1347, %v1339
  %v1860 = vpack.c.b16 %v1356, %v1348
  %v1861 = vpack.c.b16 %v1357, %v1349
  %v1862 = vpack.c.b16 %v1358, %v1350
  %v1863 = vpack.c.b16 %v1359, %v1351
  %v1864 = vpack.c.b16 %v1360, %v1352
  %v1865 = vpack.c.b16 %v1361, %v1353
  %v1866 = vpack.c.b16 %v1362, %v1354
  %v1867 = vpack.c.b16 %v1363, %v1355
  %v1868 = vpack.c.b16 %v1372, %v1364
  %v1869 = vpack.c.b16 %v1373, %v1365
  %v1870 = vpack.c.b16 %v1374, %v1366
  %v1871 = vpack.c.b16 %v1375, %v1367
  %v1872 = vpack.c.b16 %v1376, %v1368
  %v1873 = vpack.c.b16 %v1377, %v1369
  %v1874 = vpack.c.b16 %v1378, %v1370
  %v1875 = vpack.c.b16 %v1379, %v1371
  %v1876 = vpack.c.b16 %v1388, %v1380
  %v1877 = vpack.c.b16 %v1389, %v1381
  %v1878 = vpack.c.b16 %v1390, %v1382
  %v1879 = vpack.c.b16 %v1391, %v1383
  %v1880 = vpack.c.b16 %v1392, %v1384
  %v1881 = vpack.c.b16 %v1393, %v1385
  %v1882 = vpack.c.b16 %v1394, %v1386
  %v1883 = vpack.c.b16 %v1395, %v1387
  %v1884 = vpack.c.b16 %v1404, %v1396
  %v1885 = vpack.c.b16 %v1405, %v1397
  %v1886 = vpack.c.b16 %v1406, %v1398
  %v1887 = vpack.c.b16 %v1407, %v1399
  %v1888 = vpack.c.b16 %v1408, %v1400
  %v1889 = vpack.c.b16 %v1409, %v1401
  %v1890 = vpack.c.b16 %v1410, %v1402
  %v1891 = vpack.c.b16 %v1411, %v1403
  %v1892 = vpack.c.b16 %v1420, %v1412
  %v1893 = vpack.c.b16 %v1421, %v1413
  %v1894 = vpack.c.b16 %v1422, %v1414
  %v1895 = vpack.c.b16 %v1423, %v1415
  %v1896 = vpack.c.b16 %v1424, %v1416
  %v1897 = vpack.c.b16 %v1425, %v1417
  %v1898 = vpack.c.b16 %v1426, %v1418
  %v1899 = vpack.c.b16 %v1427, %v1419
  %v1900 = vpack.c.b16 %v1436, %v1428
  %v1901 = vpack.c.b16 %v1437, %v1429
  %v1902 = vpack.c.b16 %v1438, %v1430
  %v1903 = vpack.c.b16 %v1439, %v1431
  %v1904 = vpack.c.b16 %v1440, %v1432
  %v1905 = vpack.c.b16 %v1441, %v1433
  %v1906 = vpack.c.b16 %v1442, %v1434
  %v1907 = vpack.c.b16 %v1443, %v1435
  %v1908 = vpack.c.b16 %v1452, %v1444
  %v1909 = vpack.c.b16 %v1453, %v1445
  %v1910 = vpack.c.b16 %v1454, %v1446
  %v1911 = vpack.c.b16 %v1455, %v1447
  %v1912 = vpack.c.b16 %v1456, %v1448
  %v1913 = vpack.c.b16 %v1457, %v1449
  %v1914 = vpack.c.b16 %v1458, %v1450
  %v1915 = vpack.c.b16 %v1459, %v1451
  %v1916 = vpack.c.b16 %v1468, %v1460
  %v1917 = vpack.c.b16 %v1469, %v1461
  %v1918 = vpack.c.b16 %v1470, %v1462
  %v1919 = vpack.c.b16 %v1471, %v1463
  %v1920 = vpack.c.b16 %v1472, %v1464
  %v1921 = vpack.c.b16 %v1473, %v1465
  %v1922 = vpack.c.b16 %v1474, %v1466
  %v1923 = vpack.c.b16 %v1475, %v1467
  %v1924 = vpack.c.b16 %v1484, %v1476
  %v1925 = vpack.c.b16 %v1485, %v1477
  %v1926 = vpack.c.b16 %v1486, %v1478
  %v1927 = vpack.c.b16 %v1487, %v1479
  %v1928 = vpack.c.b16 %v1488, %v1480
  %v1929 = vpack.c.b16 %v1489, %v1481
  %v1930 = vpack.c.b16 %v1490, %v1482
  %v1931 = vpack.c.b16 %v1491, %v1483
  %v1932 = vpack.c.b16 %v1500, %v1492
  %v1933 = vpack.c.b16 %v1501, %v1493
  %v1934 = vpack.c.b16 %v1502, %v1494
  %v1935 = vpack.c.b16 %v1503, %v1495
  %v1936 = vpack.c.b16 %v1504, %v1496
  %v1937 = vpack.c.b16 %v1505, %v1497
  %v1938 = vpack.c.b16 %v1506, %v1498
  %v1939 = vpack.c.b16 %v1507, %v1499
  %v1940 = vpack.c.b16 %v1516, %v1508
  %v1941 = vpack.c.b16 %v1517, %v1509
  %v1942 = vpack.c.b16 %v1518, %v1510
  %v1943 = vpack.c.b16 %v1519, %v1511
  %v1944 = vpack.c.b16 %v1520, %v1512
  %v1945 = vpack.c.b16 %v1521, %v1513
  %v1946 = vpack.c.b16 %v1522, %v1514
  %v1947 = vpack.c.b16 %v1523, %v1515
  %v1948 = vpack.c.b16 %v1532, %v1524
  %v1949 = vpack.c.b16 %v1533, %v1525
  %v1950 = vpack.c.b16 %v1534, %v1526
  %v1951 = vpack.c.b16 %v1535, %v1527
  %v1952 = vpack.c.b16 %v1536, %v1528
  %v1953 = vpack.c.b16 %v1537, %v1529
  %v1954 = vpack.c.b16 %v1538, %v1530
  %v1955 = vpack.c.b16 %v1539, %v1531
  %v1956 = vpack.c.b16 %v1548, %v1540
  %v1957 = vpack.c.b16 %v1549, %v1541
  %v1958 = vpack.c.b16 %v1550, %v1542
  %v1959 = vpack.c.b16 %v1551, %v1543
  %v1960 = vpack.c.b16 %v1552, %v1544
  %v1961 = vpack.c.b16 %v1553, %v1545
  %v1962 = vpack.c.b16 %v1554, %v1546
  %v1963 = vpack.c.b16 %v1555, %v1547
  %v1964 = vpack.c.b16 %v1564, %v1556
  %v1965 = vpack.c.b16 %v1565, %v1557
  %v1966 = vpack.c.b16 %v1566, %v1558
  %v1967 = vpack.c.b16 %v1567, %v1559
  %v1968 = vpack.c.b16 %v1568, %v1560
  %v1969 = vpack.c.b16 %v1569, %v1561
  %v1970 = vpack.c.b16 %v1570, %v1562
  %v1971 = vpack.c.b16 %v1571, %v1563
  %v1972 = vpack.c.b16 %v1580, %v1572
  %v1973 = vpack.c.b16 %v1581, %v1573
  %v1974 = vpack.c.b16 %v1582, %v1574
  %v1975 = vpack.c.b16 %v1583, %v1575
  %v1976 = vpack.c.b16 %v1584, %v1576
  %v1977 = vpack.c.b16 %v1585, %v1577
  %v1978 = vpack.c.b16 %v1586, %v1578
  %v1979 = vpack.c.b16 %v1587, %v1579
  %v1980 = vpack.c.b16 %v1596, %v1588
  %v1981 = vpack.c.b16 %v1597, %v1589
  %v1982 = vpack.c.b16 %v1598, %v1590
  %v1983 = vpack.c.b16 %v1599, %v1591
  %v1984 = vpack.c.b16 %v1600, %v1592
  %v1985 = vpack.c.b16 %v1601, %v1593
  %v1986 = vpack.c.b16 %v1602, %v1594
  %v1987 = vpack.c.b16 %v1603, %v1595
  %2372 = vmatpush.bf16.msra.mxu0 %v1660
  %2373 = vmatpush.bf16.msra.mxu0 %v1652
  %2374 = vmatpush.bf16.msra.mxu0 %v1644
  %2375 = vmatpush.bf16.msra.mxu0 %v1636
  %2376 = vmatpush.bf16.msra.mxu0 %v1628
  %2377 = vmatpush.bf16.msra.mxu0 %v1620
  %2378 = vmatpush.bf16.msra.mxu0 %v1612
  %2379 = vmatpush.bf16.msra.mxu0 %v1604
  %2380 = vmatmul.bf16.gmra.mxu0 %v440
  %v2381 = vpop.f32.mrf.mxu0
  %v2382 = vadd.f32 %v415, %v2381
  %v2383 = vpop.f32.mrf.mxu0
  %2384 = vdwg.mxu0
  %2385 = vmatpush.bf16.msra.mxu0 %v1724
  %2386 = vmatpush.bf16.msra.mxu0 %v1716
  %2387 = vmatpush.bf16.msra.mxu0 %v1708
  %2388 = vmatpush.bf16.msra.mxu0 %v1700
  %2389 = vmatpush.bf16.msra.mxu0 %v1692
  %2390 = vmatpush.bf16.msra.mxu0 %v1684
  %2391 = vmatpush.bf16.msra.mxu0 %v1676
  %2392 = vmatpush.bf16.msra.mxu0 %v1668
  %2393 = vmatmul.bf16.gmra.mxu0 %v441
  %v2394 = vpop.f32.mrf.mxu0
  %v2395 = vadd.f32 %v2382, %v2394
  %v2396 = vpop.f32.mrf.mxu0
  %2397 = vdwg.mxu0
  %2398 = vmatpush.bf16.msra.mxu0 %v1788
  %2399 = vmatpush.bf16.msra.mxu0 %v1780
  %2400 = vmatpush.bf16.msra.mxu0 %v1772
  %2401 = vmatpush.bf16.msra.mxu0 %v1764
  %2402 = vmatpush.bf16.msra.mxu0 %v1756
  %2403 = vmatpush.bf16.msra.mxu0 %v1748
  %2404 = vmatpush.bf16.msra.mxu0 %v1740
  %2405 = vmatpush.bf16.msra.mxu0 %v1732
  %2406 = vmatmul.bf16.gmra.mxu0 %v442
  %v2407 = vpop.f32.mrf.mxu0
  %v2408 = vadd.f32 %v2395, %v2407
  %v2409 = vpop.f32.mrf.mxu0
  %2410 = vdwg.mxu0
  %2411 = vmatpush.bf16.msra.mxu0 %v1852
  %2412 = vmatpush.bf16.msra.mxu0 %v1844
  %2413 = vmatpush.bf16.msra.mxu0 %v1836
  %2414 = vmatpush.bf16.msra.mxu0 %v1828
  %2415 = vmatpush.bf16.msra.mxu0 %v1820
  %2416 = vmatpush.bf16.msra.mxu0 %v1812
  %2417 = vmatpush.bf16.msra.mxu0 %v1804
  %2418 = vmatpush.bf16.msra.mxu0 %v1796
  %2419 = vmatmul.bf16.gmra.mxu0 %v443
  %v2420 = vpop.f32.mrf.mxu0
  %v2421 = vadd.f32 %v2408, %v2420
  %v2422 = vpop.f32.mrf.mxu0
  %2423 = vdwg.mxu0
  %2424 = vmatpush.bf16.msra.mxu0 %v1916
  %2425 = vmatpush.bf16.msra.mxu0 %v1908
  %2426 = vmatpush.bf16.msra.mxu0 %v1900
  %2427 = vmatpush.bf16.msra.mxu0 %v1892
  %2428 = vmatpush.bf16.msra.mxu0 %v1884
  %2429 = vmatpush.bf16.msra.mxu0 %v1876
  %2430 = vmatpush.bf16.msra.mxu0 %v1868
  %2431 = vmatpush.bf16.msra.mxu0 %v1860
  %2432 = vmatmul.bf16.gmra.mxu0 %v444
  %v2433 = vpop.f32.mrf.mxu0
  %v2434 = vadd.f32 %v2421, %v2433
  %v2435 = vpop.f32.mrf.mxu0
  %2436 = vdwg.mxu0
  %2437 = vmatpush.bf16.msra.mxu0 %v1980
  %2438 = vmatpush.bf16.msra.mxu0 %v1972
  %2439 = vmatpush.bf16.msra.mxu0 %v1964
  %2440 = vmatpush.bf16.msra.mxu0 %v1956
  %2441 = vmatpush.bf16.msra.mxu0 %v1948
  %2442 = vmatpush.bf16.msra.mxu0 %v1940
  %2443 = vmatpush.bf16.msra.mxu0 %v1932
  %2444 = vmatpush.bf16.msra.mxu0 %v1924
  %2445 = vmatmul.bf16.gmra.mxu0 %v445
  %v2446 = vpop.f32.mrf.mxu0
  %v2447 = vadd.f32 %v2434, %v2446
  %v2448 = vpop.f32.mrf.mxu0
  %2449 = vdwg.mxu0
  %2450 = vmatpush.bf16.msra.mxu0 %v1661
  %2451 = vmatpush.bf16.msra.mxu0 %v1653
  %2452 = vmatpush.bf16.msra.mxu0 %v1645
  %2453 = vmatpush.bf16.msra.mxu0 %v1637
  %2454 = vmatpush.bf16.msra.mxu0 %v1629
  %2455 = vmatpush.bf16.msra.mxu0 %v1621
  %2456 = vmatpush.bf16.msra.mxu0 %v1613
  %2457 = vmatpush.bf16.msra.mxu0 %v1605
  %2458 = vmatmul.bf16.gmra.mxu0 %v440
  %v2459 = vpop.f32.mrf.mxu0
  %v2460 = vadd.f32 %v416, %v2459
  %v2461 = vpop.f32.mrf.mxu0
  %2462 = vdwg.mxu0
  %2463 = vmatpush.bf16.msra.mxu0 %v1725
  %2464 = vmatpush.bf16.msra.mxu0 %v1717
  %2465 = vmatpush.bf16.msra.mxu0 %v1709
  %2466 = vmatpush.bf16.msra.mxu0 %v1701
  %2467 = vmatpush.bf16.msra.mxu0 %v1693
  %2468 = vmatpush.bf16.msra.mxu0 %v1685
  %2469 = vmatpush.bf16.msra.mxu0 %v1677
  %2470 = vmatpush.bf16.msra.mxu0 %v1669
  %2471 = vmatmul.bf16.gmra.mxu0 %v441
  %v2472 = vpop.f32.mrf.mxu0
  %v2473 = vadd.f32 %v2460, %v2472
  %v2474 = vpop.f32.mrf.mxu0
  %2475 = vdwg.mxu0
  %2476 = vmatpush.bf16.msra.mxu0 %v1789
  %2477 = vmatpush.bf16.msra.mxu0 %v1781
  %2478 = vmatpush.bf16.msra.mxu0 %v1773
  %2479 = vmatpush.bf16.msra.mxu0 %v1765
  %2480 = vmatpush.bf16.msra.mxu0 %v1757
  %2481 = vmatpush.bf16.msra.mxu0 %v1749
  %2482 = vmatpush.bf16.msra.mxu0 %v1741
  %2483 = vmatpush.bf16.msra.mxu0 %v1733
  %2484 = vmatmul.bf16.gmra.mxu0 %v442
  %v2485 = vpop.f32.mrf.mxu0
  %v2486 = vadd.f32 %v2473, %v2485
  %v2487 = vpop.f32.mrf.mxu0
  %2488 = vdwg.mxu0
  %2489 = vmatpush.bf16.msra.mxu0 %v1853
  %2490 = vmatpush.bf16.msra.mxu0 %v1845
  %2491 = vmatpush.bf16.msra.mxu0 %v1837
  %2492 = vmatpush.bf16.msra.mxu0 %v1829
  %2493 = vmatpush.bf16.msra.mxu0 %v1821
  %2494 = vmatpush.bf16.msra.mxu0 %v1813
  %2495 = vmatpush.bf16.msra.mxu0 %v1805
  %2496 = vmatpush.bf16.msra.mxu0 %v1797
  %2497 = vmatmul.bf16.gmra.mxu0 %v443
  %v2498 = vpop.f32.mrf.mxu0
  %v2499 = vadd.f32 %v2486, %v2498
  %v2500 = vpop.f32.mrf.mxu0
  %2501 = vdwg.mxu0
  %2502 = vmatpush.bf16.msra.mxu0 %v1917
  %2503 = vmatpush.bf16.msra.mxu0 %v1909
  %2504 = vmatpush.bf16.msra.mxu0 %v1901
  %2505 = vmatpush.bf16.msra.mxu0 %v1893
  %2506 = vmatpush.bf16.msra.mxu0 %v1885
  %2507 = vmatpush.bf16.msra.mxu0 %v1877
  %2508 = vmatpush.bf16.msra.mxu0 %v1869
  %2509 = vmatpush.bf16.msra.mxu0 %v1861
  %2510 = vmatmul.bf16.gmra.mxu0 %v444
  %v2511 = vpop.f32.mrf.mxu0
  %v2512 = vadd.f32 %v2499, %v2511
  %v2513 = vpop.f32.mrf.mxu0
  %2514 = vdwg.mxu0
  %2515 = vmatpush.bf16.msra.mxu0 %v1981
  %2516 = vmatpush.bf16.msra.mxu0 %v1973
  %2517 = vmatpush.bf16.msra.mxu0 %v1965
  %2518 = vmatpush.bf16.msra.mxu0 %v1957
  %2519 = vmatpush.bf16.msra.mxu0 %v1949
  %2520 = vmatpush.bf16.msra.mxu0 %v1941
  %2521 = vmatpush.bf16.msra.mxu0 %v1933
  %2522 = vmatpush.bf16.msra.mxu0 %v1925
  %2523 = vmatmul.bf16.gmra.mxu0 %v445
  %v2524 = vpop.f32.mrf.mxu0
  %v2525 = vadd.f32 %v2512, %v2524
  %v2526 = vpop.f32.mrf.mxu0
  %2527 = vdwg.mxu0
  %2528 = vmatpush.bf16.msra.mxu0 %v1662
  %2529 = vmatpush.bf16.msra.mxu0 %v1654
  %2530 = vmatpush.bf16.msra.mxu0 %v1646
  %2531 = vmatpush.bf16.msra.mxu0 %v1638
  %2532 = vmatpush.bf16.msra.mxu0 %v1630
  %2533 = vmatpush.bf16.msra.mxu0 %v1622
  %2534 = vmatpush.bf16.msra.mxu0 %v1614
  %2535 = vmatpush.bf16.msra.mxu0 %v1606
  %2536 = vmatmul.bf16.gmra.mxu0 %v440
  %v2537 = vpop.f32.mrf.mxu0
  %v2538 = vadd.f32 %v417, %v2537
  %v2539 = vpop.f32.mrf.mxu0
  %2540 = vdwg.mxu0
  %2541 = vmatpush.bf16.msra.mxu0 %v1726
  %2542 = vmatpush.bf16.msra.mxu0 %v1718
  %2543 = vmatpush.bf16.msra.mxu0 %v1710
  %2544 = vmatpush.bf16.msra.mxu0 %v1702
  %2545 = vmatpush.bf16.msra.mxu0 %v1694
  %2546 = vmatpush.bf16.msra.mxu0 %v1686
  %2547 = vmatpush.bf16.msra.mxu0 %v1678
  %2548 = vmatpush.bf16.msra.mxu0 %v1670
  %2549 = vmatmul.bf16.gmra.mxu0 %v441
  %v2550 = vpop.f32.mrf.mxu0
  %v2551 = vadd.f32 %v2538, %v2550
  %v2552 = vpop.f32.mrf.mxu0
  %2553 = vdwg.mxu0
  %2554 = vmatpush.bf16.msra.mxu0 %v1790
  %2555 = vmatpush.bf16.msra.mxu0 %v1782
  %2556 = vmatpush.bf16.msra.mxu0 %v1774
  %2557 = vmatpush.bf16.msra.mxu0 %v1766
  %2558 = vmatpush.bf16.msra.mxu0 %v1758
  %2559 = vmatpush.bf16.msra.mxu0 %v1750
  %2560 = vmatpush.bf16.msra.mxu0 %v1742
  %2561 = vmatpush.bf16.msra.mxu0 %v1734
  %2562 = vmatmul.bf16.gmra.mxu0 %v442
  %v2563 = vpop.f32.mrf.mxu0
  %v2564 = vadd.f32 %v2551, %v2563
  %v2565 = vpop.f32.mrf.mxu0
  %2566 = vdwg.mxu0
  %2567 = vmatpush.bf16.msra.mxu0 %v1854
  %2568 = vmatpush.bf16.msra.mxu0 %v1846
  %2569 = vmatpush.bf16.msra.mxu0 %v1838
  %2570 = vmatpush.bf16.msra.mxu0 %v1830
  %2571 = vmatpush.bf16.msra.mxu0 %v1822
  %2572 = vmatpush.bf16.msra.mxu0 %v1814
  %2573 = vmatpush.bf16.msra.mxu0 %v1806
  %2574 = vmatpush.bf16.msra.mxu0 %v1798
  %2575 = vmatmul.bf16.gmra.mxu0 %v443
  %v2576 = vpop.f32.mrf.mxu0
  %v2577 = vadd.f32 %v2564, %v2576
  %v2578 = vpop.f32.mrf.mxu0
  %2579 = vdwg.mxu0
  %2580 = vmatpush.bf16.msra.mxu0 %v1918
  %2581 = vmatpush.bf16.msra.mxu0 %v1910
  %2582 = vmatpush.bf16.msra.mxu0 %v1902
  %2583 = vmatpush.bf16.msra.mxu0 %v1894
  %2584 = vmatpush.bf16.msra.mxu0 %v1886
  %2585 = vmatpush.bf16.msra.mxu0 %v1878
  %2586 = vmatpush.bf16.msra.mxu0 %v1870
  %2587 = vmatpush.bf16.msra.mxu0 %v1862
  %2588 = vmatmul.bf16.gmra.mxu0 %v444
  %v2589 = vpop.f32.mrf.mxu0
  %v2590 = vadd.f32 %v2577, %v2589
  %v2591 = vpop.f32.mrf.mxu0
  %2592 = vdwg.mxu0
  %2593 = vmatpush.bf16.msra.mxu0 %v1982
  %2594 = vmatpush.bf16.msra.mxu0 %v1974
  %2595 = vmatpush.bf16.msra.mxu0 %v1966
  %2596 = vmatpush.bf16.msra.mxu0 %v1958
  %2597 = vmatpush.bf16.msra.mxu0 %v1950
  %2598 = vmatpush.bf16.msra.mxu0 %v1942
  %2599 = vmatpush.bf16.msra.mxu0 %v1934
  %2600 = vmatpush.bf16.msra.mxu0 %v1926
  %2601 = vmatmul.bf16.gmra.mxu0 %v445
  %v2602 = vpop.f32.mrf.mxu0
  %v2603 = vadd.f32 %v2590, %v2602
  %v2604 = vpop.f32.mrf.mxu0
  %2605 = vdwg.mxu0
  %2606 = vmatpush.bf16.msra.mxu0 %v1663
  %2607 = vmatpush.bf16.msra.mxu0 %v1655
  %2608 = vmatpush.bf16.msra.mxu0 %v1647
  %2609 = vmatpush.bf16.msra.mxu0 %v1639
  %2610 = vmatpush.bf16.msra.mxu0 %v1631
  %2611 = vmatpush.bf16.msra.mxu0 %v1623
  %2612 = vmatpush.bf16.msra.mxu0 %v1615
  %2613 = vmatpush.bf16.msra.mxu0 %v1607
  %2614 = vmatmul.bf16.gmra.mxu0 %v440
  %v2615 = vpop.f32.mrf.mxu0
  %v2616 = vadd.f32 %v418, %v2615
  %v2617 = vpop.f32.mrf.mxu0
  %2618 = vdwg.mxu0
  %2619 = vmatpush.bf16.msra.mxu0 %v1727
  %2620 = vmatpush.bf16.msra.mxu0 %v1719
  %2621 = vmatpush.bf16.msra.mxu0 %v1711
  %2622 = vmatpush.bf16.msra.mxu0 %v1703
  %2623 = vmatpush.bf16.msra.mxu0 %v1695
  %2624 = vmatpush.bf16.msra.mxu0 %v1687
  %2625 = vmatpush.bf16.msra.mxu0 %v1679
  %2626 = vmatpush.bf16.msra.mxu0 %v1671
  %2627 = vmatmul.bf16.gmra.mxu0 %v441
  %v2628 = vpop.f32.mrf.mxu0
  %v2629 = vadd.f32 %v2616, %v2628
  %v2630 = vpop.f32.mrf.mxu0
  %2631 = vdwg.mxu0
  %2632 = vmatpush.bf16.msra.mxu0 %v1791
  %2633 = vmatpush.bf16.msra.mxu0 %v1783
  %2634 = vmatpush.bf16.msra.mxu0 %v1775
  %2635 = vmatpush.bf16.msra.mxu0 %v1767
  %2636 = vmatpush.bf16.msra.mxu0 %v1759
  %2637 = vmatpush.bf16.msra.mxu0 %v1751
  %2638 = vmatpush.bf16.msra.mxu0 %v1743
  %2639 = vmatpush.bf16.msra.mxu0 %v1735
  %2640 = vmatmul.bf16.gmra.mxu0 %v442
  %v2641 = vpop.f32.mrf.mxu0
  %v2642 = vadd.f32 %v2629, %v2641
  %v2643 = vpop.f32.mrf.mxu0
  %2644 = vdwg.mxu0
  %2645 = vmatpush.bf16.msra.mxu0 %v1855
  %2646 = vmatpush.bf16.msra.mxu0 %v1847
  %2647 = vmatpush.bf16.msra.mxu0 %v1839
  %2648 = vmatpush.bf16.msra.mxu0 %v1831
  %2649 = vmatpush.bf16.msra.mxu0 %v1823
  %2650 = vmatpush.bf16.msra.mxu0 %v1815
  %2651 = vmatpush.bf16.msra.mxu0 %v1807
  %2652 = vmatpush.bf16.msra.mxu0 %v1799
  %2653 = vmatmul.bf16.gmra.mxu0 %v443
  %v2654 = vpop.f32.mrf.mxu0
  %v2655 = vadd.f32 %v2642, %v2654
  %v2656 = vpop.f32.mrf.mxu0
  %2657 = vdwg.mxu0
  %2658 = vmatpush.bf16.msra.mxu0 %v1919
  %2659 = vmatpush.bf16.msra.mxu0 %v1911
  %2660 = vmatpush.bf16.msra.mxu0 %v1903
  %2661 = vmatpush.bf16.msra.mxu0 %v1895
  %2662 = vmatpush.bf16.msra.mxu0 %v1887
  %2663 = vmatpush.bf16.msra.mxu0 %v1879
  %2664 = vmatpush.bf16.msra.mxu0 %v1871
  %2665 = vmatpush.bf16.msra.mxu0 %v1863
  %2666 = vmatmul.bf16.gmra.mxu0 %v444
  %v2667 = vpop.f32.mrf.mxu0
  %v2668 = vadd.f32 %v2655, %v2667
  %v2669 = vpop.f32.mrf.mxu0
  %2670 = vdwg.mxu0
  %2671 = vmatpush.bf16.msra.mxu0 %v1983
  %2672 = vmatpush.bf16.msra.mxu0 %v1975
  %2673 = vmatpush.bf16.msra.mxu0 %v1967
  %2674 = vmatpush.bf16.msra.mxu0 %v1959
  %2675 = vmatpush.bf16.msra.mxu0 %v1951
  %2676 = vmatpush.bf16.msra.mxu0 %v1943
  %2677 = vmatpush.bf16.msra.mxu0 %v1935
  %2678 = vmatpush.bf16.msra.mxu0 %v1927
  %2679 = vmatmul.bf16.gmra.mxu0 %v445
  %v2680 = vpop.f32.mrf.mxu0
  %v2681 = vadd.f32 %v2668, %v2680
  %v2682 = vpop.f32.mrf.mxu0
  %2683 = vdwg.mxu0
  %2684 = vmatpush.bf16.msra.mxu0 %v1664
  %2685 = vmatpush.bf16.msra.mxu0 %v1656
  %2686 = vmatpush.bf16.msra.mxu0 %v1648
  %2687 = vmatpush.bf16.msra.mxu0 %v1640
  %2688 = vmatpush.bf16.msra.mxu0 %v1632
  %2689 = vmatpush.bf16.msra.mxu0 %v1624
  %2690 = vmatpush.bf16.msra.mxu0 %v1616
  %2691 = vmatpush.bf16.msra.mxu0 %v1608
  %2692 = vmatmul.bf16.gmra.mxu0 %v440
  %v2693 = vpop.f32.mrf.mxu0
  %v2694 = vadd.f32 %v419, %v2693
  %v2695 = vpop.f32.mrf.mxu0
  %2696 = vdwg.mxu0
  %2697 = vmatpush.bf16.msra.mxu0 %v1728
  %2698 = vmatpush.bf16.msra.mxu0 %v1720
  %2699 = vmatpush.bf16.msra.mxu0 %v1712
  %2700 = vmatpush.bf16.msra.mxu0 %v1704
  %2701 = vmatpush.bf16.msra.mxu0 %v1696
  %2702 = vmatpush.bf16.msra.mxu0 %v1688
  %2703 = vmatpush.bf16.msra.mxu0 %v1680
  %2704 = vmatpush.bf16.msra.mxu0 %v1672
  %2705 = vmatmul.bf16.gmra.mxu0 %v441
  %v2706 = vpop.f32.mrf.mxu0
  %v2707 = vadd.f32 %v2694, %v2706
  %v2708 = vpop.f32.mrf.mxu0
  %2709 = vdwg.mxu0
  %2710 = vmatpush.bf16.msra.mxu0 %v1792
  %2711 = vmatpush.bf16.msra.mxu0 %v1784
  %2712 = vmatpush.bf16.msra.mxu0 %v1776
  %2713 = vmatpush.bf16.msra.mxu0 %v1768
  %2714 = vmatpush.bf16.msra.mxu0 %v1760
  %2715 = vmatpush.bf16.msra.mxu0 %v1752
  %2716 = vmatpush.bf16.msra.mxu0 %v1744
  %2717 = vmatpush.bf16.msra.mxu0 %v1736
  %2718 = vmatmul.bf16.gmra.mxu0 %v442
  %v2719 = vpop.f32.mrf.mxu0
  %v2720 = vadd.f32 %v2707, %v2719
  %v2721 = vpop.f32.mrf.mxu0
  %2722 = vdwg.mxu0
  %2723 = vmatpush.bf16.msra.mxu0 %v1856
  %2724 = vmatpush.bf16.msra.mxu0 %v1848
  %2725 = vmatpush.bf16.msra.mxu0 %v1840
  %2726 = vmatpush.bf16.msra.mxu0 %v1832
  %2727 = vmatpush.bf16.msra.mxu0 %v1824
  %2728 = vmatpush.bf16.msra.mxu0 %v1816
  %2729 = vmatpush.bf16.msra.mxu0 %v1808
  %2730 = vmatpush.bf16.msra.mxu0 %v1800
  %2731 = vmatmul.bf16.gmra.mxu0 %v443
  %v2732 = vpop.f32.mrf.mxu0
  %v2733 = vadd.f32 %v2720, %v2732
  %v2734 = vpop.f32.mrf.mxu0
  %2735 = vdwg.mxu0
  %2736 = vmatpush.bf16.msra.mxu0 %v1920
  %2737 = vmatpush.bf16.msra.mxu0 %v1912
  %2738 = vmatpush.bf16.msra.mxu0 %v1904
  %2739 = vmatpush.bf16.msra.mxu0 %v1896
  %2740 = vmatpush.bf16.msra.mxu0 %v1888
  %2741 = vmatpush.bf16.msra.mxu0 %v1880
  %2742 = vmatpush.bf16.msra.mxu0 %v1872
  %2743 = vmatpush.bf16.msra.mxu0 %v1864
  %2744 = vmatmul.bf16.gmra.mxu0 %v444
  %v2745 = vpop.f32.mrf.mxu0
  %v2746 = vadd.f32 %v2733, %v2745
  %v2747 = vpop.f32.mrf.mxu0
  %2748 = vdwg.mxu0
  %2749 = vmatpush.bf16.msra.mxu0 %v1984
  %2750 = vmatpush.bf16.msra.mxu0 %v1976
  %2751 = vmatpush.bf16.msra.mxu0 %v1968
  %2752 = vmatpush.bf16.msra.mxu0 %v1960
  %2753 = vmatpush.bf16.msra.mxu0 %v1952
  %2754 = vmatpush.bf16.msra.mxu0 %v1944
  %2755 = vmatpush.bf16.msra.mxu0 %v1936
  %2756 = vmatpush.bf16.msra.mxu0 %v1928
  %2757 = vmatmul.bf16.gmra.mxu0 %v445
  %v2758 = vpop.f32.mrf.mxu0
  %v2759 = vadd.f32 %v2746, %v2758
  %v2760 = vpop.f32.mrf.mxu0
  %2761 = vdwg.mxu0
  %2762 = vmatpush.bf16.msra.mxu0 %v1665
  %2763 = vmatpush.bf16.msra.mxu0 %v1657
  %2764 = vmatpush.bf16.msra.mxu0 %v1649
  %2765 = vmatpush.bf16.msra.mxu0 %v1641
  %2766 = vmatpush.bf16.msra.mxu0 %v1633
  %2767 = vmatpush.bf16.msra.mxu0 %v1625
  %2768 = vmatpush.bf16.msra.mxu0 %v1617
  %2769 = vmatpush.bf16.msra.mxu0 %v1609
  %2770 = vmatmul.bf16.gmra.mxu0 %v440
  %v2771 = vpop.f32.mrf.mxu0
  %v2772 = vadd.f32 %v420, %v2771
  %v2773 = vpop.f32.mrf.mxu0
  %2774 = vdwg.mxu0
  %2775 = vmatpush.bf16.msra.mxu0 %v1729
  %2776 = vmatpush.bf16.msra.mxu0 %v1721
  %2777 = vmatpush.bf16.msra.mxu0 %v1713
  %2778 = vmatpush.bf16.msra.mxu0 %v1705
  %2779 = vmatpush.bf16.msra.mxu0 %v1697
  %2780 = vmatpush.bf16.msra.mxu0 %v1689
  %2781 = vmatpush.bf16.msra.mxu0 %v1681
  %2782 = vmatpush.bf16.msra.mxu0 %v1673
  %2783 = vmatmul.bf16.gmra.mxu0 %v441
  %v2784 = vpop.f32.mrf.mxu0
  %v2785 = vadd.f32 %v2772, %v2784
  %v2786 = vpop.f32.mrf.mxu0
  %2787 = vdwg.mxu0
  %2788 = vmatpush.bf16.msra.mxu0 %v1793
  %2789 = vmatpush.bf16.msra.mxu0 %v1785
  %2790 = vmatpush.bf16.msra.mxu0 %v1777
  %2791 = vmatpush.bf16.msra.mxu0 %v1769
  %2792 = vmatpush.bf16.msra.mxu0 %v1761
  %2793 = vmatpush.bf16.msra.mxu0 %v1753
  %2794 = vmatpush.bf16.msra.mxu0 %v1745
  %2795 = vmatpush.bf16.msra.mxu0 %v1737
  %2796 = vmatmul.bf16.gmra.mxu0 %v442
  %v2797 = vpop.f32.mrf.mxu0
  %v2798 = vadd.f32 %v2785, %v2797
  %v2799 = vpop.f32.mrf.mxu0
  %2800 = vdwg.mxu0
  %2801 = vmatpush.bf16.msra.mxu0 %v1857
  %2802 = vmatpush.bf16.msra.mxu0 %v1849
  %2803 = vmatpush.bf16.msra.mxu0 %v1841
  %2804 = vmatpush.bf16.msra.mxu0 %v1833
  %2805 = vmatpush.bf16.msra.mxu0 %v1825
  %2806 = vmatpush.bf16.msra.mxu0 %v1817
  %2807 = vmatpush.bf16.msra.mxu0 %v1809
  %2808 = vmatpush.bf16.msra.mxu0 %v1801
  %2809 = vmatmul.bf16.gmra.mxu0 %v443
  %v2810 = vpop.f32.mrf.mxu0
  %v2811 = vadd.f32 %v2798, %v2810
  %v2812 = vpop.f32.mrf.mxu0
  %2813 = vdwg.mxu0
  %2814 = vmatpush.bf16.msra.mxu0 %v1921
  %2815 = vmatpush.bf16.msra.mxu0 %v1913
  %2816 = vmatpush.bf16.msra.mxu0 %v1905
  %2817 = vmatpush.bf16.msra.mxu0 %v1897
  %2818 = vmatpush.bf16.msra.mxu0 %v1889
  %2819 = vmatpush.bf16.msra.mxu0 %v1881
  %2820 = vmatpush.bf16.msra.mxu0 %v1873
  %2821 = vmatpush.bf16.msra.mxu0 %v1865
  %2822 = vmatmul.bf16.gmra.mxu0 %v444
  %v2823 = vpop.f32.mrf.mxu0
  %v2824 = vadd.f32 %v2811, %v2823
  %v2825 = vpop.f32.mrf.mxu0
  %2826 = vdwg.mxu0
  %2827 = vmatpush.bf16.msra.mxu0 %v1985
  %2828 = vmatpush.bf16.msra.mxu0 %v1977
  %2829 = vmatpush.bf16.msra.mxu0 %v1969
  %2830 = vmatpush.bf16.msra.mxu0 %v1961
  %2831 = vmatpush.bf16.msra.mxu0 %v1953
  %2832 = vmatpush.bf16.msra.mxu0 %v1945
  %2833 = vmatpush.bf16.msra.mxu0 %v1937
  %2834 = vmatpush.bf16.msra.mxu0 %v1929
  %2835 = vmatmul.bf16.gmra.mxu0 %v445
  %v2836 = vpop.f32.mrf.mxu0
  %v2837 = vadd.f32 %v2824, %v2836
  %v2838 = vpop.f32.mrf.mxu0
  %2839 = vdwg.mxu0
  %2840 = vmatpush.bf16.msra.mxu0 %v1666
  %2841 = vmatpush.bf16.msra.mxu0 %v1658
  %2842 = vmatpush.bf16.msra.mxu0 %v1650
  %2843 = vmatpush.bf16.msra.mxu0 %v1642
  %2844 = vmatpush.bf16.msra.mxu0 %v1634
  %2845 = vmatpush.bf16.msra.mxu0 %v1626
  %2846 = vmatpush.bf16.msra.mxu0 %v1618
  %2847 = vmatpush.bf16.msra.mxu0 %v1610
  %2848 = vmatmul.bf16.gmra.mxu0 %v440
  %v2849 = vpop.f32.mrf.mxu0
  %v2850 = vadd.f32 %v421, %v2849
  %v2851 = vpop.f32.mrf.mxu0
  %2852 = vdwg.mxu0
  %2853 = vmatpush.bf16.msra.mxu0 %v1730
  %2854 = vmatpush.bf16.msra.mxu0 %v1722
  %2855 = vmatpush.bf16.msra.mxu0 %v1714
  %2856 = vmatpush.bf16.msra.mxu0 %v1706
  %2857 = vmatpush.bf16.msra.mxu0 %v1698
  %2858 = vmatpush.bf16.msra.mxu0 %v1690
  %2859 = vmatpush.bf16.msra.mxu0 %v1682
  %2860 = vmatpush.bf16.msra.mxu0 %v1674
  %2861 = vmatmul.bf16.gmra.mxu0 %v441
  %v2862 = vpop.f32.mrf.mxu0
  %v2863 = vadd.f32 %v2850, %v2862
  %v2864 = vpop.f32.mrf.mxu0
  %2865 = vdwg.mxu0
  %2866 = vmatpush.bf16.msra.mxu0 %v1794
  %2867 = vmatpush.bf16.msra.mxu0 %v1786
  %2868 = vmatpush.bf16.msra.mxu0 %v1778
  %2869 = vmatpush.bf16.msra.mxu0 %v1770
  %2870 = vmatpush.bf16.msra.mxu0 %v1762
  %2871 = vmatpush.bf16.msra.mxu0 %v1754
  %2872 = vmatpush.bf16.msra.mxu0 %v1746
  %2873 = vmatpush.bf16.msra.mxu0 %v1738
  %2874 = vmatmul.bf16.gmra.mxu0 %v442
  %v2875 = vpop.f32.mrf.mxu0
  %v2876 = vadd.f32 %v2863, %v2875
  %v2877 = vpop.f32.mrf.mxu0
  %2878 = vdwg.mxu0
  %2879 = vmatpush.bf16.msra.mxu0 %v1858
  %2880 = vmatpush.bf16.msra.mxu0 %v1850
  %2881 = vmatpush.bf16.msra.mxu0 %v1842
  %2882 = vmatpush.bf16.msra.mxu0 %v1834
  %2883 = vmatpush.bf16.msra.mxu0 %v1826
  %2884 = vmatpush.bf16.msra.mxu0 %v1818
  %2885 = vmatpush.bf16.msra.mxu0 %v1810
  %2886 = vmatpush.bf16.msra.mxu0 %v1802
  %2887 = vmatmul.bf16.gmra.mxu0 %v443
  %v2888 = vpop.f32.mrf.mxu0
  %v2889 = vadd.f32 %v2876, %v2888
  %v2890 = vpop.f32.mrf.mxu0
  %2891 = vdwg.mxu0
  %2892 = vmatpush.bf16.msra.mxu0 %v1922
  %2893 = vmatpush.bf16.msra.mxu0 %v1914
  %2894 = vmatpush.bf16.msra.mxu0 %v1906
  %2895 = vmatpush.bf16.msra.mxu0 %v1898
  %2896 = vmatpush.bf16.msra.mxu0 %v1890
  %2897 = vmatpush.bf16.msra.mxu0 %v1882
  %2898 = vmatpush.bf16.msra.mxu0 %v1874
  %2899 = vmatpush.bf16.msra.mxu0 %v1866
  %2900 = vmatmul.bf16.gmra.mxu0 %v444
  %v2901 = vpop.f32.mrf.mxu0
  %v2902 = vadd.f32 %v2889, %v2901
  %v2903 = vpop.f32.mrf.mxu0
  %2904 = vdwg.mxu0
  %2905 = vmatpush.bf16.msra.mxu0 %v1986
  %2906 = vmatpush.bf16.msra.mxu0 %v1978
  %2907 = vmatpush.bf16.msra.mxu0 %v1970
  %2908 = vmatpush.bf16.msra.mxu0 %v1962
  %2909 = vmatpush.bf16.msra.mxu0 %v1954
  %2910 = vmatpush.bf16.msra.mxu0 %v1946
  %2911 = vmatpush.bf16.msra.mxu0 %v1938
  %2912 = vmatpush.bf16.msra.mxu0 %v1930
  %2913 = vmatmul.bf16.gmra.mxu0 %v445
  %v2914 = vpop.f32.mrf.mxu0
  %v2915 = vadd.f32 %v2902, %v2914
  %v2916 = vpop.f32.mrf.mxu0
  %2917 = vdwg.mxu0
  %2918 = vmatpush.bf16.msra.mxu0 %v1667
  %2919 = vmatpush.bf16.msra.mxu0 %v1659
  %2920 = vmatpush.bf16.msra.mxu0 %v1651
  %2921 = vmatpush.bf16.msra.mxu0 %v1643
  %2922 = vmatpush.bf16.msra.mxu0 %v1635
  %2923 = vmatpush.bf16.msra.mxu0 %v1627
  %2924 = vmatpush.bf16.msra.mxu0 %v1619
  %2925 = vmatpush.bf16.msra.mxu0 %v1611
  %2926 = vmatmul.bf16.gmra.mxu0 %v440
  %v2927 = vpop.f32.mrf.mxu0
  %v2928 = vadd.f32 %v422, %v2927
  %v2929 = vpop.f32.mrf.mxu0
  %2930 = vdwg.mxu0
  %2931 = vmatpush.bf16.msra.mxu0 %v1731
  %2932 = vmatpush.bf16.msra.mxu0 %v1723
  %2933 = vmatpush.bf16.msra.mxu0 %v1715
  %2934 = vmatpush.bf16.msra.mxu0 %v1707
  %2935 = vmatpush.bf16.msra.mxu0 %v1699
  %2936 = vmatpush.bf16.msra.mxu0 %v1691
  %2937 = vmatpush.bf16.msra.mxu0 %v1683
  %2938 = vmatpush.bf16.msra.mxu0 %v1675
  %2939 = vmatmul.bf16.gmra.mxu0 %v441
  %v2940 = vpop.f32.mrf.mxu0
  %v2941 = vadd.f32 %v2928, %v2940
  %v2942 = vpop.f32.mrf.mxu0
  %2943 = vdwg.mxu0
  %2944 = vmatpush.bf16.msra.mxu0 %v1795
  %2945 = vmatpush.bf16.msra.mxu0 %v1787
  %2946 = vmatpush.bf16.msra.mxu0 %v1779
  %2947 = vmatpush.bf16.msra.mxu0 %v1771
  %2948 = vmatpush.bf16.msra.mxu0 %v1763
  %2949 = vmatpush.bf16.msra.mxu0 %v1755
  %2950 = vmatpush.bf16.msra.mxu0 %v1747
  %2951 = vmatpush.bf16.msra.mxu0 %v1739
  %2952 = vmatmul.bf16.gmra.mxu0 %v442
  %v2953 = vpop.f32.mrf.mxu0
  %v2954 = vadd.f32 %v2941, %v2953
  %v2955 = vpop.f32.mrf.mxu0
  %2956 = vdwg.mxu0
  %2957 = vmatpush.bf16.msra.mxu0 %v1859
  %2958 = vmatpush.bf16.msra.mxu0 %v1851
  %2959 = vmatpush.bf16.msra.mxu0 %v1843
  %2960 = vmatpush.bf16.msra.mxu0 %v1835
  %2961 = vmatpush.bf16.msra.mxu0 %v1827
  %2962 = vmatpush.bf16.msra.mxu0 %v1819
  %2963 = vmatpush.bf16.msra.mxu0 %v1811
  %2964 = vmatpush.bf16.msra.mxu0 %v1803
  %2965 = vmatmul.bf16.gmra.mxu0 %v443
  %v2966 = vpop.f32.mrf.mxu0
  %v2967 = vadd.f32 %v2954, %v2966
  %v2968 = vpop.f32.mrf.mxu0
  %2969 = vdwg.mxu0
  %2970 = vmatpush.bf16.msra.mxu0 %v1923
  %2971 = vmatpush.bf16.msra.mxu0 %v1915
  %2972 = vmatpush.bf16.msra.mxu0 %v1907
  %2973 = vmatpush.bf16.msra.mxu0 %v1899
  %2974 = vmatpush.bf16.msra.mxu0 %v1891
  %2975 = vmatpush.bf16.msra.mxu0 %v1883
  %2976 = vmatpush.bf16.msra.mxu0 %v1875
  %2977 = vmatpush.bf16.msra.mxu0 %v1867
  %2978 = vmatmul.bf16.gmra.mxu0 %v444
  %v2979 = vpop.f32.mrf.mxu0
  %v2980 = vadd.f32 %v2967, %v2979
  %v2981 = vpop.f32.mrf.mxu0
  %2982 = vdwg.mxu0
  %2983 = vmatpush.bf16.msra.mxu0 %v1987
  %2984 = vmatpush.bf16.msra.mxu0 %v1979
  %2985 = vmatpush.bf16.msra.mxu0 %v1971
  %2986 = vmatpush.bf16.msra.mxu0 %v1963
  %2987 = vmatpush.bf16.msra.mxu0 %v1955
  %2988 = vmatpush.bf16.msra.mxu0 %v1947
  %2989 = vmatpush.bf16.msra.mxu0 %v1939
  %2990 = vmatpush.bf16.msra.mxu0 %v1931
  %2991 = vmatmul.bf16.gmra.mxu0 %v445
  %v2992 = vpop.f32.mrf.mxu0
  %v2993 = vadd.f32 %v2980, %v2992
  %v2994 = vpop.f32.mrf.mxu0
  %2995 = vdwg.mxu0
  %v2996 = vmax.f32 %v2447, 0.0
  %v2997 = vmax.f32 %v2525, 0.0
  %v2998 = vmax.f32 %v2603, 0.0
  %v2999 = vmax.f32 %v2681, 0.0
  %v3000 = vmax.f32 %v2759, 0.0
  %v3001 = vmax.f32 %v2837, 0.0
  %v3002 = vmax.f32 %v2915, 0.0
  %v3003 = vmax.f32 %v2993, 0.0
  %v3004 = vpack.c.bf16 %v2996, %v2996
  %v3005 = vpack.c.bf16 %v2997, %v2997
  %v3006 = vpack.c.bf16 %v2998, %v2998
  %v3007 = vpack.c.bf16 %v2999, %v2999
  %v3008 = vpack.c.bf16 %v3000, %v3000
  %v3009 = vpack.c.bf16 %v3001, %v3001
  %v3010 = vpack.c.bf16 %v3002, %v3002
  %v3011 = vpack.c.bf16 %v3003, %v3003
  %v3012 = vld [vmem:[%s3] sm:$0xff]
  %v3013 = vld [vmem:[%s3 + $0x8] sm:$0xff]
  %v3014 = vld [vmem:[%s3 + $0x10] sm:$0xff]
  %v3015 = vld [vmem:[%s3 + $0x18] sm:$0xff]
  %v3016 = vld [vmem:[%s3 + $0x20] sm:$0xff]
  %v3017 = vld [vmem:[%s3 + $0x28] sm:$0xff]
  %v3018 = vld [vmem:[%s3 + $0x30] sm:$0xff]
  %v3019 = vld [vmem:[%s3 + $0x38] sm:$0xff]
  %v3020 = vld [vmem:[%s3 + $0x40] sm:$0xff]
  %v3021 = vld [vmem:[%s3 + $0x48] sm:$0xff]
  %v3022 = vld [vmem:[%s3 + $0x50] sm:$0xff]
  %v3023 = vld [vmem:[%s3 + $0x58] sm:$0xff]
  %v3024 = vld [vmem:[%s3 + $0x60] sm:$0xff]
  %v3025 = vld [vmem:[%s3 + $0x68] sm:$0xff]
  %v3026 = vld [vmem:[%s3 + $0x70] sm:$0xff]
  %v3027 = vld [vmem:[%s3 + $0x78] sm:$0xff]
  %v3028 = vld [vmem:[%s3 + $0x80] sm:$0xff]
  %v3029 = vld [vmem:[%s3 + $0x88] sm:$0xff]
  %v3030 = vld [vmem:[%s3 + $0x90] sm:$0xff]
  %v3031 = vld [vmem:[%s3 + $0x98] sm:$0xff]
  %v3032 = vld [vmem:[%s3 + $0xa0] sm:$0xff]
  %v3033 = vld [vmem:[%s3 + $0xa8] sm:$0xff]
  %v3034 = vld [vmem:[%s3 + $0xb0] sm:$0xff]
  %v3035 = vld [vmem:[%s3 + $0xb8] sm:$0xff]
  %v3036 = vld [vmem:[%s3 + $0xc0] sm:$0xff]
  %v3037 = vld [vmem:[%s3 + $0xc8] sm:$0xff]
  %v3038 = vld [vmem:[%s3 + $0xd0] sm:$0xff]
  %v3039 = vld [vmem:[%s3 + $0xd8] sm:$0xff]
  %v3040 = vld [vmem:[%s3 + $0xe0] sm:$0xff]
  %v3041 = vld [vmem:[%s3 + $0xe8] sm:$0xff]
  %v3042 = vld [vmem:[%s3 + $0xf0] sm:$0xff]
  %v3043 = vld [vmem:[%s3 + $0xf8] sm:$0xff]
  %v3044 = vld [vmem:[%s3 + $0x100] sm:$0xff]
  %v3045 = vld [vmem:[%s3 + $0x108] sm:$0xff]
  %v3046 = vld [vmem:[%s3 + $0x110] sm:$0xff]
  %v3047 = vld [vmem:[%s3 + $0x118] sm:$0xff]
  %v3048 = vld [vmem:[%s3 + $0x120] sm:$0xff]
  %v3049 = vld [vmem:[%s3 + $0x128] sm:$0xff]
  %v3050 = vld [vmem:[%s3 + $0x130] sm:$0xff]
  %v3051 = vld [vmem:[%s3 + $0x138] sm:$0xff]
  %v3052 = vld [vmem:[%s3 + $0x140] sm:$0xff]
  %v3053 = vld [vmem:[%s3 + $0x148] sm:$0xff]
  %v3054 = vld [vmem:[%s3 + $0x150] sm:$0xff]
  %v3055 = vld [vmem:[%s3 + $0x158] sm:$0xff]
  %v3056 = vld [vmem:[%s3 + $0x160] sm:$0xff]
  %v3057 = vld [vmem:[%s3 + $0x168] sm:$0xff]
  %v3058 = vld [vmem:[%s3 + $0x170] sm:$0xff]
  %v3059 = vld [vmem:[%s3 + $0x178] sm:$0xff]
  %v3060 = vld [vmem:[%s3 + $0x180] sm:$0xff]
  %v3061 = vld [vmem:[%s3 + $0x188] sm:$0xff]
  %v3062 = vld [vmem:[%s3 + $0x190] sm:$0xff]
  %v3063 = vld [vmem:[%s3 + $0x198] sm:$0xff]
  %v3064 = vld [vmem:[%s3 + $0x1a0] sm:$0xff]
  %v3065 = vld [vmem:[%s3 + $0x1a8] sm:$0xff]
  %v3066 = vld [vmem:[%s3 + $0x1b0] sm:$0xff]
  %v3067 = vld [vmem:[%s3 + $0x1b8] sm:$0xff]
  %v3068 = vld [vmem:[%s3 + $0x1c0] sm:$0xff]
  %v3069 = vld [vmem:[%s3 + $0x1c8] sm:$0xff]
  %v3070 = vld [vmem:[%s3 + $0x1d0] sm:$0xff]
  %v3071 = vld [vmem:[%s3 + $0x1d8] sm:$0xff]
  %v3072 = vld [vmem:[%s3 + $0x1e0] sm:$0xff]
  %v3073 = vld [vmem:[%s3 + $0x1e8] sm:$0xff]
  %v3074 = vld [vmem:[%s3 + $0x1f0] sm:$0xff]
  %v3075 = vld [vmem:[%s3 + $0x1f8] sm:$0xff]
  %v3076 = vld [vmem:[%s3 + $0x200] sm:$0xff]
  %v3077 = vld [vmem:[%s3 + $0x208] sm:$0xff]
  %v3078 = vld [vmem:[%s3 + $0x210] sm:$0xff]
  %v3079 = vld [vmem:[%s3 + $0x218] sm:$0xff]
  %v3080 = vld [vmem:[%s3 + $0x220] sm:$0xff]
  %v3081 = vld [vmem:[%s3 + $0x228] sm:$0xff]
  %v3082 = vld [vmem:[%s3 + $0x230] sm:$0xff]
  %v3083 = vld [vmem:[%s3 + $0x238] sm:$0xff]
  %v3084 = vld [vmem:[%s3 + $0x240] sm:$0xff]
  %v3085 = vld [vmem:[%s3 + $0x248] sm:$0xff]
  %v3086 = vld [vmem:[%s3 + $0x250] sm:$0xff]
  %v3087 = vld [vmem:[%s3 + $0x258] sm:$0xff]
  %v3088 = vld [vmem:[%s3 + $0x260] sm:$0xff]
  %v3089 = vld [vmem:[%s3 + $0x268] sm:$0xff]
  %v3090 = vld [vmem:[%s3 + $0x270] sm:$0xff]
  %v3091 = vld [vmem:[%s3 + $0x278] sm:$0xff]
  %v3092 = vld [vmem:[%s3 + $0x280] sm:$0xff]
  %v3093 = vld [vmem:[%s3 + $0x288] sm:$0xff]
  %v3094 = vld [vmem:[%s3 + $0x290] sm:$0xff]
  %v3095 = vld [vmem:[%s3 + $0x298] sm:$0xff]
  %v3096 = vld [vmem:[%s3 + $0x2a0] sm:$0xff]
  %v3097 = vld [vmem:[%s3 + $0x2a8] sm:$0xff]
  %v3098 = vld [vmem:[%s3 + $0x2b0] sm:$0xff]
  %v3099 = vld [vmem:[%s3 + $0x2b8] sm:$0xff]
  %v3100 = vld [vmem:[%s3 + $0x2c0] sm:$0xff]
  %v3101 = vld [vmem:[%s3 + $0x2c8] sm:$0xff]
  %v3102 = vld [vmem:[%s3 + $0x2d0] sm:$0xff]
  %v3103 = vld [vmem:[%s3 + $0x2d8] sm:$0xff]
  %v3104 = vld [vmem:[%s3 + $0x2e0] sm:$0xff]
  %v3105 = vld [vmem:[%s3 + $0x2e8] sm:$0xff]
  %v3106 = vld [vmem:[%s3 + $0x2f0] sm:$0xff]
  %v3107 = vld [vmem:[%s3 + $0x2f8] sm:$0xff]
  %v3108 = vld [vmem:[%s3 + $0x300] sm:$0xff]
  %v3109 = vld [vmem:[%s3 + $0x308] sm:$0xff]
  %v3110 = vld [vmem:[%s3 + $0x310] sm:$0xff]
  %v3111 = vld [vmem:[%s3 + $0x318] sm:$0xff]
  %v3112 = vld [vmem:[%s3 + $0x320] sm:$0xff]
  %v3113 = vld [vmem:[%s3 + $0x328] sm:$0xff]
  %v3114 = vld [vmem:[%s3 + $0x330] sm:$0xff]
  %v3115 = vld [vmem:[%s3 + $0x338] sm:$0xff]
  %v3116 = vld [vmem:[%s3 + $0x340] sm:$0xff]
  %v3117 = vld [vmem:[%s3 + $0x348] sm:$0xff]
  %v3118 = vld [vmem:[%s3 + $0x350] sm:$0xff]
  %v3119 = vld [vmem:[%s3 + $0x358] sm:$0xff]
  %v3120 = vld [vmem:[%s3 + $0x360] sm:$0xff]
  %v3121 = vld [vmem:[%s3 + $0x368] sm:$0xff]
  %v3122 = vld [vmem:[%s3 + $0x370] sm:$0xff]
  %v3123 = vld [vmem:[%s3 + $0x378] sm:$0xff]
  %v3124 = vld [vmem:[%s3 + $0x380] sm:$0xff]
  %v3125 = vld [vmem:[%s3 + $0x388] sm:$0xff]
  %v3126 = vld [vmem:[%s3 + $0x390] sm:$0xff]
  %v3127 = vld [vmem:[%s3 + $0x398] sm:$0xff]
  %v3128 = vld [vmem:[%s3 + $0x3a0] sm:$0xff]
  %v3129 = vld [vmem:[%s3 + $0x3a8] sm:$0xff]
  %v3130 = vld [vmem:[%s3 + $0x3b0] sm:$0xff]
  %v3131 = vld [vmem:[%s3 + $0x3b8] sm:$0xff]
  %v3132 = vld [vmem:[%s3 + $0x3c0] sm:$0xff]
  %v3133 = vld [vmem:[%s3 + $0x3c8] sm:$0xff]
  %v3134 = vld [vmem:[%s3 + $0x3d0] sm:$0xff]
  %v3135 = vld [vmem:[%s3 + $0x3d8] sm:$0xff]
  %v3136 = vld [vmem:[%s3 + $0x3e0] sm:$0xff]
  %v3137 = vld [vmem:[%s3 + $0x3e8] sm:$0xff]
  %v3138 = vld [vmem:[%s3 + $0x3f0] sm:$0xff]
  %v3139 = vld [vmem:[%s3 + $0x3f8] sm:$0xff]
  %v3140 = vld [vmem:[%s3 + $0x400] sm:$0xff]
  %v3141 = vld [vmem:[%s3 + $0x408] sm:$0xff]
  %v3142 = vld [vmem:[%s3 + $0x410] sm:$0xff]
  %v3143 = vld [vmem:[%s3 + $0x418] sm:$0xff]
  %v3144 = vld [vmem:[%s3 + $0x420] sm:$0xff]
  %v3145 = vld [vmem:[%s3 + $0x428] sm:$0xff]
  %v3146 = vld [vmem:[%s3 + $0x430] sm:$0xff]
  %v3147 = vld [vmem:[%s3 + $0x438] sm:$0xff]
  %v3148 = vld [vmem:[%s3 + $0x440] sm:$0xff]
  %v3149 = vld [vmem:[%s3 + $0x448] sm:$0xff]
  %v3150 = vld [vmem:[%s3 + $0x450] sm:$0xff]
  %v3151 = vld [vmem:[%s3 + $0x458] sm:$0xff]
  %v3152 = vld [vmem:[%s3 + $0x460] sm:$0xff]
  %v3153 = vld [vmem:[%s3 + $0x468] sm:$0xff]
  %v3154 = vld [vmem:[%s3 + $0x470] sm:$0xff]
  %v3155 = vld [vmem:[%s3 + $0x478] sm:$0xff]
  %v3156 = vld [vmem:[%s3 + $0x480] sm:$0xff]
  %v3157 = vld [vmem:[%s3 + $0x488] sm:$0xff]
  %v3158 = vld [vmem:[%s3 + $0x490] sm:$0xff]
  %v3159 = vld [vmem:[%s3 + $0x498] sm:$0xff]
  %v3160 = vld [vmem:[%s3 + $0x4a0] sm:$0xff]
  %v3161 = vld [vmem:[%s3 + $0x4a8] sm:$0xff]
  %v3162 = vld [vmem:[%s3 + $0x4b0] sm:$0xff]
  %v3163 = vld [vmem:[%s3 + $0x4b8] sm:$0xff]
  %v3164 = vld [vmem:[%s3 + $0x4c0] sm:$0xff]
  %v3165 = vld [vmem:[%s3 + $0x4c8] sm:$0xff]
  %v3166 = vld [vmem:[%s3 + $0x4d0] sm:$0xff]
  %v3167 = vld [vmem:[%s3 + $0x4d8] sm:$0xff]
  %v3168 = vld [vmem:[%s3 + $0x4e0] sm:$0xff]
  %v3169 = vld [vmem:[%s3 + $0x4e8] sm:$0xff]
  %v3170 = vld [vmem:[%s3 + $0x4f0] sm:$0xff]
  %v3171 = vld [vmem:[%s3 + $0x4f8] sm:$0xff]
  %v3172 = vld [vmem:[%s3 + $0x500] sm:$0xff]
  %v3173 = vld [vmem:[%s3 + $0x508] sm:$0xff]
  %v3174 = vld [vmem:[%s3 + $0x510] sm:$0xff]
  %v3175 = vld [vmem:[%s3 + $0x518] sm:$0xff]
  %v3176 = vld [vmem:[%s3 + $0x520] sm:$0xff]
  %v3177 = vld [vmem:[%s3 + $0x528] sm:$0xff]
  %v3178 = vld [vmem:[%s3 + $0x530] sm:$0xff]
  %v3179 = vld [vmem:[%s3 + $0x538] sm:$0xff]
  %v3180 = vld [vmem:[%s3 + $0x540] sm:$0xff]
  %v3181 = vld [vmem:[%s3 + $0x548] sm:$0xff]
  %v3182 = vld [vmem:[%s3 + $0x550] sm:$0xff]
  %v3183 = vld [vmem:[%s3 + $0x558] sm:$0xff]
  %v3184 = vld [vmem:[%s3 + $0x560] sm:$0xff]
  %v3185 = vld [vmem:[%s3 + $0x568] sm:$0xff]
  %v3186 = vld [vmem:[%s3 + $0x570] sm:$0xff]
  %v3187 = vld [vmem:[%s3 + $0x578] sm:$0xff]
  %v3188 = vld [vmem:[%s3 + $0x580] sm:$0xff]
  %v3189 = vld [vmem:[%s3 + $0x588] sm:$0xff]
  %v3190 = vld [vmem:[%s3 + $0x590] sm:$0xff]
  %v3191 = vld [vmem:[%s3 + $0x598] sm:$0xff]
  %v3192 = vld [vmem:[%s3 + $0x5a0] sm:$0xff]
  %v3193 = vld [vmem:[%s3 + $0x5a8] sm:$0xff]
  %v3194 = vld [vmem:[%s3 + $0x5b0] sm:$0xff]
  %v3195 = vld [vmem:[%s3 + $0x5b8] sm:$0xff]
  %v3196 = vld [vmem:[%s3 + $0x5c0] sm:$0xff]
  %v3197 = vld [vmem:[%s3 + $0x5c8] sm:$0xff]
  %v3198 = vld [vmem:[%s3 + $0x5d0] sm:$0xff]
  %v3199 = vld [vmem:[%s3 + $0x5d8] sm:$0xff]
  %v3200 = vld [vmem:[%s3 + $0x5e0] sm:$0xff]
  %v3201 = vld [vmem:[%s3 + $0x5e8] sm:$0xff]
  %v3202 = vld [vmem:[%s3 + $0x5f0] sm:$0xff]
  %v3203 = vld [vmem:[%s3 + $0x5f8] sm:$0xff]
  %v3204 = vld [vmem:[%s3 + $0x600] sm:$0xff]
  %v3205 = vld [vmem:[%s3 + $0x608] sm:$0xff]
  %v3206 = vld [vmem:[%s3 + $0x610] sm:$0xff]
  %v3207 = vld [vmem:[%s3 + $0x618] sm:$0xff]
  %v3208 = vld [vmem:[%s3 + $0x620] sm:$0xff]
  %v3209 = vld [vmem:[%s3 + $0x628] sm:$0xff]
  %v3210 = vld [vmem:[%s3 + $0x630] sm:$0xff]
  %v3211 = vld [vmem:[%s3 + $0x638] sm:$0xff]
  %v3212 = vld [vmem:[%s3 + $0x640] sm:$0xff]
  %v3213 = vld [vmem:[%s3 + $0x648] sm:$0xff]
  %v3214 = vld [vmem:[%s3 + $0x650] sm:$0xff]
  %v3215 = vld [vmem:[%s3 + $0x658] sm:$0xff]
  %v3216 = vld [vmem:[%s3 + $0x660] sm:$0xff]
  %v3217 = vld [vmem:[%s3 + $0x668] sm:$0xff]
  %v3218 = vld [vmem:[%s3 + $0x670] sm:$0xff]
  %v3219 = vld [vmem:[%s3 + $0x678] sm:$0xff]
  %v3220 = vld [vmem:[%s3 + $0x680] sm:$0xff]
  %v3221 = vld [vmem:[%s3 + $0x688] sm:$0xff]
  %v3222 = vld [vmem:[%s3 + $0x690] sm:$0xff]
  %v3223 = vld [vmem:[%s3 + $0x698] sm:$0xff]
  %v3224 = vld [vmem:[%s3 + $0x6a0] sm:$0xff]
  %v3225 = vld [vmem:[%s3 + $0x6a8] sm:$0xff]
  %v3226 = vld [vmem:[%s3 + $0x6b0] sm:$0xff]
  %v3227 = vld [vmem:[%s3 + $0x6b8] sm:$0xff]
  %v3228 = vld [vmem:[%s3 + $0x6c0] sm:$0xff]
  %v3229 = vld [vmem:[%s3 + $0x6c8] sm:$0xff]
  %v3230 = vld [vmem:[%s3 + $0x6d0] sm:$0xff]
  %v3231 = vld [vmem:[%s3 + $0x6d8] sm:$0xff]
  %v3232 = vld [vmem:[%s3 + $0x6e0] sm:$0xff]
  %v3233 = vld [vmem:[%s3 + $0x6e8] sm:$0xff]
  %v3234 = vld [vmem:[%s3 + $0x6f0] sm:$0xff]
  %v3235 = vld [vmem:[%s3 + $0x6f8] sm:$0xff]
  %v3236 = vld [vmem:[%s3 + $0x700] sm:$0xff]
  %v3237 = vld [vmem:[%s3 + $0x708] sm:$0xff]
  %v3238 = vld [vmem:[%s3 + $0x710] sm:$0xff]
  %v3239 = vld [vmem:[%s3 + $0x718] sm:$0xff]
  %v3240 = vld [vmem:[%s3 + $0x720] sm:$0xff]
  %v3241 = vld [vmem:[%s3 + $0x728] sm:$0xff]
  %v3242 = vld [vmem:[%s3 + $0x730] sm:$0xff]
  %v3243 = vld [vmem:[%s3 + $0x738] sm:$0xff]
  %v3244 = vld [vmem:[%s3 + $0x740] sm:$0xff]
  %v3245 = vld [vmem:[%s3 + $0x748] sm:$0xff]
  %v3246 = vld [vmem:[%s3 + $0x750] sm:$0xff]
  %v3247 = vld [vmem:[%s3 + $0x758] sm:$0xff]
  %v3248 = vld [vmem:[%s3 + $0x760] sm:$0xff]
  %v3249 = vld [vmem:[%s3 + $0x768] sm:$0xff]
  %v3250 = vld [vmem:[%s3 + $0x770] sm:$0xff]
  %v3251 = vld [vmem:[%s3 + $0x778] sm:$0xff]
  %v3252 = vld [vmem:[%s3 + $0x780] sm:$0xff]
  %v3253 = vld [vmem:[%s3 + $0x788] sm:$0xff]
  %v3254 = vld [vmem:[%s3 + $0x790] sm:$0xff]
  %v3255 = vld [vmem:[%s3 + $0x798] sm:$0xff]
  %v3256 = vld [vmem:[%s3 + $0x7a0] sm:$0xff]
  %v3257 = vld [vmem:[%s3 + $0x7a8] sm:$0xff]
  %v3258 = vld [vmem:[%s3 + $0x7b0] sm:$0xff]
  %v3259 = vld [vmem:[%s3 + $0x7b8] sm:$0xff]
  %v3260 = vld [vmem:[%s3 + $0x7c0] sm:$0xff]
  %v3261 = vld [vmem:[%s3 + $0x7c8] sm:$0xff]
  %v3262 = vld [vmem:[%s3 + $0x7d0] sm:$0xff]
  %v3263 = vld [vmem:[%s3 + $0x7d8] sm:$0xff]
  %v3264 = vld [vmem:[%s3 + $0x7e0] sm:$0xff]
  %v3265 = vld [vmem:[%s3 + $0x7e8] sm:$0xff]
  %v3266 = vld [vmem:[%s3 + $0x7f0] sm:$0xff]
  %v3267 = vld [vmem:[%s3 + $0x7f8] sm:$0xff]
  %v3268 = vld [vmem:[%s4] sm:$0xf]
  %v3270 = vperm.slane %v3268, 0
  %v3271 = vperm.slane %v3268, 1
  %v3272 = vperm.slane %v3268, 2
  %v3273 = vperm.slane %v3268, 3
  %v3534 = vunpack.c.l.b16 %v3012
  %v3535 = vunpack.c.h.b16 %v3012
  %v3536 = vunpack.c.l.b16 %v3013
  %v3537 = vunpack.c.h.b16 %v3013
  %v3538 = vunpack.c.l.b16 %v3014
  %v3539 = vunpack.c.h.b16 %v3014
  %v3540 = vunpack.c.l.b16 %v3015
  %v3541 = vunpack.c.h.b16 %v3015
  %v3542 = vunpack.c.l.b16 %v3016
  %v3543 = vunpack.c.h.b16 %v3016
  %v3544 = vunpack.c.l.b16 %v3017
  %v3545 = vunpack.c.h.b16 %v3017
  %v3546 = vunpack.c.l.b16 %v3018
  %v3547 = vunpack.c.h.b16 %v3018
  %v3548 = vunpack.c.l.b16 %v3019
  %v3549 = vunpack.c.h.b16 %v3019
  %v3550 = vunpack.c.l.b16 %v3020
  %v3551 = vunpack.c.h.b16 %v3020
  %v3552 = vunpack.c.l.b16 %v3021
  %v3553 = vunpack.c.h.b16 %v3021
  %v3554 = vunpack.c.l.b16 %v3022
  %v3555 = vunpack.c.h.b16 %v3022
  %v3556 = vunpack.c.l.b16 %v3023
  %v3557 = vunpack.c.h.b16 %v3023
  %v3558 = vunpack.c.l.b16 %v3024
  %v3559 = vunpack.c.h.b16 %v3024
  %v3560 = vunpack.c.l.b16 %v3025
  %v3561 = vunpack.c.h.b16 %v3025
  %v3562 = vunpack.c.l.b16 %v3026
  %v3563 = vunpack.c.h.b16 %v3026
  %v3564 = vunpack.c.l.b16 %v3027
  %v3565 = vunpack.c.h.b16 %v3027
  %v3566 = vunpack.c.l.b16 %v3028
  %v3567 = vunpack.c.h.b16 %v3028
  %v3568 = vunpack.c.l.b16 %v3029
  %v3569 = vunpack.c.h.b16 %v3029
  %v3570 = vunpack.c.l.b16 %v3030
  %v3571 = vunpack.c.h.b16 %v3030
  %v3572 = vunpack.c.l.b16 %v3031
  %v3573 = vunpack.c.h.b16 %v3031
  %v3574 = vunpack.c.l.b16 %v3032
  %v3575 = vunpack.c.h.b16 %v3032
  %v3576 = vunpack.c.l.b16 %v3033
  %v3577 = vunpack.c.h.b16 %v3033
  %v3578 = vunpack.c.l.b16 %v3034
  %v3579 = vunpack.c.h.b16 %v3034
  %v3580 = vunpack.c.l.b16 %v3035
  %v3581 = vunpack.c.h.b16 %v3035
  %v3582 = vunpack.c.l.b16 %v3036
  %v3583 = vunpack.c.h.b16 %v3036
  %v3584 = vunpack.c.l.b16 %v3037
  %v3585 = vunpack.c.h.b16 %v3037
  %v3586 = vunpack.c.l.b16 %v3038
  %v3587 = vunpack.c.h.b16 %v3038
  %v3588 = vunpack.c.l.b16 %v3039
  %v3589 = vunpack.c.h.b16 %v3039
  %v3590 = vunpack.c.l.b16 %v3040
  %v3591 = vunpack.c.h.b16 %v3040
  %v3592 = vunpack.c.l.b16 %v3041
  %v3593 = vunpack.c.h.b16 %v3041
  %v3594 = vunpack.c.l.b16 %v3042
  %v3595 = vunpack.c.h.b16 %v3042
  %v3596 = vunpack.c.l.b16 %v3043
  %v3597 = vunpack.c.h.b16 %v3043
  %v3598 = vunpack.c.l.b16 %v3044
  %v3599 = vunpack.c.h.b16 %v3044
  %v3600 = vunpack.c.l.b16 %v3045
  %v3601 = vunpack.c.h.b16 %v3045
  %v3602 = vunpack.c.l.b16 %v3046
  %v3603 = vunpack.c.h.b16 %v3046
  %v3604 = vunpack.c.l.b16 %v3047
  %v3605 = vunpack.c.h.b16 %v3047
  %v3606 = vunpack.c.l.b16 %v3048
  %v3607 = vunpack.c.h.b16 %v3048
  %v3608 = vunpack.c.l.b16 %v3049
  %v3609 = vunpack.c.h.b16 %v3049
  %v3610 = vunpack.c.l.b16 %v3050
  %v3611 = vunpack.c.h.b16 %v3050
  %v3612 = vunpack.c.l.b16 %v3051
  %v3613 = vunpack.c.h.b16 %v3051
  %v3614 = vunpack.c.l.b16 %v3052
  %v3615 = vunpack.c.h.b16 %v3052
  %v3616 = vunpack.c.l.b16 %v3053
  %v3617 = vunpack.c.h.b16 %v3053
  %v3618 = vunpack.c.l.b16 %v3054
  %v3619 = vunpack.c.h.b16 %v3054
  %v3620 = vunpack.c.l.b16 %v3055
  %v3621 = vunpack.c.h.b16 %v3055
  %v3622 = vunpack.c.l.b16 %v3056
  %v3623 = vunpack.c.h.b16 %v3056
  %v3624 = vunpack.c.l.b16 %v3057
  %v3625 = vunpack.c.h.b16 %v3057
  %v3626 = vunpack.c.l.b16 %v3058
  %v3627 = vunpack.c.h.b16 %v3058
  %v3628 = vunpack.c.l.b16 %v3059
  %v3629 = vunpack.c.h.b16 %v3059
  %v3630 = vunpack.c.l.b16 %v3060
  %v3631 = vunpack.c.h.b16 %v3060
  %v3632 = vunpack.c.l.b16 %v3061
  %v3633 = vunpack.c.h.b16 %v3061
  %v3634 = vunpack.c.l.b16 %v3062
  %v3635 = vunpack.c.h.b16 %v3062
  %v3636 = vunpack.c.l.b16 %v3063
  %v3637 = vunpack.c.h.b16 %v3063
  %v3638 = vunpack.c.l.b16 %v3064
  %v3639 = vunpack.c.h.b16 %v3064
  %v3640 = vunpack.c.l.b16 %v3065
  %v3641 = vunpack.c.h.b16 %v3065
  %v3642 = vunpack.c.l.b16 %v3066
  %v3643 = vunpack.c.h.b16 %v3066
  %v3644 = vunpack.c.l.b16 %v3067
  %v3645 = vunpack.c.h.b16 %v3067
  %v3646 = vunpack.c.l.b16 %v3068
  %v3647 = vunpack.c.h.b16 %v3068
  %v3648 = vunpack.c.l.b16 %v3069
  %v3649 = vunpack.c.h.b16 %v3069
  %v3650 = vunpack.c.l.b16 %v3070
  %v3651 = vunpack.c.h.b16 %v3070
  %v3652 = vunpack.c.l.b16 %v3071
  %v3653 = vunpack.c.h.b16 %v3071
  %v3654 = vunpack.c.l.b16 %v3072
  %v3655 = vunpack.c.h.b16 %v3072
  %v3656 = vunpack.c.l.b16 %v3073
  %v3657 = vunpack.c.h.b16 %v3073
  %v3658 = vunpack.c.l.b16 %v3074
  %v3659 = vunpack.c.h.b16 %v3074
  %v3660 = vunpack.c.l.b16 %v3075
  %v3661 = vunpack.c.h.b16 %v3075
  %v3662 = vunpack.c.l.b16 %v3076
  %v3663 = vunpack.c.h.b16 %v3076
  %v3664 = vunpack.c.l.b16 %v3077
  %v3665 = vunpack.c.h.b16 %v3077
  %v3666 = vunpack.c.l.b16 %v3078
  %v3667 = vunpack.c.h.b16 %v3078
  %v3668 = vunpack.c.l.b16 %v3079
  %v3669 = vunpack.c.h.b16 %v3079
  %v3670 = vunpack.c.l.b16 %v3080
  %v3671 = vunpack.c.h.b16 %v3080
  %v3672 = vunpack.c.l.b16 %v3081
  %v3673 = vunpack.c.h.b16 %v3081
  %v3674 = vunpack.c.l.b16 %v3082
  %v3675 = vunpack.c.h.b16 %v3082
  %v3676 = vunpack.c.l.b16 %v3083
  %v3677 = vunpack.c.h.b16 %v3083
  %v3678 = vunpack.c.l.b16 %v3084
  %v3679 = vunpack.c.h.b16 %v3084
  %v3680 = vunpack.c.l.b16 %v3085
  %v3681 = vunpack.c.h.b16 %v3085
  %v3682 = vunpack.c.l.b16 %v3086
  %v3683 = vunpack.c.h.b16 %v3086
  %v3684 = vunpack.c.l.b16 %v3087
  %v3685 = vunpack.c.h.b16 %v3087
  %v3686 = vunpack.c.l.b16 %v3088
  %v3687 = vunpack.c.h.b16 %v3088
  %v3688 = vunpack.c.l.b16 %v3089
  %v3689 = vunpack.c.h.b16 %v3089
  %v3690 = vunpack.c.l.b16 %v3090
  %v3691 = vunpack.c.h.b16 %v3090
  %v3692 = vunpack.c.l.b16 %v3091
  %v3693 = vunpack.c.h.b16 %v3091
  %v3694 = vunpack.c.l.b16 %v3092
  %v3695 = vunpack.c.h.b16 %v3092
  %v3696 = vunpack.c.l.b16 %v3093
  %v3697 = vunpack.c.h.b16 %v3093
  %v3698 = vunpack.c.l.b16 %v3094
  %v3699 = vunpack.c.h.b16 %v3094
  %v3700 = vunpack.c.l.b16 %v3095
  %v3701 = vunpack.c.h.b16 %v3095
  %v3702 = vunpack.c.l.b16 %v3096
  %v3703 = vunpack.c.h.b16 %v3096
  %v3704 = vunpack.c.l.b16 %v3097
  %v3705 = vunpack.c.h.b16 %v3097
  %v3706 = vunpack.c.l.b16 %v3098
  %v3707 = vunpack.c.h.b16 %v3098
  %v3708 = vunpack.c.l.b16 %v3099
  %v3709 = vunpack.c.h.b16 %v3099
  %v3710 = vunpack.c.l.b16 %v3100
  %v3711 = vunpack.c.h.b16 %v3100
  %v3712 = vunpack.c.l.b16 %v3101
  %v3713 = vunpack.c.h.b16 %v3101
  %v3714 = vunpack.c.l.b16 %v3102
  %v3715 = vunpack.c.h.b16 %v3102
  %v3716 = vunpack.c.l.b16 %v3103
  %v3717 = vunpack.c.h.b16 %v3103
  %v3718 = vunpack.c.l.b16 %v3104
  %v3719 = vunpack.c.h.b16 %v3104
  %v3720 = vunpack.c.l.b16 %v3105
  %v3721 = vunpack.c.h.b16 %v3105
  %v3722 = vunpack.c.l.b16 %v3106
  %v3723 = vunpack.c.h.b16 %v3106
  %v3724 = vunpack.c.l.b16 %v3107
  %v3725 = vunpack.c.h.b16 %v3107
  %v3726 = vunpack.c.l.b16 %v3108
  %v3727 = vunpack.c.h.b16 %v3108
  %v3728 = vunpack.c.l.b16 %v3109
  %v3729 = vunpack.c.h.b16 %v3109
  %v3730 = vunpack.c.l.b16 %v3110
  %v3731 = vunpack.c.h.b16 %v3110
  %v3732 = vunpack.c.l.b16 %v3111
  %v3733 = vunpack.c.h.b16 %v3111
  %v3734 = vunpack.c.l.b16 %v3112
  %v3735 = vunpack.c.h.b16 %v3112
  %v3736 = vunpack.c.l.b16 %v3113
  %v3737 = vunpack.c.h.b16 %v3113
  %v3738 = vunpack.c.l.b16 %v3114
  %v3739 = vunpack.c.h.b16 %v3114
  %v3740 = vunpack.c.l.b16 %v3115
  %v3741 = vunpack.c.h.b16 %v3115
  %v3742 = vunpack.c.l.b16 %v3116
  %v3743 = vunpack.c.h.b16 %v3116
  %v3744 = vunpack.c.l.b16 %v3117
  %v3745 = vunpack.c.h.b16 %v3117
  %v3746 = vunpack.c.l.b16 %v3118
  %v3747 = vunpack.c.h.b16 %v3118
  %v3748 = vunpack.c.l.b16 %v3119
  %v3749 = vunpack.c.h.b16 %v3119
  %v3750 = vunpack.c.l.b16 %v3120
  %v3751 = vunpack.c.h.b16 %v3120
  %v3752 = vunpack.c.l.b16 %v3121
  %v3753 = vunpack.c.h.b16 %v3121
  %v3754 = vunpack.c.l.b16 %v3122
  %v3755 = vunpack.c.h.b16 %v3122
  %v3756 = vunpack.c.l.b16 %v3123
  %v3757 = vunpack.c.h.b16 %v3123
  %v3758 = vunpack.c.l.b16 %v3124
  %v3759 = vunpack.c.h.b16 %v3124
  %v3760 = vunpack.c.l.b16 %v3125
  %v3761 = vunpack.c.h.b16 %v3125
  %v3762 = vunpack.c.l.b16 %v3126
  %v3763 = vunpack.c.h.b16 %v3126
  %v3764 = vunpack.c.l.b16 %v3127
  %v3765 = vunpack.c.h.b16 %v3127
  %v3766 = vunpack.c.l.b16 %v3128
  %v3767 = vunpack.c.h.b16 %v3128
  %v3768 = vunpack.c.l.b16 %v3129
  %v3769 = vunpack.c.h.b16 %v3129
  %v3770 = vunpack.c.l.b16 %v3130
  %v3771 = vunpack.c.h.b16 %v3130
  %v3772 = vunpack.c.l.b16 %v3131
  %v3773 = vunpack.c.h.b16 %v3131
  %v3774 = vunpack.c.l.b16 %v3132
  %v3775 = vunpack.c.h.b16 %v3132
  %v3776 = vunpack.c.l.b16 %v3133
  %v3777 = vunpack.c.h.b16 %v3133
  %v3778 = vunpack.c.l.b16 %v3134
  %v3779 = vunpack.c.h.b16 %v3134
  %v3780 = vunpack.c.l.b16 %v3135
  %v3781 = vunpack.c.h.b16 %v3135
  %v3782 = vunpack.c.l.b16 %v3136
  %v3783 = vunpack.c.h.b16 %v3136
  %v3784 = vunpack.c.l.b16 %v3137
  %v3785 = vunpack.c.h.b16 %v3137
  %v3786 = vunpack.c.l.b16 %v3138
  %v3787 = vunpack.c.h.b16 %v3138
  %v3788 = vunpack.c.l.b16 %v3139
  %v3789 = vunpack.c.h.b16 %v3139
  %v3790 = vunpack.c.l.b16 %v3140
  %v3791 = vunpack.c.h.b16 %v3140
  %v3792 = vunpack.c.l.b16 %v3141
  %v3793 = vunpack.c.h.b16 %v3141
  %v3794 = vunpack.c.l.b16 %v3142
  %v3795 = vunpack.c.h.b16 %v3142
  %v3796 = vunpack.c.l.b16 %v3143
  %v3797 = vunpack.c.h.b16 %v3143
  %v3798 = vunpack.c.l.b16 %v3144
  %v3799 = vunpack.c.h.b16 %v3144
  %v3800 = vunpack.c.l.b16 %v3145
  %v3801 = vunpack.c.h.b16 %v3145
  %v3802 = vunpack.c.l.b16 %v3146
  %v3803 = vunpack.c.h.b16 %v3146
  %v3804 = vunpack.c.l.b16 %v3147
  %v3805 = vunpack.c.h.b16 %v3147
  %v3806 = vunpack.c.l.b16 %v3148
  %v3807 = vunpack.c.h.b16 %v3148
  %v3808 = vunpack.c.l.b16 %v3149
  %v3809 = vunpack.c.h.b16 %v3149
  %v3810 = vunpack.c.l.b16 %v3150
  %v3811 = vunpack.c.h.b16 %v3150
  %v3812 = vunpack.c.l.b16 %v3151
  %v3813 = vunpack.c.h.b16 %v3151
  %v3814 = vunpack.c.l.b16 %v3152
  %v3815 = vunpack.c.h.b16 %v3152
  %v3816 = vunpack.c.l.b16 %v3153
  %v3817 = vunpack.c.h.b16 %v3153
  %v3818 = vunpack.c.l.b16 %v3154
  %v3819 = vunpack.c.h.b16 %v3154
  %v3820 = vunpack.c.l.b16 %v3155
  %v3821 = vunpack.c.h.b16 %v3155
  %v3822 = vunpack.c.l.b16 %v3156
  %v3823 = vunpack.c.h.b16 %v3156
  %v3824 = vunpack.c.l.b16 %v3157
  %v3825 = vunpack.c.h.b16 %v3157
  %v3826 = vunpack.c.l.b16 %v3158
  %v3827 = vunpack.c.h.b16 %v3158
  %v3828 = vunpack.c.l.b16 %v3159
  %v3829 = vunpack.c.h.b16 %v3159
  %v3830 = vunpack.c.l.b16 %v3160
  %v3831 = vunpack.c.h.b16 %v3160
  %v3832 = vunpack.c.l.b16 %v3161
  %v3833 = vunpack.c.h.b16 %v3161
  %v3834 = vunpack.c.l.b16 %v3162
  %v3835 = vunpack.c.h.b16 %v3162
  %v3836 = vunpack.c.l.b16 %v3163
  %v3837 = vunpack.c.h.b16 %v3163
  %v3838 = vunpack.c.l.b16 %v3164
  %v3839 = vunpack.c.h.b16 %v3164
  %v3840 = vunpack.c.l.b16 %v3165
  %v3841 = vunpack.c.h.b16 %v3165
  %v3842 = vunpack.c.l.b16 %v3166
  %v3843 = vunpack.c.h.b16 %v3166
  %v3844 = vunpack.c.l.b16 %v3167
  %v3845 = vunpack.c.h.b16 %v3167
  %v3846 = vunpack.c.l.b16 %v3168
  %v3847 = vunpack.c.h.b16 %v3168
  %v3848 = vunpack.c.l.b16 %v3169
  %v3849 = vunpack.c.h.b16 %v3169
  %v3850 = vunpack.c.l.b16 %v3170
  %v3851 = vunpack.c.h.b16 %v3170
  %v3852 = vunpack.c.l.b16 %v3171
  %v3853 = vunpack.c.h.b16 %v3171
  %v3854 = vunpack.c.l.b16 %v3172
  %v3855 = vunpack.c.h.b16 %v3172
  %v3856 = vunpack.c.l.b16 %v3173
  %v3857 = vunpack.c.h.b16 %v3173
  %v3858 = vunpack.c.l.b16 %v3174
  %v3859 = vunpack.c.h.b16 %v3174
  %v3860 = vunpack.c.l.b16 %v3175
  %v3861 = vunpack.c.h.b16 %v3175
  %v3862 = vunpack.c.l.b16 %v3176
  %v3863 = vunpack.c.h.b16 %v3176
  %v3864 = vunpack.c.l.b16 %v3177
  %v3865 = vunpack.c.h.b16 %v3177
  %v3866 = vunpack.c.l.b16 %v3178
  %v3867 = vunpack.c.h.b16 %v3178
  %v3868 = vunpack.c.l.b16 %v3179
  %v3869 = vunpack.c.h.b16 %v3179
  %v3870 = vunpack.c.l.b16 %v3180
  %v3871 = vunpack.c.h.b16 %v3180
  %v3872 = vunpack.c.l.b16 %v3181
  %v3873 = vunpack.c.h.b16 %v3181
  %v3874 = vunpack.c.l.b16 %v3182
  %v3875 = vunpack.c.h.b16 %v3182
  %v3876 = vunpack.c.l.b16 %v3183
  %v3877 = vunpack.c.h.b16 %v3183
  %v3878 = vunpack.c.l.b16 %v3184
  %v3879 = vunpack.c.h.b16 %v3184
  %v3880 = vunpack.c.l.b16 %v3185
  %v3881 = vunpack.c.h.b16 %v3185
  %v3882 = vunpack.c.l.b16 %v3186
  %v3883 = vunpack.c.h.b16 %v3186
  %v3884 = vunpack.c.l.b16 %v3187
  %v3885 = vunpack.c.h.b16 %v3187
  %v3886 = vunpack.c.l.b16 %v3188
  %v3887 = vunpack.c.h.b16 %v3188
  %v3888 = vunpack.c.l.b16 %v3189
  %v3889 = vunpack.c.h.b16 %v3189
  %v3890 = vunpack.c.l.b16 %v3190
  %v3891 = vunpack.c.h.b16 %v3190
  %v3892 = vunpack.c.l.b16 %v3191
  %v3893 = vunpack.c.h.b16 %v3191
  %v3894 = vunpack.c.l.b16 %v3192
  %v3895 = vunpack.c.h.b16 %v3192
  %v3896 = vunpack.c.l.b16 %v3193
  %v3897 = vunpack.c.h.b16 %v3193
  %v3898 = vunpack.c.l.b16 %v3194
  %v3899 = vunpack.c.h.b16 %v3194
  %v3900 = vunpack.c.l.b16 %v3195
  %v3901 = vunpack.c.h.b16 %v3195
  %v3902 = vunpack.c.l.b16 %v3196
  %v3903 = vunpack.c.h.b16 %v3196
  %v3904 = vunpack.c.l.b16 %v3197
  %v3905 = vunpack.c.h.b16 %v3197
  %v3906 = vunpack.c.l.b16 %v3198
  %v3907 = vunpack.c.h.b16 %v3198
  %v3908 = vunpack.c.l.b16 %v3199
  %v3909 = vunpack.c.h.b16 %v3199
  %v3910 = vunpack.c.l.b16 %v3200
  %v3911 = vunpack.c.h.b16 %v3200
  %v3912 = vunpack.c.l.b16 %v3201
  %v3913 = vunpack.c.h.b16 %v3201
  %v3914 = vunpack.c.l.b16 %v3202
  %v3915 = vunpack.c.h.b16 %v3202
  %v3916 = vunpack.c.l.b16 %v3203
  %v3917 = vunpack.c.h.b16 %v3203
  %v3918 = vunpack.c.l.b16 %v3204
  %v3919 = vunpack.c.h.b16 %v3204
  %v3920 = vunpack.c.l.b16 %v3205
  %v3921 = vunpack.c.h.b16 %v3205
  %v3922 = vunpack.c.l.b16 %v3206
  %v3923 = vunpack.c.h.b16 %v3206
  %v3924 = vunpack.c.l.b16 %v3207
  %v3925 = vunpack.c.h.b16 %v3207
  %v3926 = vunpack.c.l.b16 %v3208
  %v3927 = vunpack.c.h.b16 %v3208
  %v3928 = vunpack.c.l.b16 %v3209
  %v3929 = vunpack.c.h.b16 %v3209
  %v3930 = vunpack.c.l.b16 %v3210
  %v3931 = vunpack.c.h.b16 %v3210
  %v3932 = vunpack.c.l.b16 %v3211
  %v3933 = vunpack.c.h.b16 %v3211
  %v3934 = vunpack.c.l.b16 %v3212
  %v3935 = vunpack.c.h.b16 %v3212
  %v3936 = vunpack.c.l.b16 %v3213
  %v3937 = vunpack.c.h.b16 %v3213
  %v3938 = vunpack.c.l.b16 %v3214
  %v3939 = vunpack.c.h.b16 %v3214
  %v3940 = vunpack.c.l.b16 %v3215
  %v3941 = vunpack.c.h.b16 %v3215
  %v3942 = vunpack.c.l.b16 %v3216
  %v3943 = vunpack.c.h.b16 %v3216
  %v3944 = vunpack.c.l.b16 %v3217
  %v3945 = vunpack.c.h.b16 %v3217
  %v3946 = vunpack.c.l.b16 %v3218
  %v3947 = vunpack.c.h.b16 %v3218
  %v3948 = vunpack.c.l.b16 %v3219
  %v3949 = vunpack.c.h.b16 %v3219
  %v3950 = vunpack.c.l.b16 %v3220
  %v3951 = vunpack.c.h.b16 %v3220
  %v3952 = vunpack.c.l.b16 %v3221
  %v3953 = vunpack.c.h.b16 %v3221
  %v3954 = vunpack.c.l.b16 %v3222
  %v3955 = vunpack.c.h.b16 %v3222
  %v3956 = vunpack.c.l.b16 %v3223
  %v3957 = vunpack.c.h.b16 %v3223
  %v3958 = vunpack.c.l.b16 %v3224
  %v3959 = vunpack.c.h.b16 %v3224
  %v3960 = vunpack.c.l.b16 %v3225
  %v3961 = vunpack.c.h.b16 %v3225
  %v3962 = vunpack.c.l.b16 %v3226
  %v3963 = vunpack.c.h.b16 %v3226
  %v3964 = vunpack.c.l.b16 %v3227
  %v3965 = vunpack.c.h.b16 %v3227
  %v3966 = vunpack.c.l.b16 %v3228
  %v3967 = vunpack.c.h.b16 %v3228
  %v3968 = vunpack.c.l.b16 %v3229
  %v3969 = vunpack.c.h.b16 %v3229
  %v3970 = vunpack.c.l.b16 %v3230
  %v3971 = vunpack.c.h.b16 %v3230
  %v3972 = vunpack.c.l.b16 %v3231
  %v3973 = vunpack.c.h.b16 %v3231
  %v3974 = vunpack.c.l.b16 %v3232
  %v3975 = vunpack.c.h.b16 %v3232
  %v3976 = vunpack.c.l.b16 %v3233
  %v3977 = vunpack.c.h.b16 %v3233
  %v3978 = vunpack.c.l.b16 %v3234
  %v3979 = vunpack.c.h.b16 %v3234
  %v3980 = vunpack.c.l.b16 %v3235
  %v3981 = vunpack.c.h.b16 %v3235
  %v3982 = vunpack.c.l.b16 %v3236
  %v3983 = vunpack.c.h.b16 %v3236
  %v3984 = vunpack.c.l.b16 %v3237
  %v3985 = vunpack.c.h.b16 %v3237
  %v3986 = vunpack.c.l.b16 %v3238
  %v3987 = vunpack.c.h.b16 %v3238
  %v3988 = vunpack.c.l.b16 %v3239
  %v3989 = vunpack.c.h.b16 %v3239
  %v3990 = vunpack.c.l.b16 %v3240
  %v3991 = vunpack.c.h.b16 %v3240
  %v3992 = vunpack.c.l.b16 %v3241
  %v3993 = vunpack.c.h.b16 %v3241
  %v3994 = vunpack.c.l.b16 %v3242
  %v3995 = vunpack.c.h.b16 %v3242
  %v3996 = vunpack.c.l.b16 %v3243
  %v3997 = vunpack.c.h.b16 %v3243
  %v3998 = vunpack.c.l.b16 %v3244
  %v3999 = vunpack.c.h.b16 %v3244
  %v4000 = vunpack.c.l.b16 %v3245
  %v4001 = vunpack.c.h.b16 %v3245
  %v4002 = vunpack.c.l.b16 %v3246
  %v4003 = vunpack.c.h.b16 %v3246
  %v4004 = vunpack.c.l.b16 %v3247
  %v4005 = vunpack.c.h.b16 %v3247
  %v4006 = vunpack.c.l.b16 %v3248
  %v4007 = vunpack.c.h.b16 %v3248
  %v4008 = vunpack.c.l.b16 %v3249
  %v4009 = vunpack.c.h.b16 %v3249
  %v4010 = vunpack.c.l.b16 %v3250
  %v4011 = vunpack.c.h.b16 %v3250
  %v4012 = vunpack.c.l.b16 %v3251
  %v4013 = vunpack.c.h.b16 %v3251
  %v4014 = vunpack.c.l.b16 %v3252
  %v4015 = vunpack.c.h.b16 %v3252
  %v4016 = vunpack.c.l.b16 %v3253
  %v4017 = vunpack.c.h.b16 %v3253
  %v4018 = vunpack.c.l.b16 %v3254
  %v4019 = vunpack.c.h.b16 %v3254
  %v4020 = vunpack.c.l.b16 %v3255
  %v4021 = vunpack.c.h.b16 %v3255
  %v4022 = vunpack.c.l.b16 %v3256
  %v4023 = vunpack.c.h.b16 %v3256
  %v4024 = vunpack.c.l.b16 %v3257
  %v4025 = vunpack.c.h.b16 %v3257
  %v4026 = vunpack.c.l.b16 %v3258
  %v4027 = vunpack.c.h.b16 %v3258
  %v4028 = vunpack.c.l.b16 %v3259
  %v4029 = vunpack.c.h.b16 %v3259
  %v4030 = vunpack.c.l.b16 %v3260
  %v4031 = vunpack.c.h.b16 %v3260
  %v4032 = vunpack.c.l.b16 %v3261
  %v4033 = vunpack.c.h.b16 %v3261
  %v4034 = vunpack.c.l.b16 %v3262
  %v4035 = vunpack.c.h.b16 %v3262
  %v4036 = vunpack.c.l.b16 %v3263
  %v4037 = vunpack.c.h.b16 %v3263
  %v4038 = vunpack.c.l.b16 %v3264
  %v4039 = vunpack.c.h.b16 %v3264
  %v4040 = vunpack.c.l.b16 %v3265
  %v4041 = vunpack.c.h.b16 %v3265
  %v4042 = vunpack.c.l.b16 %v3266
  %v4043 = vunpack.c.h.b16 %v3266
  %v4044 = vunpack.c.l.b16 %v3267
  %v4045 = vunpack.c.h.b16 %v3267
  %v4046 = vpack.c.b16 %v3538, %v3534
  %v4047 = vpack.c.b16 %v3539, %v3535
  %v4048 = vpack.c.b16 %v3540, %v3536
  %v4049 = vpack.c.b16 %v3541, %v3537
  %v4050 = vpack.c.b16 %v3546, %v3542
  %v4051 = vpack.c.b16 %v3547, %v3543
  %v4052 = vpack.c.b16 %v3548, %v3544
  %v4053 = vpack.c.b16 %v3549, %v3545
  %v4054 = vpack.c.b16 %v3554, %v3550
  %v4055 = vpack.c.b16 %v3555, %v3551
  %v4056 = vpack.c.b16 %v3556, %v3552
  %v4057 = vpack.c.b16 %v3557, %v3553
  %v4058 = vpack.c.b16 %v3562, %v3558
  %v4059 = vpack.c.b16 %v3563, %v3559
  %v4060 = vpack.c.b16 %v3564, %v3560
  %v4061 = vpack.c.b16 %v3565, %v3561
  %v4062 = vpack.c.b16 %v3570, %v3566
  %v4063 = vpack.c.b16 %v3571, %v3567
  %v4064 = vpack.c.b16 %v3572, %v3568
  %v4065 = vpack.c.b16 %v3573, %v3569
  %v4066 = vpack.c.b16 %v3578, %v3574
  %v4067 = vpack.c.b16 %v3579, %v3575
  %v4068 = vpack.c.b16 %v3580, %v3576
  %v4069 = vpack.c.b16 %v3581, %v3577
  %v4070 = vpack.c.b16 %v3586, %v3582
  %v4071 = vpack.c.b16 %v3587, %v3583
  %v4072 = vpack.c.b16 %v3588, %v3584
  %v4073 = vpack.c.b16 %v3589, %v3585
  %v4074 = vpack.c.b16 %v3594, %v3590
  %v4075 = vpack.c.b16 %v3595, %v3591
  %v4076 = vpack.c.b16 %v3596, %v3592
  %v4077 = vpack.c.b16 %v3597, %v3593
  %v4078 = vpack.c.b16 %v3602, %v3598
  %v4079 = vpack.c.b16 %v3603, %v3599
  %v4080 = vpack.c.b16 %v3604, %v3600
  %v4081 = vpack.c.b16 %v3605, %v3601
  %v4082 = vpack.c.b16 %v3610, %v3606
  %v4083 = vpack.c.b16 %v3611, %v3607
  %v4084 = vpack.c.b16 %v3612, %v3608
  %v4085 = vpack.c.b16 %v3613, %v3609
  %v4086 = vpack.c.b16 %v3618, %v3614
  %v4087 = vpack.c.b16 %v3619, %v3615
  %v4088 = vpack.c.b16 %v3620, %v3616
  %v4089 = vpack.c.b16 %v3621, %v3617
  %v4090 = vpack.c.b16 %v3626, %v3622
  %v4091 = vpack.c.b16 %v3627, %v3623
  %v4092 = vpack.c.b16 %v3628, %v3624
  %v4093 = vpack.c.b16 %v3629, %v3625
  %v4094 = vpack.c.b16 %v3634, %v3630
  %v4095 = vpack.c.b16 %v3635, %v3631
  %v4096 = vpack.c.b16 %v3636, %v3632
  %v4097 = vpack.c.b16 %v3637, %v3633
  %v4098 = vpack.c.b16 %v3642, %v3638
  %v4099 = vpack.c.b16 %v3643, %v3639
  %v4100 = vpack.c.b16 %v3644, %v3640
  %v4101 = vpack.c.b16 %v3645, %v3641
  %v4102 = vpack.c.b16 %v3650, %v3646
  %v4103 = vpack.c.b16 %v3651, %v3647
  %v4104 = vpack.c.b16 %v3652, %v3648
  %v4105 = vpack.c.b16 %v3653, %v3649
  %v4106 = vpack.c.b16 %v3658, %v3654
  %v4107 = vpack.c.b16 %v3659, %v3655
  %v4108 = vpack.c.b16 %v3660, %v3656
  %v4109 = vpack.c.b16 %v3661, %v3657
  %v4110 = vpack.c.b16 %v3666, %v3662
  %v4111 = vpack.c.b16 %v3667, %v3663
  %v4112 = vpack.c.b16 %v3668, %v3664
  %v4113 = vpack.c.b16 %v3669, %v3665
  %v4114 = vpack.c.b16 %v3674, %v3670
  %v4115 = vpack.c.b16 %v3675, %v3671
  %v4116 = vpack.c.b16 %v3676, %v3672
  %v4117 = vpack.c.b16 %v3677, %v3673
  %v4118 = vpack.c.b16 %v3682, %v3678
  %v4119 = vpack.c.b16 %v3683, %v3679
  %v4120 = vpack.c.b16 %v3684, %v3680
  %v4121 = vpack.c.b16 %v3685, %v3681
  %v4122 = vpack.c.b16 %v3690, %v3686
  %v4123 = vpack.c.b16 %v3691, %v3687
  %v4124 = vpack.c.b16 %v3692, %v3688
  %v4125 = vpack.c.b16 %v3693, %v3689
  %v4126 = vpack.c.b16 %v3698, %v3694
  %v4127 = vpack.c.b16 %v3699, %v3695
  %v4128 = vpack.c.b16 %v3700, %v3696
  %v4129 = vpack.c.b16 %v3701, %v3697
  %v4130 = vpack.c.b16 %v3706, %v3702
  %v4131 = vpack.c.b16 %v3707, %v3703
  %v4132 = vpack.c.b16 %v3708, %v3704
  %v4133 = vpack.c.b16 %v3709, %v3705
  %v4134 = vpack.c.b16 %v3714, %v3710
  %v4135 = vpack.c.b16 %v3715, %v3711
  %v4136 = vpack.c.b16 %v3716, %v3712
  %v4137 = vpack.c.b16 %v3717, %v3713
  %v4138 = vpack.c.b16 %v3722, %v3718
  %v4139 = vpack.c.b16 %v3723, %v3719
  %v4140 = vpack.c.b16 %v3724, %v3720
  %v4141 = vpack.c.b16 %v3725, %v3721
  %v4142 = vpack.c.b16 %v3730, %v3726
  %v4143 = vpack.c.b16 %v3731, %v3727
  %v4144 = vpack.c.b16 %v3732, %v3728
  %v4145 = vpack.c.b16 %v3733, %v3729
  %v4146 = vpack.c.b16 %v3738, %v3734
  %v4147 = vpack.c.b16 %v3739, %v3735
  %v4148 = vpack.c.b16 %v3740, %v3736
  %v4149 = vpack.c.b16 %v3741, %v3737
  %v4150 = vpack.c.b16 %v3746, %v3742
  %v4151 = vpack.c.b16 %v3747, %v3743
  %v4152 = vpack.c.b16 %v3748, %v3744
  %v4153 = vpack.c.b16 %v3749, %v3745
  %v4154 = vpack.c.b16 %v3754, %v3750
  %v4155 = vpack.c.b16 %v3755, %v3751
  %v4156 = vpack.c.b16 %v3756, %v3752
  %v4157 = vpack.c.b16 %v3757, %v3753
  %v4158 = vpack.c.b16 %v3762, %v3758
  %v4159 = vpack.c.b16 %v3763, %v3759
  %v4160 = vpack.c.b16 %v3764, %v3760
  %v4161 = vpack.c.b16 %v3765, %v3761
  %v4162 = vpack.c.b16 %v3770, %v3766
  %v4163 = vpack.c.b16 %v3771, %v3767
  %v4164 = vpack.c.b16 %v3772, %v3768
  %v4165 = vpack.c.b16 %v3773, %v3769
  %v4166 = vpack.c.b16 %v3778, %v3774
  %v4167 = vpack.c.b16 %v3779, %v3775
  %v4168 = vpack.c.b16 %v3780, %v3776
  %v4169 = vpack.c.b16 %v3781, %v3777
  %v4170 = vpack.c.b16 %v3786, %v3782
  %v4171 = vpack.c.b16 %v3787, %v3783
  %v4172 = vpack.c.b16 %v3788, %v3784
  %v4173 = vpack.c.b16 %v3789, %v3785
  %v4174 = vpack.c.b16 %v3794, %v3790
  %v4175 = vpack.c.b16 %v3795, %v3791
  %v4176 = vpack.c.b16 %v3796, %v3792
  %v4177 = vpack.c.b16 %v3797, %v3793
  %v4178 = vpack.c.b16 %v3802, %v3798
  %v4179 = vpack.c.b16 %v3803, %v3799
  %v4180 = vpack.c.b16 %v3804, %v3800
  %v4181 = vpack.c.b16 %v3805, %v3801
  %v4182 = vpack.c.b16 %v3810, %v3806
  %v4183 = vpack.c.b16 %v3811, %v3807
  %v4184 = vpack.c.b16 %v3812, %v3808
  %v4185 = vpack.c.b16 %v3813, %v3809
  %v4186 = vpack.c.b16 %v3818, %v3814
  %v4187 = vpack.c.b16 %v3819, %v3815
  %v4188 = vpack.c.b16 %v3820, %v3816
  %v4189 = vpack.c.b16 %v3821, %v3817
  %v4190 = vpack.c.b16 %v3826, %v3822
  %v4191 = vpack.c.b16 %v3827, %v3823
  %v4192 = vpack.c.b16 %v3828, %v3824
  %v4193 = vpack.c.b16 %v3829, %v3825
  %v4194 = vpack.c.b16 %v3834, %v3830
  %v4195 = vpack.c.b16 %v3835, %v3831
  %v4196 = vpack.c.b16 %v3836, %v3832
  %v4197 = vpack.c.b16 %v3837, %v3833
  %v4198 = vpack.c.b16 %v3842, %v3838
  %v4199 = vpack.c.b16 %v3843, %v3839
  %v4200 = vpack.c.b16 %v3844, %v3840
  %v4201 = vpack.c.b16 %v3845, %v3841
  %v4202 = vpack.c.b16 %v3850, %v3846
  %v4203 = vpack.c.b16 %v3851, %v3847
  %v4204 = vpack.c.b16 %v3852, %v3848
  %v4205 = vpack.c.b16 %v3853, %v3849
  %v4206 = vpack.c.b16 %v3858, %v3854
  %v4207 = vpack.c.b16 %v3859, %v3855
  %v4208 = vpack.c.b16 %v3860, %v3856
  %v4209 = vpack.c.b16 %v3861, %v3857
  %v4210 = vpack.c.b16 %v3866, %v3862
  %v4211 = vpack.c.b16 %v3867, %v3863
  %v4212 = vpack.c.b16 %v3868, %v3864
  %v4213 = vpack.c.b16 %v3869, %v3865
  %v4214 = vpack.c.b16 %v3874, %v3870
  %v4215 = vpack.c.b16 %v3875, %v3871
  %v4216 = vpack.c.b16 %v3876, %v3872
  %v4217 = vpack.c.b16 %v3877, %v3873
  %v4218 = vpack.c.b16 %v3882, %v3878
  %v4219 = vpack.c.b16 %v3883, %v3879
  %v4220 = vpack.c.b16 %v3884, %v3880
  %v4221 = vpack.c.b16 %v3885, %v3881
  %v4222 = vpack.c.b16 %v3890, %v3886
  %v4223 = vpack.c.b16 %v3891, %v3887
  %v4224 = vpack.c.b16 %v3892, %v3888
  %v4225 = vpack.c.b16 %v3893, %v3889
  %v4226 = vpack.c.b16 %v3898, %v3894
  %v4227 = vpack.c.b16 %v3899, %v3895
  %v4228 = vpack.c.b16 %v3900, %v3896
  %v4229 = vpack.c.b16 %v3901, %v3897
  %v4230 = vpack.c.b16 %v3906, %v3902
  %v4231 = vpack.c.b16 %v3907, %v3903
  %v4232 = vpack.c.b16 %v3908, %v3904
  %v4233 = vpack.c.b16 %v3909, %v3905
  %v4234 = vpack.c.b16 %v3914, %v3910
  %v4235 = vpack.c.b16 %v3915, %v3911
  %v4236 = vpack.c.b16 %v3916, %v3912
  %v4237 = vpack.c.b16 %v3917, %v3913
  %v4238 = vpack.c.b16 %v3922, %v3918
  %v4239 = vpack.c.b16 %v3923, %v3919
  %v4240 = vpack.c.b16 %v3924, %v3920
  %v4241 = vpack.c.b16 %v3925, %v3921
  %v4242 = vpack.c.b16 %v3930, %v3926
  %v4243 = vpack.c.b16 %v3931, %v3927
  %v4244 = vpack.c.b16 %v3932, %v3928
  %v4245 = vpack.c.b16 %v3933, %v3929
  %v4246 = vpack.c.b16 %v3938, %v3934
  %v4247 = vpack.c.b16 %v3939, %v3935
  %v4248 = vpack.c.b16 %v3940, %v3936
  %v4249 = vpack.c.b16 %v3941, %v3937
  %v4250 = vpack.c.b16 %v3946, %v3942
  %v4251 = vpack.c.b16 %v3947, %v3943
  %v4252 = vpack.c.b16 %v3948, %v3944
  %v4253 = vpack.c.b16 %v3949, %v3945
  %v4254 = vpack.c.b16 %v3954, %v3950
  %v4255 = vpack.c.b16 %v3955, %v3951
  %v4256 = vpack.c.b16 %v3956, %v3952
  %v4257 = vpack.c.b16 %v3957, %v3953
  %v4258 = vpack.c.b16 %v3962, %v3958
  %v4259 = vpack.c.b16 %v3963, %v3959
  %v4260 = vpack.c.b16 %v3964, %v3960
  %v4261 = vpack.c.b16 %v3965, %v3961
  %v4262 = vpack.c.b16 %v3970, %v3966
  %v4263 = vpack.c.b16 %v3971, %v3967
  %v4264 = vpack.c.b16 %v3972, %v3968
  %v4265 = vpack.c.b16 %v3973, %v3969
  %v4266 = vpack.c.b16 %v3978, %v3974
  %v4267 = vpack.c.b16 %v3979, %v3975
  %v4268 = vpack.c.b16 %v3980, %v3976
  %v4269 = vpack.c.b16 %v3981, %v3977
  %v4270 = vpack.c.b16 %v3986, %v3982
  %v4271 = vpack.c.b16 %v3987, %v3983
  %v4272 = vpack.c.b16 %v3988, %v3984
  %v4273 = vpack.c.b16 %v3989, %v3985
  %v4274 = vpack.c.b16 %v3994, %v3990
  %v4275 = vpack.c.b16 %v3995, %v3991
  %v4276 = vpack.c.b16 %v3996, %v3992
  %v4277 = vpack.c.b16 %v3997, %v3993
  %v4278 = vpack.c.b16 %v4002, %v3998
  %v4279 = vpack.c.b16 %v4003, %v3999
  %v4280 = vpack.c.b16 %v4004, %v4000
  %v4281 = vpack.c.b16 %v4005, %v4001
  %v4282 = vpack.c.b16 %v4010, %v4006
  %v4283 = vpack.c.b16 %v4011, %v4007
  %v4284 = vpack.c.b16 %v4012, %v4008
  %v4285 = vpack.c.b16 %v4013, %v4009
  %v4286 = vpack.c.b16 %v4018, %v4014
  %v4287 = vpack.c.b16 %v4019, %v4015
  %v4288 = vpack.c.b16 %v4020, %v4016
  %v4289 = vpack.c.b16 %v4021, %v4017
  %v4290 = vpack.c.b16 %v4026, %v4022
  %v4291 = vpack.c.b16 %v4027, %v4023
  %v4292 = vpack.c.b16 %v4028, %v4024
  %v4293 = vpack.c.b16 %v4029, %v4025
  %v4294 = vpack.c.b16 %v4034, %v4030
  %v4295 = vpack.c.b16 %v4035, %v4031
  %v4296 = vpack.c.b16 %v4036, %v4032
  %v4297 = vpack.c.b16 %v4037, %v4033
  %v4298 = vpack.c.b16 %v4042, %v4038
  %v4299 = vpack.c.b16 %v4043, %v4039
  %v4300 = vpack.c.b16 %v4044, %v4040
  %v4301 = vpack.c.b16 %v4045, %v4041
  %4558 = vmatpush.bf16.msra.mxu0 %v4074
  %4559 = vmatpush.bf16.msra.mxu0 %v4070
  %4560 = vmatpush.bf16.msra.mxu0 %v4066
  %4561 = vmatpush.bf16.msra.mxu0 %v4062
  %4562 = vmatpush.bf16.msra.mxu0 %v4058
  %4563 = vmatpush.bf16.msra.mxu0 %v4054
  %4564 = vmatpush.bf16.msra.mxu0 %v4050
  %4565 = vmatpush.bf16.msra.mxu0 %v4046
  %4566 = vmatmul.bf16.gmra.mxu0 %v3004
  %v4567 = vpop.f32.mrf.mxu0
  %v4568 = vadd.f32 %v3270, %v4567
  %v4569 = vpop.f32.mrf.mxu0
  %4570 = vdwg.mxu0
  %4571 = vmatpush.bf16.msra.mxu0 %v4106
  %4572 = vmatpush.bf16.msra.mxu0 %v4102
  %4573 = vmatpush.bf16.msra.mxu0 %v4098
  %4574 = vmatpush.bf16.msra.mxu0 %v4094
  %4575 = vmatpush.bf16.msra.mxu0 %v4090
  %4576 = vmatpush.bf16.msra.mxu0 %v4086
  %4577 = vmatpush.bf16.msra.mxu0 %v4082
  %4578 = vmatpush.bf16.msra.mxu0 %v4078
  %4579 = vmatmul.bf16.gmra.mxu0 %v3005
  %v4580 = vpop.f32.mrf.mxu0
  %v4581 = vadd.f32 %v4568, %v4580
  %v4582 = vpop.f32.mrf.mxu0
  %4583 = vdwg.mxu0
  %4584 = vmatpush.bf16.msra.mxu0 %v4138
  %4585 = vmatpush.bf16.msra.mxu0 %v4134
  %4586 = vmatpush.bf16.msra.mxu0 %v4130
  %4587 = vmatpush.bf16.msra.mxu0 %v4126
  %4588 = vmatpush.bf16.msra.mxu0 %v4122
  %4589 = vmatpush.bf16.msra.mxu0 %v4118
  %4590 = vmatpush.bf16.msra.mxu0 %v4114
  %4591 = vmatpush.bf16.msra.mxu0 %v4110
  %4592 = vmatmul.bf16.gmra.mxu0 %v3006
  %v4593 = vpop.f32.mrf.mxu0
  %v4594 = vadd.f32 %v4581, %v4593
  %v4595 = vpop.f32.mrf.mxu0
  %4596 = vdwg.mxu0
  %4597 = vmatpush.bf16.msra.mxu0 %v4170
  %4598 = vmatpush.bf16.msra.mxu0 %v4166
  %4599 = vmatpush.bf16.msra.mxu0 %v4162
  %4600 = vmatpush.bf16.msra.mxu0 %v4158
  %4601 = vmatpush.bf16.msra.mxu0 %v4154
  %4602 = vmatpush.bf16.msra.mxu0 %v4150
  %4603 = vmatpush.bf16.msra.mxu0 %v4146
  %4604 = vmatpush.bf16.msra.mxu0 %v4142
  %4605 = vmatmul.bf16.gmra.mxu0 %v3007
  %v4606 = vpop.f32.mrf.mxu0
  %v4607 = vadd.f32 %v4594, %v4606
  %v4608 = vpop.f32.mrf.mxu0
  %4609 = vdwg.mxu0
  %4610 = vmatpush.bf16.msra.mxu0 %v4202
  %4611 = vmatpush.bf16.msra.mxu0 %v4198
  %4612 = vmatpush.bf16.msra.mxu0 %v4194
  %4613 = vmatpush.bf16.msra.mxu0 %v4190
  %4614 = vmatpush.bf16.msra.mxu0 %v4186
  %4615 = vmatpush.bf16.msra.mxu0 %v4182
  %4616 = vmatpush.bf16.msra.mxu0 %v4178
  %4617 = vmatpush.bf16.msra.mxu0 %v4174
  %4618 = vmatmul.bf16.gmra.mxu0 %v3008
  %v4619 = vpop.f32.mrf.mxu0
  %v4620 = vadd.f32 %v4607, %v4619
  %v4621 = vpop.f32.mrf.mxu0
  %4622 = vdwg.mxu0
  %4623 = vmatpush.bf16.msra.mxu0 %v4234
  %4624 = vmatpush.bf16.msra.mxu0 %v4230
  %4625 = vmatpush.bf16.msra.mxu0 %v4226
  %4626 = vmatpush.bf16.msra.mxu0 %v4222
  %4627 = vmatpush.bf16.msra.mxu0 %v4218
  %4628 = vmatpush.bf16.msra.mxu0 %v4214
  %4629 = vmatpush.bf16.msra.mxu0 %v4210
  %4630 = vmatpush.bf16.msra.mxu0 %v4206
  %4631 = vmatmul.bf16.gmra.mxu0 %v3009
  %v4632 = vpop.f32.mrf.mxu0
  %v4633 = vadd.f32 %v4620, %v4632
  %v4634 = vpop.f32.mrf.mxu0
  %4635 = vdwg.mxu0
  %4636 = vmatpush.bf16.msra.mxu0 %v4266
  %4637 = vmatpush.bf16.msra.mxu0 %v4262
  %4638 = vmatpush.bf16.msra.mxu0 %v4258
  %4639 = vmatpush.bf16.msra.mxu0 %v4254
  %4640 = vmatpush.bf16.msra.mxu0 %v4250
  %4641 = vmatpush.bf16.msra.mxu0 %v4246
  %4642 = vmatpush.bf16.msra.mxu0 %v4242
  %4643 = vmatpush.bf16.msra.mxu0 %v4238
  %4644 = vmatmul.bf16.gmra.mxu0 %v3010
  %v4645 = vpop.f32.mrf.mxu0
  %v4646 = vadd.f32 %v4633, %v4645
  %v4647 = vpop.f32.mrf.mxu0
  %4648 = vdwg.mxu0
  %4649 = vmatpush.bf16.msra.mxu0 %v4298
  %4650 = vmatpush.bf16.msra.mxu0 %v4294
  %4651 = vmatpush.bf16.msra.mxu0 %v4290
  %4652 = vmatpush.bf16.msra.mxu0 %v4286
  %4653 = vmatpush.bf16.msra.mxu0 %v4282
  %4654 = vmatpush.bf16.msra.mxu0 %v4278
  %4655 = vmatpush.bf16.msra.mxu0 %v4274
  %4656 = vmatpush.bf16.msra.mxu0 %v4270
  %4657 = vmatmul.bf16.gmra.mxu0 %v3011
  %v4658 = vpop.f32.mrf.mxu0
  %v4659 = vadd.f32 %v4646, %v4658
  %v4660 = vpop.f32.mrf.mxu0
  %4661 = vdwg.mxu0
  %4662 = vmatpush.bf16.msra.mxu0 %v4075
  %4663 = vmatpush.bf16.msra.mxu0 %v4071
  %4664 = vmatpush.bf16.msra.mxu0 %v4067
  %4665 = vmatpush.bf16.msra.mxu0 %v4063
  %4666 = vmatpush.bf16.msra.mxu0 %v4059
  %4667 = vmatpush.bf16.msra.mxu0 %v4055
  %4668 = vmatpush.bf16.msra.mxu0 %v4051
  %4669 = vmatpush.bf16.msra.mxu0 %v4047
  %4670 = vmatmul.bf16.gmra.mxu0 %v3004
  %v4671 = vpop.f32.mrf.mxu0
  %v4672 = vadd.f32 %v3271, %v4671
  %v4673 = vpop.f32.mrf.mxu0
  %4674 = vdwg.mxu0
  %4675 = vmatpush.bf16.msra.mxu0 %v4107
  %4676 = vmatpush.bf16.msra.mxu0 %v4103
  %4677 = vmatpush.bf16.msra.mxu0 %v4099
  %4678 = vmatpush.bf16.msra.mxu0 %v4095
  %4679 = vmatpush.bf16.msra.mxu0 %v4091
  %4680 = vmatpush.bf16.msra.mxu0 %v4087
  %4681 = vmatpush.bf16.msra.mxu0 %v4083
  %4682 = vmatpush.bf16.msra.mxu0 %v4079
  %4683 = vmatmul.bf16.gmra.mxu0 %v3005
  %v4684 = vpop.f32.mrf.mxu0
  %v4685 = vadd.f32 %v4672, %v4684
  %v4686 = vpop.f32.mrf.mxu0
  %4687 = vdwg.mxu0
  %4688 = vmatpush.bf16.msra.mxu0 %v4139
  %4689 = vmatpush.bf16.msra.mxu0 %v4135
  %4690 = vmatpush.bf16.msra.mxu0 %v4131
  %4691 = vmatpush.bf16.msra.mxu0 %v4127
  %4692 = vmatpush.bf16.msra.mxu0 %v4123
  %4693 = vmatpush.bf16.msra.mxu0 %v4119
  %4694 = vmatpush.bf16.msra.mxu0 %v4115
  %4695 = vmatpush.bf16.msra.mxu0 %v4111
  %4696 = vmatmul.bf16.gmra.mxu0 %v3006
  %v4697 = vpop.f32.mrf.mxu0
  %v4698 = vadd.f32 %v4685, %v4697
  %v4699 = vpop.f32.mrf.mxu0
  %4700 = vdwg.mxu0
  %4701 = vmatpush.bf16.msra.mxu0 %v4171
  %4702 = vmatpush.bf16.msra.mxu0 %v4167
  %4703 = vmatpush.bf16.msra.mxu0 %v4163
  %4704 = vmatpush.bf16.msra.mxu0 %v4159
  %4705 = vmatpush.bf16.msra.mxu0 %v4155
  %4706 = vmatpush.bf16.msra.mxu0 %v4151
  %4707 = vmatpush.bf16.msra.mxu0 %v4147
  %4708 = vmatpush.bf16.msra.mxu0 %v4143
  %4709 = vmatmul.bf16.gmra.mxu0 %v3007
  %v4710 = vpop.f32.mrf.mxu0
  %v4711 = vadd.f32 %v4698, %v4710
  %v4712 = vpop.f32.mrf.mxu0
  %4713 = vdwg.mxu0
  %4714 = vmatpush.bf16.msra.mxu0 %v4203
  %4715 = vmatpush.bf16.msra.mxu0 %v4199
  %4716 = vmatpush.bf16.msra.mxu0 %v4195
  %4717 = vmatpush.bf16.msra.mxu0 %v4191
  %4718 = vmatpush.bf16.msra.mxu0 %v4187
  %4719 = vmatpush.bf16.msra.mxu0 %v4183
  %4720 = vmatpush.bf16.msra.mxu0 %v4179
  %4721 = vmatpush.bf16.msra.mxu0 %v4175
  %4722 = vmatmul.bf16.gmra.mxu0 %v3008
  %v4723 = vpop.f32.mrf.mxu0
  %v4724 = vadd.f32 %v4711, %v4723
  %v4725 = vpop.f32.mrf.mxu0
  %4726 = vdwg.mxu0
  %4727 = vmatpush.bf16.msra.mxu0 %v4235
  %4728 = vmatpush.bf16.msra.mxu0 %v4231
  %4729 = vmatpush.bf16.msra.mxu0 %v4227
  %4730 = vmatpush.bf16.msra.mxu0 %v4223
  %4731 = vmatpush.bf16.msra.mxu0 %v4219
  %4732 = vmatpush.bf16.msra.mxu0 %v4215
  %4733 = vmatpush.bf16.msra.mxu0 %v4211
  %4734 = vmatpush.bf16.msra.mxu0 %v4207
  %4735 = vmatmul.bf16.gmra.mxu0 %v3009
  %v4736 = vpop.f32.mrf.mxu0
  %v4737 = vadd.f32 %v4724, %v4736
  %v4738 = vpop.f32.mrf.mxu0
  %4739 = vdwg.mxu0
  %4740 = vmatpush.bf16.msra.mxu0 %v4267
  %4741 = vmatpush.bf16.msra.mxu0 %v4263
  %4742 = vmatpush.bf16.msra.mxu0 %v4259
  %4743 = vmatpush.bf16.msra.mxu0 %v4255
  %4744 = vmatpush.bf16.msra.mxu0 %v4251
  %4745 = vmatpush.bf16.msra.mxu0 %v4247
  %4746 = vmatpush.bf16.msra.mxu0 %v4243
  %4747 = vmatpush.bf16.msra.mxu0 %v4239
  %4748 = vmatmul.bf16.gmra.mxu0 %v3010
  %v4749 = vpop.f32.mrf.mxu0
  %v4750 = vadd.f32 %v4737, %v4749
  %v4751 = vpop.f32.mrf.mxu0
  %4752 = vdwg.mxu0
  %4753 = vmatpush.bf16.msra.mxu0 %v4299
  %4754 = vmatpush.bf16.msra.mxu0 %v4295
  %4755 = vmatpush.bf16.msra.mxu0 %v4291
  %4756 = vmatpush.bf16.msra.mxu0 %v4287
  %4757 = vmatpush.bf16.msra.mxu0 %v4283
  %4758 = vmatpush.bf16.msra.mxu0 %v4279
  %4759 = vmatpush.bf16.msra.mxu0 %v4275
  %4760 = vmatpush.bf16.msra.mxu0 %v4271
  %4761 = vmatmul.bf16.gmra.mxu0 %v3011
  %v4762 = vpop.f32.mrf.mxu0
  %v4763 = vadd.f32 %v4750, %v4762
  %v4764 = vpop.f32.mrf.mxu0
  %4765 = vdwg.mxu0
  %4766 = vmatpush.bf16.msra.mxu0 %v4076
  %4767 = vmatpush.bf16.msra.mxu0 %v4072
  %4768 = vmatpush.bf16.msra.mxu0 %v4068
  %4769 = vmatpush.bf16.msra.mxu0 %v4064
  %4770 = vmatpush.bf16.msra.mxu0 %v4060
  %4771 = vmatpush.bf16.msra.mxu0 %v4056
  %4772 = vmatpush.bf16.msra.mxu0 %v4052
  %4773 = vmatpush.bf16.msra.mxu0 %v4048
  %4774 = vmatmul.bf16.gmra.mxu0 %v3004
  %v4775 = vpop.f32.mrf.mxu0
  %v4776 = vadd.f32 %v3272, %v4775
  %v4777 = vpop.f32.mrf.mxu0
  %4778 = vdwg.mxu0
  %4779 = vmatpush.bf16.msra.mxu0 %v4108
  %4780 = vmatpush.bf16.msra.mxu0 %v4104
  %4781 = vmatpush.bf16.msra.mxu0 %v4100
  %4782 = vmatpush.bf16.msra.mxu0 %v4096
  %4783 = vmatpush.bf16.msra.mxu0 %v4092
  %4784 = vmatpush.bf16.msra.mxu0 %v4088
  %4785 = vmatpush.bf16.msra.mxu0 %v4084
  %4786 = vmatpush.bf16.msra.mxu0 %v4080
  %4787 = vmatmul.bf16.gmra.mxu0 %v3005
  %v4788 = vpop.f32.mrf.mxu0
  %v4789 = vadd.f32 %v4776, %v4788
  %v4790 = vpop.f32.mrf.mxu0
  %4791 = vdwg.mxu0
  %4792 = vmatpush.bf16.msra.mxu0 %v4140
  %4793 = vmatpush.bf16.msra.mxu0 %v4136
  %4794 = vmatpush.bf16.msra.mxu0 %v4132
  %4795 = vmatpush.bf16.msra.mxu0 %v4128
  %4796 = vmatpush.bf16.msra.mxu0 %v4124
  %4797 = vmatpush.bf16.msra.mxu0 %v4120
  %4798 = vmatpush.bf16.msra.mxu0 %v4116
  %4799 = vmatpush.bf16.msra.mxu0 %v4112
  %4800 = vmatmul.bf16.gmra.mxu0 %v3006
  %v4801 = vpop.f32.mrf.mxu0
  %v4802 = vadd.f32 %v4789, %v4801
  %v4803 = vpop.f32.mrf.mxu0
  %4804 = vdwg.mxu0
  %4805 = vmatpush.bf16.msra.mxu0 %v4172
  %4806 = vmatpush.bf16.msra.mxu0 %v4168
  %4807 = vmatpush.bf16.msra.mxu0 %v4164
  %4808 = vmatpush.bf16.msra.mxu0 %v4160
  %4809 = vmatpush.bf16.msra.mxu0 %v4156
  %4810 = vmatpush.bf16.msra.mxu0 %v4152
  %4811 = vmatpush.bf16.msra.mxu0 %v4148
  %4812 = vmatpush.bf16.msra.mxu0 %v4144
  %4813 = vmatmul.bf16.gmra.mxu0 %v3007
  %v4814 = vpop.f32.mrf.mxu0
  %v4815 = vadd.f32 %v4802, %v4814
  %v4816 = vpop.f32.mrf.mxu0
  %4817 = vdwg.mxu0
  %4818 = vmatpush.bf16.msra.mxu0 %v4204
  %4819 = vmatpush.bf16.msra.mxu0 %v4200
  %4820 = vmatpush.bf16.msra.mxu0 %v4196
  %4821 = vmatpush.bf16.msra.mxu0 %v4192
  %4822 = vmatpush.bf16.msra.mxu0 %v4188
  %4823 = vmatpush.bf16.msra.mxu0 %v4184
  %4824 = vmatpush.bf16.msra.mxu0 %v4180
  %4825 = vmatpush.bf16.msra.mxu0 %v4176
  %4826 = vmatmul.bf16.gmra.mxu0 %v3008
  %v4827 = vpop.f32.mrf.mxu0
  %v4828 = vadd.f32 %v4815, %v4827
  %v4829 = vpop.f32.mrf.mxu0
  %4830 = vdwg.mxu0
  %4831 = vmatpush.bf16.msra.mxu0 %v4236
  %4832 = vmatpush.bf16.msra.mxu0 %v4232
  %4833 = vmatpush.bf16.msra.mxu0 %v4228
  %4834 = vmatpush.bf16.msra.mxu0 %v4224
  %4835 = vmatpush.bf16.msra.mxu0 %v4220
  %4836 = vmatpush.bf16.msra.mxu0 %v4216
  %4837 = vmatpush.bf16.msra.mxu0 %v4212
  %4838 = vmatpush.bf16.msra.mxu0 %v4208
  %4839 = vmatmul.bf16.gmra.mxu0 %v3009
  %v4840 = vpop.f32.mrf.mxu0
  %v4841 = vadd.f32 %v4828, %v4840
  %v4842 = vpop.f32.mrf.mxu0
  %4843 = vdwg.mxu0
  %4844 = vmatpush.bf16.msra.mxu0 %v4268
  %4845 = vmatpush.bf16.msra.mxu0 %v4264
  %4846 = vmatpush.bf16.msra.mxu0 %v4260
  %4847 = vmatpush.bf16.msra.mxu0 %v4256
  %4848 = vmatpush.bf16.msra.mxu0 %v4252
  %4849 = vmatpush.bf16.msra.mxu0 %v4248
  %4850 = vmatpush.bf16.msra.mxu0 %v4244
  %4851 = vmatpush.bf16.msra.mxu0 %v4240
  %4852 = vmatmul.bf16.gmra.mxu0 %v3010
  %v4853 = vpop.f32.mrf.mxu0
  %v4854 = vadd.f32 %v4841, %v4853
  %v4855 = vpop.f32.mrf.mxu0
  %4856 = vdwg.mxu0
  %4857 = vmatpush.bf16.msra.mxu0 %v4300
  %4858 = vmatpush.bf16.msra.mxu0 %v4296
  %4859 = vmatpush.bf16.msra.mxu0 %v4292
  %4860 = vmatpush.bf16.msra.mxu0 %v4288
  %4861 = vmatpush.bf16.msra.mxu0 %v4284
  %4862 = vmatpush.bf16.msra.mxu0 %v4280
  %4863 = vmatpush.bf16.msra.mxu0 %v4276
  %4864 = vmatpush.bf16.msra.mxu0 %v4272
  %4865 = vmatmul.bf16.gmra.mxu0 %v3011
  %v4866 = vpop.f32.mrf.mxu0
  %v4867 = vadd.f32 %v4854, %v4866
  %v4868 = vpop.f32.mrf.mxu0
  %4869 = vdwg.mxu0
  %4870 = vmatpush.bf16.msra.mxu0 %v4077
  %4871 = vmatpush.bf16.msra.mxu0 %v4073
  %4872 = vmatpush.bf16.msra.mxu0 %v4069
  %4873 = vmatpush.bf16.msra.mxu0 %v4065
  %4874 = vmatpush.bf16.msra.mxu0 %v4061
  %4875 = vmatpush.bf16.msra.mxu0 %v4057
  %4876 = vmatpush.bf16.msra.mxu0 %v4053
  %4877 = vmatpush.bf16.msra.mxu0 %v4049
  %4878 = vmatmul.bf16.gmra.mxu0 %v3004
  %v4879 = vpop.f32.mrf.mxu0
  %v4880 = vadd.f32 %v3273, %v4879
  %v4881 = vpop.f32.mrf.mxu0
  %4882 = vdwg.mxu0
  %4883 = vmatpush.bf16.msra.mxu0 %v4109
  %4884 = vmatpush.bf16.msra.mxu0 %v4105
  %4885 = vmatpush.bf16.msra.mxu0 %v4101
  %4886 = vmatpush.bf16.msra.mxu0 %v4097
  %4887 = vmatpush.bf16.msra.mxu0 %v4093
  %4888 = vmatpush.bf16.msra.mxu0 %v4089
  %4889 = vmatpush.bf16.msra.mxu0 %v4085
  %4890 = vmatpush.bf16.msra.mxu0 %v4081
  %4891 = vmatmul.bf16.gmra.mxu0 %v3005
  %v4892 = vpop.f32.mrf.mxu0
  %v4893 = vadd.f32 %v4880, %v4892
  %v4894 = vpop.f32.mrf.mxu0
  %4895 = vdwg.mxu0
  %4896 = vmatpush.bf16.msra.mxu0 %v4141
  %4897 = vmatpush.bf16.msra.mxu0 %v4137
  %4898 = vmatpush.bf16.msra.mxu0 %v4133
  %4899 = vmatpush.bf16.msra.mxu0 %v4129
  %4900 = vmatpush.bf16.msra.mxu0 %v4125
  %4901 = vmatpush.bf16.msra.mxu0 %v4121
  %4902 = vmatpush.bf16.msra.mxu0 %v4117
  %4903 = vmatpush.bf16.msra.mxu0 %v4113
  %4904 = vmatmul.bf16.gmra.mxu0 %v3006
  %v4905 = vpop.f32.mrf.mxu0
  %v4906 = vadd.f32 %v4893, %v4905
  %v4907 = vpop.f32.mrf.mxu0
  %4908 = vdwg.mxu0
  %4909 = vmatpush.bf16.msra.mxu0 %v4173
  %4910 = vmatpush.bf16.msra.mxu0 %v4169
  %4911 = vmatpush.bf16.msra.mxu0 %v4165
  %4912 = vmatpush.bf16.msra.mxu0 %v4161
  %4913 = vmatpush.bf16.msra.mxu0 %v4157
  %4914 = vmatpush.bf16.msra.mxu0 %v4153
  %4915 = vmatpush.bf16.msra.mxu0 %v4149
  %4916 = vmatpush.bf16.msra.mxu0 %v4145
  %4917 = vmatmul.bf16.gmra.mxu0 %v3007
  %v4918 = vpop.f32.mrf.mxu0
  %v4919 = vadd.f32 %v4906, %v4918
  %v4920 = vpop.f32.mrf.mxu0
  %4921 = vdwg.mxu0
  %4922 = vmatpush.bf16.msra.mxu0 %v4205
  %4923 = vmatpush.bf16.msra.mxu0 %v4201
  %4924 = vmatpush.bf16.msra.mxu0 %v4197
  %4925 = vmatpush.bf16.msra.mxu0 %v4193
  %4926 = vmatpush.bf16.msra.mxu0 %v4189
  %4927 = vmatpush.bf16.msra.mxu0 %v4185
  %4928 = vmatpush.bf16.msra.mxu0 %v4181
  %4929 = vmatpush.bf16.msra.mxu0 %v4177
  %4930 = vmatmul.bf16.gmra.mxu0 %v3008
  %v4931 = vpop.f32.mrf.mxu0
  %v4932 = vadd.f32 %v4919, %v4931
  %v4933 = vpop.f32.mrf.mxu0
  %4934 = vdwg.mxu0
  %4935 = vmatpush.bf16.msra.mxu0 %v4237
  %4936 = vmatpush.bf16.msra.mxu0 %v4233
  %4937 = vmatpush.bf16.msra.mxu0 %v4229
  %4938 = vmatpush.bf16.msra.mxu0 %v4225
  %4939 = vmatpush.bf16.msra.mxu0 %v4221
  %4940 = vmatpush.bf16.msra.mxu0 %v4217
  %4941 = vmatpush.bf16.msra.mxu0 %v4213
  %4942 = vmatpush.bf16.msra.mxu0 %v4209
  %4943 = vmatmul.bf16.gmra.mxu0 %v3009
  %v4944 = vpop.f32.mrf.mxu0
  %v4945 = vadd.f32 %v4932, %v4944
  %v4946 = vpop.f32.mrf.mxu0
  %4947 = vdwg.mxu0
  %4948 = vmatpush.bf16.msra.mxu0 %v4269
  %4949 = vmatpush.bf16.msra.mxu0 %v4265
  %4950 = vmatpush.bf16.msra.mxu0 %v4261
  %4951 = vmatpush.bf16.msra.mxu0 %v4257
  %4952 = vmatpush.bf16.msra.mxu0 %v4253
  %4953 = vmatpush.bf16.msra.mxu0 %v4249
  %4954 = vmatpush.bf16.msra.mxu0 %v4245
  %4955 = vmatpush.bf16.msra.mxu0 %v4241
  %4956 = vmatmul.bf16.gmra.mxu0 %v3010
  %v4957 = vpop.f32.mrf.mxu0
  %v4958 = vadd.f32 %v4945, %v4957
  %v4959 = vpop.f32.mrf.mxu0
  %4960 = vdwg.mxu0
  %4961 = vmatpush.bf16.msra.mxu0 %v4301
  %4962 = vmatpush.bf16.msra.mxu0 %v4297
  %4963 = vmatpush.bf16.msra.mxu0 %v4293
  %4964 = vmatpush.bf16.msra.mxu0 %v4289
  %4965 = vmatpush.bf16.msra.mxu0 %v4285
  %4966 = vmatpush.bf16.msra.mxu0 %v4281
  %4967 = vmatpush.bf16.msra.mxu0 %v4277
  %4968 = vmatpush.bf16.msra.mxu0 %v4273
  %4969 = vmatmul.bf16.gmra.mxu0 %v3011
  %v4970 = vpop.f32.mrf.mxu0
  %v4971 = vadd.f32 %v4958, %v4970
  %v4972 = vpop.f32.mrf.mxu0
  %4973 = vdwg.mxu0
  %v4974 = vmax.f32 %v4659, 0.0
  %v4975 = vmax.f32 %v4763, 0.0
  %v4976 = vmax.f32 %v4867, 0.0
  %v4977 = vmax.f32 %v4971, 0.0
  %v4978 = vpack.c.bf16 %v4974, %v4974
  %v4979 = vpack.c.bf16 %v4975, %v4975
  %v4980 = vpack.c.bf16 %v4976, %v4976
  %v4981 = vpack.c.bf16 %v4977, %v4977
  %v4982 = vld [vmem:[%s5] sm:$0xf]
  %v4983 = vld [vmem:[%s5 + $0x4] sm:$0xf]
  %v4984 = vld [vmem:[%s5 + $0x8] sm:$0xf]
  %v4985 = vld [vmem:[%s5 + $0xc] sm:$0xf]
  %v4986 = vld [vmem:[%s5 + $0x10] sm:$0xf]
  %v4987 = vld [vmem:[%s5 + $0x14] sm:$0xf]
  %v4988 = vld [vmem:[%s5 + $0x18] sm:$0xf]
  %v4989 = vld [vmem:[%s5 + $0x1c] sm:$0xf]
  %v4990 = vld [vmem:[%s5 + $0x20] sm:$0xf]
  %v4991 = vld [vmem:[%s5 + $0x24] sm:$0xf]
  %v4992 = vld [vmem:[%s5 + $0x28] sm:$0xf]
  %v4993 = vld [vmem:[%s5 + $0x2c] sm:$0xf]
  %v4994 = vld [vmem:[%s5 + $0x30] sm:$0xf]
  %v4995 = vld [vmem:[%s5 + $0x34] sm:$0xf]
  %v4996 = vld [vmem:[%s5 + $0x38] sm:$0xf]
  %v4997 = vld [vmem:[%s5 + $0x3c] sm:$0xf]
  %v4998 = vld [vmem:[%s5 + $0x40] sm:$0xf]
  %v4999 = vld [vmem:[%s5 + $0x44] sm:$0xf]
  %v5000 = vld [vmem:[%s5 + $0x48] sm:$0xf]
  %v5001 = vld [vmem:[%s5 + $0x4c] sm:$0xf]
  %v5002 = vld [vmem:[%s5 + $0x50] sm:$0xf]
  %v5003 = vld [vmem:[%s5 + $0x54] sm:$0xf]
  %v5004 = vld [vmem:[%s5 + $0x58] sm:$0xf]
  %v5005 = vld [vmem:[%s5 + $0x5c] sm:$0xf]
  %v5006 = vld [vmem:[%s5 + $0x60] sm:$0xf]
  %v5007 = vld [vmem:[%s5 + $0x64] sm:$0xf]
  %v5008 = vld [vmem:[%s5 + $0x68] sm:$0xf]
  %v5009 = vld [vmem:[%s5 + $0x6c] sm:$0xf]
  %v5010 = vld [vmem:[%s5 + $0x70] sm:$0xf]
  %v5011 = vld [vmem:[%s5 + $0x74] sm:$0xf]
  %v5012 = vld [vmem:[%s5 + $0x78] sm:$0xf]
  %v5013 = vld [vmem:[%s5 + $0x7c] sm:$0xf]
  %v5014 = vld [vmem:[%s5 + $0x80] sm:$0xf]
  %v5015 = vld [vmem:[%s5 + $0x84] sm:$0xf]
  %v5016 = vld [vmem:[%s5 + $0x88] sm:$0xf]
  %v5017 = vld [vmem:[%s5 + $0x8c] sm:$0xf]
  %v5018 = vld [vmem:[%s5 + $0x90] sm:$0xf]
  %v5019 = vld [vmem:[%s5 + $0x94] sm:$0xf]
  %v5020 = vld [vmem:[%s5 + $0x98] sm:$0xf]
  %v5021 = vld [vmem:[%s5 + $0x9c] sm:$0xf]
  %v5022 = vld [vmem:[%s5 + $0xa0] sm:$0xf]
  %v5023 = vld [vmem:[%s5 + $0xa4] sm:$0xf]
  %v5024 = vld [vmem:[%s5 + $0xa8] sm:$0xf]
  %v5025 = vld [vmem:[%s5 + $0xac] sm:$0xf]
  %v5026 = vld [vmem:[%s5 + $0xb0] sm:$0xf]
  %v5027 = vld [vmem:[%s5 + $0xb4] sm:$0xf]
  %v5028 = vld [vmem:[%s5 + $0xb8] sm:$0xf]
  %v5029 = vld [vmem:[%s5 + $0xbc] sm:$0xf]
  %v5030 = vld [vmem:[%s5 + $0xc0] sm:$0xf]
  %v5031 = vld [vmem:[%s5 + $0xc4] sm:$0xf]
  %v5032 = vld [vmem:[%s5 + $0xc8] sm:$0xf]
  %v5033 = vld [vmem:[%s5 + $0xcc] sm:$0xf]
  %v5034 = vld [vmem:[%s5 + $0xd0] sm:$0xf]
  %v5035 = vld [vmem:[%s5 + $0xd4] sm:$0xf]
  %v5036 = vld [vmem:[%s5 + $0xd8] sm:$0xf]
  %v5037 = vld [vmem:[%s5 + $0xdc] sm:$0xf]
  %v5038 = vld [vmem:[%s5 + $0xe0] sm:$0xf]
  %v5039 = vld [vmem:[%s5 + $0xe4] sm:$0xf]
  %v5040 = vld [vmem:[%s5 + $0xe8] sm:$0xf]
  %v5041 = vld [vmem:[%s5 + $0xec] sm:$0xf]
  %v5042 = vld [vmem:[%s5 + $0xf0] sm:$0xf]
  %v5043 = vld [vmem:[%s5 + $0xf4] sm:$0xf]
  %v5044 = vld [vmem:[%s5 + $0xf8] sm:$0xf]
  %v5045 = vld [vmem:[%s5 + $0xfc] sm:$0xf]
  %v5046 = vld [vmem:[%s6] sm:$0x1]
  %v5048 = vperm.slane %v5046, 0
  %v5114 = vunpack.c.l.b16 %v4982
  %v5115 = vunpack.c.l.b16 %v4983
  %v5116 = vunpack.c.l.b16 %v4984
  %v5117 = vunpack.c.l.b16 %v4985
  %v5118 = vunpack.c.l.b16 %v4986
  %v5119 = vunpack.c.l.b16 %v4987
  %v5120 = vunpack.c.l.b16 %v4988
  %v5121 = vunpack.c.l.b16 %v4989
  %v5122 = vunpack.c.l.b16 %v4990
  %v5123 = vunpack.c.l.b16 %v4991
  %v5124 = vunpack.c.l.b16 %v4992
  %v5125 = vunpack.c.l.b16 %v4993
  %v5126 = vunpack.c.l.b16 %v4994
  %v5127 = vunpack.c.l.b16 %v4995
  %v5128 = vunpack.c.l.b16 %v4996
  %v5129 = vunpack.c.l.b16 %v4997
  %v5130 = vunpack.c.l.b16 %v4998
  %v5131 = vunpack.c.l.b16 %v4999
  %v5132 = vunpack.c.l.b16 %v5000
  %v5133 = vunpack.c.l.b16 %v5001
  %v5134 = vunpack.c.l.b16 %v5002
  %v5135 = vunpack.c.l.b16 %v5003
  %v5136 = vunpack.c.l.b16 %v5004
  %v5137 = vunpack.c.l.b16 %v5005
  %v5138 = vunpack.c.l.b16 %v5006
  %v5139 = vunpack.c.l.b16 %v5007
  %v5140 = vunpack.c.l.b16 %v5008
  %v5141 = vunpack.c.l.b16 %v5009
  %v5142 = vunpack.c.l.b16 %v5010
  %v5143 = vunpack.c.l.b16 %v5011
  %v5144 = vunpack.c.l.b16 %v5012
  %v5145 = vunpack.c.l.b16 %v5013
  %v5146 = vunpack.c.l.b16 %v5014
  %v5147 = vunpack.c.l.b16 %v5015
  %v5148 = vunpack.c.l.b16 %v5016
  %v5149 = vunpack.c.l.b16 %v5017
  %v5150 = vunpack.c.l.b16 %v5018
  %v5151 = vunpack.c.l.b16 %v5019
  %v5152 = vunpack.c.l.b16 %v5020
  %v5153 = vunpack.c.l.b16 %v5021
  %v5154 = vunpack.c.l.b16 %v5022
  %v5155 = vunpack.c.l.b16 %v5023
  %v5156 = vunpack.c.l.b16 %v5024
  %v5157 = vunpack.c.l.b16 %v5025
  %v5158 = vunpack.c.l.b16 %v5026
  %v5159 = vunpack.c.l.b16 %v5027
  %v5160 = vunpack.c.l.b16 %v5028
  %v5161 = vunpack.c.l.b16 %v5029
  %v5162 = vunpack.c.l.b16 %v5030
  %v5163 = vunpack.c.l.b16 %v5031
  %v5164 = vunpack.c.l.b16 %v5032
  %v5165 = vunpack.c.l.b16 %v5033
  %v5166 = vunpack.c.l.b16 %v5034
  %v5167 = vunpack.c.l.b16 %v5035
  %v5168 = vunpack.c.l.b16 %v5036
  %v5169 = vunpack.c.l.b16 %v5037
  %v5170 = vunpack.c.l.b16 %v5038
  %v5171 = vunpack.c.l.b16 %v5039
  %v5172 = vunpack.c.l.b16 %v5040
  %v5173 = vunpack.c.l.b16 %v5041
  %v5174 = vunpack.c.l.b16 %v5042
  %v5175 = vunpack.c.l.b16 %v5043
  %v5176 = vunpack.c.l.b16 %v5044
  %v5177 = vunpack.c.l.b16 %v5045
  %v5178 = vpack.c.b16 %v5115, %v5114
  %v5179 = vpack.c.b16 %v5117, %v5116
  %v5180 = vpack.c.b16 %v5119, %v5118
  %v5181 = vpack.c.b16 %v5121, %v5120
  %v5182 = vpack.c.b16 %v5123, %v5122
  %v5183 = vpack.c.b16 %v5125, %v5124
  %v5184 = vpack.c.b16 %v5127, %v5126
  %v5185 = vpack.c.b16 %v5129, %v5128
  %v5186 = vpack.c.b16 %v5131, %v5130
  %v5187 = vpack.c.b16 %v5133, %v5132
  %v5188 = vpack.c.b16 %v5135, %v5134
  %v5189 = vpack.c.b16 %v5137, %v5136
  %v5190 = vpack.c.b16 %v5139, %v5138
  %v5191 = vpack.c.b16 %v5141, %v5140
  %v5192 = vpack.c.b16 %v5143, %v5142
  %v5193 = vpack.c.b16 %v5145, %v5144
  %v5194 = vpack.c.b16 %v5147, %v5146
  %v5195 = vpack.c.b16 %v5149, %v5148
  %v5196 = vpack.c.b16 %v5151, %v5150
  %v5197 = vpack.c.b16 %v5153, %v5152
  %v5198 = vpack.c.b16 %v5155, %v5154
  %v5199 = vpack.c.b16 %v5157, %v5156
  %v5200 = vpack.c.b16 %v5159, %v5158
  %v5201 = vpack.c.b16 %v5161, %v5160
  %v5202 = vpack.c.b16 %v5163, %v5162
  %v5203 = vpack.c.b16 %v5165, %v5164
  %v5204 = vpack.c.b16 %v5167, %v5166
  %v5205 = vpack.c.b16 %v5169, %v5168
  %v5206 = vpack.c.b16 %v5171, %v5170
  %v5207 = vpack.c.b16 %v5173, %v5172
  %v5208 = vpack.c.b16 %v5175, %v5174
  %v5209 = vpack.c.b16 %v5177, %v5176
  %5242 = vmatpush.bf16.msra.mxu0 %v5185
  %5243 = vmatpush.bf16.msra.mxu0 %v5184
  %5244 = vmatpush.bf16.msra.mxu0 %v5183
  %5245 = vmatpush.bf16.msra.mxu0 %v5182
  %5246 = vmatpush.bf16.msra.mxu0 %v5181
  %5247 = vmatpush.bf16.msra.mxu0 %v5180
  %5248 = vmatpush.bf16.msra.mxu0 %v5179
  %5249 = vmatpush.bf16.msra.mxu0 %v5178
  %5250 = vmatmul.bf16.gmra.mxu0 %v4978
  %v5251 = vpop.f32.mrf.mxu0
  %v5252 = vadd.f32 %v5048, %v5251
  %v5253 = vpop.f32.mrf.mxu0
  %5254 = vdwg.mxu0
  %5255 = vmatpush.bf16.msra.mxu0 %v5193
  %5256 = vmatpush.bf16.msra.mxu0 %v5192
  %5257 = vmatpush.bf16.msra.mxu0 %v5191
  %5258 = vmatpush.bf16.msra.mxu0 %v5190
  %5259 = vmatpush.bf16.msra.mxu0 %v5189
  %5260 = vmatpush.bf16.msra.mxu0 %v5188
  %5261 = vmatpush.bf16.msra.mxu0 %v5187
  %5262 = vmatpush.bf16.msra.mxu0 %v5186
  %5263 = vmatmul.bf16.gmra.mxu0 %v4979
  %v5264 = vpop.f32.mrf.mxu0
  %v5265 = vadd.f32 %v5252, %v5264
  %v5266 = vpop.f32.mrf.mxu0
  %5267 = vdwg.mxu0
  %5268 = vmatpush.bf16.msra.mxu0 %v5201
  %5269 = vmatpush.bf16.msra.mxu0 %v5200
  %5270 = vmatpush.bf16.msra.mxu0 %v5199
  %5271 = vmatpush.bf16.msra.mxu0 %v5198
  %5272 = vmatpush.bf16.msra.mxu0 %v5197
  %5273 = vmatpush.bf16.msra.mxu0 %v5196
  %5274 = vmatpush.bf16.msra.mxu0 %v5195
  %5275 = vmatpush.bf16.msra.mxu0 %v5194
  %5276 = vmatmul.bf16.gmra.mxu0 %v4980
  %v5277 = vpop.f32.mrf.mxu0
  %v5278 = vadd.f32 %v5265, %v5277
  %v5279 = vpop.f32.mrf.mxu0
  %5280 = vdwg.mxu0
  %5281 = vmatpush.bf16.msra.mxu0 %v5209
  %5282 = vmatpush.bf16.msra.mxu0 %v5208
  %5283 = vmatpush.bf16.msra.mxu0 %v5207
  %5284 = vmatpush.bf16.msra.mxu0 %v5206
  %5285 = vmatpush.bf16.msra.mxu0 %v5205
  %5286 = vmatpush.bf16.msra.mxu0 %v5204
  %5287 = vmatpush.bf16.msra.mxu0 %v5203
  %5288 = vmatpush.bf16.msra.mxu0 %v5202
  %5289 = vmatmul.bf16.gmra.mxu0 %v4981
  %v5290 = vpop.f32.mrf.mxu0
  %v5291 = vadd.f32 %v5278, %v5290
  %v5292 = vpop.f32.mrf.mxu0
  %5293 = vdwg.mxu0
  %5294 = vst [vmem:[%s7] sm:$0xff] %v5291
  // Predicated region
  $region30: #{textual_mlp_forward.1} parent=0 // pred_check
    _
  $region31: #{textual_mlp_forward.1} parent=0 // pred_check_branch
    %5296 = sbr.rel (0) target = $region33
  $region32: #{textual_mlp_forward.1} parent=0 // pred_region
    _
  $region33: #{textual_mlp_forward.1} parent=0 // pred_fallthru
    _
  // Predicated region
  $region34: #{textual_mlp_forward.1} parent=0 // pred_check
    _
  $region35: #{textual_mlp_forward.1} parent=0 // pred_check_branch
    %5298 = sbr.rel (0) target = $region37
  $region36: #{textual_mlp_forward.1} parent=0 // pred_region
    _
  $region37: #{textual_mlp_forward.1} parent=0 // pred_fallthru
    _

</llo_original>
